<compile_context>
chip_gen: v7x
topology: tpu7x:2x2x1
jax: 0.10.0
libtpu: 0.0.40
codegen_flags: <defaults>
</compile_context>

<pallas_src>
import functools
import math

import jax
import jax.numpy as jnp
from jax.experimental import pallas as pl
from jax.experimental.pallas import tpu as pltpu


# -----------------------------------------------------------------------------
# Kernel 1: spectral channel mixing, ALL modes in one block-diagonal matmul.
#   x_ref : (B, K) bf16    K = modes*2C; per mode m cols = [re(0..C) | im(0..C)]
#   w_ref : (K, K) bf16    block-diagonal; block m = [[wr, wi], [-wi, wr]]
#   o_ref : (B, K) f32
# -----------------------------------------------------------------------------
def spectral_kernel(x_ref, w_ref, o_ref):
    o_ref[...] = jnp.dot(x_ref[...], w_ref[...],
                         preferred_element_type=jnp.float32)


# -----------------------------------------------------------------------------
# Kernel 2: fused 1x1 conv + residual add + exact GELU, spatial-last layout.
#   x_ref    : (1, C, TL) bf16  (already cast in the wrapper; MXU operand)
#   spec_ref : (1, C, TL) f32   (irfft output, spectral branch)
#   w_ref    : (C, C)     bf16  (Conv1d weight, (out, in))
#   b_ref    : (C, 1)     f32
#   o_ref    : (1, C, TL) f32
# -----------------------------------------------------------------------------
def conv1x1_add_gelu_kernel(x_ref, spec_ref, w_ref, b_ref, o_ref):
    y = jnp.dot(w_ref[...], x_ref[0], preferred_element_type=jnp.float32)  # (C, TL)
    z = y + b_ref[...] + spec_ref[0]
    inv_sqrt2 = 0.7071067811865476          # exact erf-GELU (PyTorch default)
    o_ref[0] = (0.5 * z * (1.0 + jax.lax.erf(z * inv_sqrt2))).astype(o_ref.dtype)


# -----------------------------------------------------------------------------
# Packing helpers (run once, outside the forward)
# -----------------------------------------------------------------------------
def _choose_lane_tile(lp, max_tile=4096):
    """Lane tile for the conv kernel: multiple of 128 dividing lp (lp is
    already padded to a 128 multiple)."""
    t = min(lp, max_tile)
    t = (t // 128) * 128
    while lp % t:
        t -= 128
    return t


def prepare_params(spec_w, conv_w, conv_b):
    """Pre-pack parameters once at init: complex -> real 2x2 blocks, all modes
    merged into ONE block-diagonal bf16 matmul weight."""
    cin, cout, modes = spec_w.shape
    assert cin == cout, "FNO block uses width -> width mixing"
    c = cin
    two_c = 2 * c

    wr = jnp.real(spec_w).astype(jnp.float32)           # (C, C, M)  (in, out, m)
    wi = jnp.imag(spec_w).astype(jnp.float32)
    top = jnp.concatenate([wr, wi], axis=1)             # (C, 2C, M) rows = re inputs
    bot = jnp.concatenate([-wi, wr], axis=1)            # (C, 2C, M) rows = im inputs
    w2 = jnp.concatenate([top, bot], axis=0)            # (2C, 2C, M)
    w2 = jnp.transpose(w2, (2, 0, 1))                   # (M, 2C, 2C)

    # Block-diagonal merge of all modes -> (M*2C, M*2C)
    eye = jnp.eye(modes, dtype=jnp.float32)[:, None, :, None]     # (M,1,M,1)
    w_full = (eye * w2[:, :, None, :]).reshape(modes * two_c, modes * two_c)
    w_full = w_full.astype(jnp.bfloat16)

    w_mat = conv_w[:, :, 0].astype(jnp.bfloat16)         # (Cout, Cin)
    b_col = conv_b.reshape(-1, 1).astype(jnp.float32)    # (C, 1)
    return w_full, w_mat, b_col


# -----------------------------------------------------------------------------
# Forward pass
# -----------------------------------------------------------------------------
def fourier_operator_1d(x, w_spec_full, conv_w_mat, conv_b_col, modes):
    """x: (B, C, L) float32 NCW.  Returns (B, C, L) float32."""
    B, C, L = x.shape
    Lf = L // 2 + 1
    two_c = 2 * C
    K = modes * two_c

    # ---- SpectralConv1d ----
    # TODO(synk): rfft/irfft have no Pallas TPU primitive; they stay in XLA.
    x_ft = jnp.fft.rfft(x, axis=-1)                               # (B, C, Lf) c64
    xm = jnp.transpose(x_ft[:, :, :modes], (0, 2, 1))             # (B, M, C)
    xp = jnp.concatenate([jnp.real(xm), jnp.imag(xm)], axis=-1)   # (B, M, 2C)
    xp = xp.reshape(B, K).astype(jnp.bfloat16)

    spec_cost = pl.CostEstimate(
        flops=2 * B * K * K,
        transcendentals=0,
        bytes_accessed=B * K * 2 + K * K * 2 + B * K * 4)

    # No grid: one block-diagonal matmul, whole operands resident in VMEM.
    o = pl.pallas_call(
        spectral_kernel,
        out_shape=jax.ShapeDtypeStruct((B, K), jnp.float32),
        compiler_params=pltpu.CompilerParams(
            vmem_limit_bytes=16 * 1024 * 1024),
        cost_estimate=spec_cost,
    )(xp, w_spec_full)

    om = o.reshape(B, modes, two_c)
    out_modes = (om[..., :C] + 1j * om[..., C:]).astype(jnp.complex64)  # (B, M, C)
    out_modes = jnp.transpose(out_modes, (0, 2, 1))                     # (B, C, M)
    out_ft = jnp.pad(out_modes, ((0, 0), (0, 0), (0, Lf - modes)))
    spec = jnp.fft.irfft(out_ft, n=L, axis=-1).astype(jnp.float32)      # (B, C, L)

    # ---- fused 1x1 conv + residual add + GELU (Pallas, spatial-last) ----
    # Pad spatial axis to a 128 multiple so output stores stay unmasked.
    Lp = ((L + 127) // 128) * 128
    tl = _choose_lane_tile(Lp)
    x_b = x.astype(jnp.bfloat16)
    spec_p = spec
    if Lp != L:
        x_b = jnp.pad(x_b, ((0, 0), (0, 0), (0, Lp - L)))
        spec_p = jnp.pad(spec, ((0, 0), (0, 0), (0, Lp - L)))

    conv_cost = pl.CostEstimate(
        flops=2 * B * C * C * Lp + 3 * B * C * Lp,
        transcendentals=B * C * Lp,
        bytes_accessed=B * C * Lp * (2 + 4 + 4) + C * C * 2 + C * 4)

    out = pl.pallas_call(
        conv1x1_add_gelu_kernel,
        out_shape=jax.ShapeDtypeStruct((B, C, Lp), jnp.float32),
        grid=(B, Lp // tl),
        in_specs=[
            pl.BlockSpec((1, C, tl), lambda b, j: (b, 0, j)),
            pl.BlockSpec((1, C, tl), lambda b, j: (b, 0, j)),
            pl.BlockSpec((C, C), lambda b, j: (0, 0)),
            pl.BlockSpec((C, 1), lambda b, j: (0, 0)),
        ],
        out_specs=pl.BlockSpec((1, C, tl), lambda b, j: (b, 0, j)),
        compiler_params=pltpu.CompilerParams(
            dimension_semantics=("parallel", "parallel"),
            vmem_limit_bytes=16 * 1024 * 1024),
        cost_estimate=conv_cost,
    )(x_b, spec_p, conv_w_mat, conv_b_col)

    if Lp != L:
        out = out[:, :, :L]
    return out


# -----------------------------------------------------------------------------
# Deterministic parameter construction (matches the PyTorch module init)
# -----------------------------------------------------------------------------
def init_params(key, width, modes):
    k1, k2, k3, k4 = jax.random.split(key, 4)
    scale = 1.0 / (width * width)
    # SpectralConv1d: complex weights (in, out, modes), uniform [0,1) * scale
    w_spec = scale * (jax.random.uniform(k1, (width, width, modes))
                      + 1j * jax.random.uniform(k2, (width, width, modes)))
    # nn.Conv1d(width, width, 1): weight (out, in, 1), bias (out,)
    bound = 1.0 / math.sqrt(width)
    cw = jax.random.uniform(k3, (width, width, 1), minval=-bound, maxval=bound)
    cb = jax.random.uniform(k4, (width,), minval=-bound, maxval=bound)
    return (w_spec.astype(jnp.complex64), cw.astype(jnp.float32),
            cb.astype(jnp.float32))


if __name__ == "__main__":
    modes, width = 16, 32
    B, L = 2, 256

    key = jax.random.PRNGKey(0)
    kx, kp = jax.random.split(key)
    x = jax.random.normal(kx, (B, width, L), dtype=jnp.float32)
    w_spec, conv_w, conv_b = init_params(kp, width, modes)
    w_spec_full, conv_w_mat, conv_b_col = prepare_params(w_spec, conv_w, conv_b)

    fn = jax.jit(functools.partial(fourier_operator_1d, modes=modes))
    out = fn(x, w_spec_full, conv_w_mat, conv_b_col)
    jax.block_until_ready(out)

    assert out.shape == (B, width, L), out.shape
    assert out.dtype == jnp.float32, out.dtype
    assert bool(jnp.all(jnp.isfinite(out)))
    print("KERNEL_OK")
</pallas_src>

<mosaic_0001>
module attributes {stable_mosaic.version = 11 : i64} {
  func.func @spectral_kernel(%arg0: memref<2x1024xbf16, #tpu.memory_space<vmem>>, %arg1: memref<1024x1024xbf16, #tpu.memory_space<vmem>>, %arg2: memref<2x1024xf32, #tpu.memory_space<vmem>>) attributes {dimension_semantics = [], scalar_prefetch = 0 : i64, scratch_operands = 0 : i64, tpu.core_type = #tpu.core_type<tc>} {
    %c0 = arith.constant 0 : index
    %c0_0 = arith.constant 0 : index
    %0 = vector.load %arg0[%c0, %c0_0] : memref<2x1024xbf16, #tpu.memory_space<vmem>>, vector<2x1024xbf16>
    %c0_1 = arith.constant 0 : index
    %c0_2 = arith.constant 0 : index
    %1 = vector.load %arg1[%c0_1, %c0_2] : memref<1024x1024xbf16, #tpu.memory_space<vmem>>, vector<1024x1024xbf16>
    %cst = arith.constant dense<0.000000e+00> : vector<2x1024xf32>
    %2 = tpu.matmul %0, %1, %cst {dimension_numbers = #tpu.dot_dimension_numbers<[1], [0], [0], [1], [0, 0, 1, 1], [], []>} : vector<2x1024xbf16>, vector<1024x1024xbf16>, vector<2x1024xf32> -> vector<2x1024xf32>
    %c0_3 = arith.constant 0 : index
    %c0_4 = arith.constant 0 : index
    %3 = vector.load %arg2[%c0_3, %c0_4] : memref<2x1024xf32, #tpu.memory_space<vmem>>, vector<2x1024xf32>
    tpu.vector_store %arg2[%c0_3, %c0_4], %2 {strides = array<i32>} : memref<2x1024xf32, #tpu.memory_space<vmem>>, vector<2x1024xf32>,
    return
  }
}

module attributes {stable_mosaic.version = 11 : i64} {
  func.func @conv1x1_add_gelu_kernel(%arg0: i32, %arg1: i32, %arg2: memref<1x32x256xbf16, #tpu.memory_space<vmem>>, %arg3: memref<1x32x256xf32, #tpu.memory_space<vmem>>, %arg4: memref<32x32xbf16, #tpu.memory_space<vmem>>, %arg5: memref<32x1xf32, #tpu.memory_space<vmem>>, %arg6: memref<1x32x256xf32, #tpu.memory_space<vmem>>) attributes {dimension_semantics = [#tpu.dimension_semantics<parallel>, #tpu.dimension_semantics<parallel>], iteration_bounds = array<i64: 2, 1>, scalar_prefetch = 0 : i64, scratch_operands = 0 : i64, tpu.core_type = #tpu.core_type<tc>, window_params = [{transform_indices = @transform_0, window_bounds = array<i64: 1, 32, 256>}, {transform_indices = @transform_1, window_bounds = array<i64: 1, 32, 256>}, {pipeline_mode = #tpu.pipeline_mode<synchronous>, transform_indices = @transform_2, window_bounds = array<i64: 32, 32>}, {pipeline_mode = #tpu.pipeline_mode<synchronous>, transform_indices = @transform_3, window_bounds = array<i64: 32, 1>}, {transform_indices = @transform_4, window_bounds = array<i64: 1, 32, 256>}]} {
    %c0 = arith.constant 0 : index
    %c0_0 = arith.constant 0 : index
    %0 = vector.load %arg4[%c0, %c0_0] : memref<32x32xbf16, #tpu.memory_space<vmem>>, vector<32x32xbf16>
    %c0_1 = arith.constant 0 : index
    %c0_2 = arith.constant 0 : index
    %c0_3 = arith.constant 0 : index
    %1 = vector.load %arg2[%c0_1, %c0_2, %c0_3] : memref<1x32x256xbf16, #tpu.memory_space<vmem>>, vector<1x32x256xbf16>
    %2 = vector.shape_cast %1 : vector<1x32x256xbf16> to vector<32x256xbf16>
    %cst = arith.constant dense<0.000000e+00> : vector<32x256xf32>
    %3 = tpu.matmul %0, %2, %cst {dimension_numbers = #tpu.dot_dimension_numbers<[1], [0], [0], [1], [0, 0, 1, 1], [], []>} : vector<32x32xbf16>, vector<32x256xbf16>, vector<32x256xf32> -> vector<32x256xf32>
    %c0_4 = arith.constant 0 : index
    %c0_5 = arith.constant 0 : index
    %4 = vector.load %arg5[%c0_4, %c0_5] : memref<32x1xf32, #tpu.memory_space<vmem>>, vector<32x1xf32>
    %5 = vector.broadcast %4 : vector<32x1xf32> to vector<32x256xf32>
    %6 = arith.addf %3, %5 : vector<32x256xf32>
    %c0_6 = arith.constant 0 : index
    %c0_7 = arith.constant 0 : index
    %c0_8 = arith.constant 0 : index
    %7 = vector.load %arg3[%c0_6, %c0_7, %c0_8] : memref<1x32x256xf32, #tpu.memory_space<vmem>>, vector<1x32x256xf32>
    %8 = vector.shape_cast %7 : vector<1x32x256xf32> to vector<32x256xf32>
    %9 = arith.addf %6, %8 : vector<32x256xf32>
    %cst_9 = arith.constant 5.000000e-01 : f32
    %10 = vector.broadcast %cst_9 : f32 to vector<32x256xf32>
    %11 = arith.mulf %10, %9 : vector<32x256xf32>
    %cst_10 = arith.constant 0.707106769 : f32
    %12 = vector.broadcast %cst_10 : f32 to vector<32x256xf32>
    %13 = arith.mulf %9, %12 : vector<32x256xf32>
    %14 = math.erf %13 : vector<32x256xf32>
    %cst_11 = arith.constant 1.000000e+00 : f32
    %15 = vector.broadcast %cst_11 : f32 to vector<32x256xf32>
    %16 = arith.addf %15, %14 : vector<32x256xf32>
    %17 = arith.mulf %11, %16 : vector<32x256xf32>
    %c0_12 = arith.constant 0 : index
    %c0_13 = arith.constant 0 : index
    %c0_14 = arith.constant 0 : index
    %18 = vector.load %arg6[%c0_12, %c0_13, %c0_14] : memref<1x32x256xf32, #tpu.memory_space<vmem>>, vector<1x32x256xf32>
    %19 = vector.shape_cast %18 : vector<1x32x256xf32> to vector<32x256xf32>
    %20 = vector.shape_cast %17 : vector<32x256xf32> to vector<1x32x256xf32>
    tpu.vector_store %arg6[%c0_12, %c0_13, %c0_14], %20 {strides = array<i32>} : memref<1x32x256xf32, #tpu.memory_space<vmem>>, vector<1x32x256xf32>,
    return
  }
  func.func @transform_0(%arg0: i32, %arg1: i32) -> (i32, i32, i32) {
    %c0_i32 = arith.constant 0 : i32
    %c0_i32_0 = arith.constant 0 : i32
    return %arg0, %c0_i32, %arg1 : i32, i32, i32
  }
  func.func @transform_1(%arg0: i32, %arg1: i32) -> (i32, i32, i32) {
    %c0_i32 = arith.constant 0 : i32
    %c0_i32_0 = arith.constant 0 : i32
    return %arg0, %c0_i32, %arg1 : i32, i32, i32
  }
  func.func @transform_2(%arg0: i32, %arg1: i32) -> (i32, i32) {
    %c0_i32 = arith.constant 0 : i32
    %c0_i32_0 = arith.constant 0 : i32
    %c0_i32_1 = arith.constant 0 : i32
    return %c0_i32, %c0_i32_0 : i32, i32
  }
  func.func @transform_3(%arg0: i32, %arg1: i32) -> (i32, i32) {
    %c0_i32 = arith.constant 0 : i32
    %c0_i32_0 = arith.constant 0 : i32
    %c0_i32_1 = arith.constant 0 : i32
    return %c0_i32, %c0_i32_0 : i32, i32
  }
  func.func @transform_4(%arg0: i32, %arg1: i32) -> (i32, i32, i32) {
    %c0_i32 = arith.constant 0 : i32
    %c0_i32_0 = arith.constant 0 : i32
    return %arg0, %c0_i32, %arg1 : i32, i32, i32
  }
}

</mosaic_0001>

<llo_original>
// kernel: fourier_operator_1d.2
$region0: #{fourier_operator_1d.2}
  #allocation0 [shape = 'u32[]', space=smem, size = 0x4, offset = 0x4, fixed_abs, tag = 'smem constant byte address 0x4 - core index']
  #allocation1 [shape = 'u32[144,128]{1,0:T(1,128)}', space=vmem, size = 0x12000, scoped, tag = 'internal scratch']
  %s0 = inlined_call_operand.vmem [shape: bf16[2,1024], index: 0, kind: input, shape index: {}]
  %s1 = inlined_call_operand.hbm [shape: bf16[1024,1024], index: 1, kind: input, shape index: {}]
  %s2 = inlined_call_operand.vmem [shape: f32[2,1024], index: 2, kind: output, shape index: {}]
  %s3 = sld [smem:[#allocation0]]
  $region22: #{fourier_operator_1d.2} parent=0
    _
  %s5 = ssub.s32 1, %s3
  %s6 = scalar_select 0, %s5, %s3
  $region1: #{fourier_operator_1d.2} parent=0
    #allocation2 [shape = 'u8[2097152]{0}', space=vmem, size = 0x200000, scoped, tag = 'input window, operand 1, single buffered']
    #allocation3 [shape = 's32[1]{0}', space=sflag, size = 0x4, scoped, tag = 'scoped memory for fourier_operator_1d.2']
    %7 = vsyncpa [#allocation3], 0
    // Predicated region
    $region2: #{fourier_operator_1d.2} parent=1 // pred_check
      _
    $region3: #{fourier_operator_1d.2} parent=1 // pred_check_branch
      %9 = sbr.rel (0) target = $region5
    $region4: #{fourier_operator_1d.2} parent=1 // pred_region
      _
    $region5: #{fourier_operator_1d.2} parent=1 // pred_fallthru
      _
    // Predicated region
    $region6: #{fourier_operator_1d.2} parent=1 // pred_check
      _
    $region7: #{fourier_operator_1d.2} parent=1 // pred_check_branch
      %11 = sbr.rel (0) target = $region9
    $region8: #{fourier_operator_1d.2} parent=1 // pred_region
      %s13 = ssub.s32 65536, 65536
      %14 = vsyncadd [#allocation3], %s13
      %s15 = sshll.u32 [#allocation2], 4
      %s16 = int_to_ptr.vmem [resolvable:$true] %s15
      %21 = dma.hbm_to_vmem [thread:$0]  %s1, 65536, %s16, [#allocation3], 512, 512, 32
    $region9: #{fourier_operator_1d.2} parent=1 // pred_fallthru
      _
    // Predicated region
    $region10: #{fourier_operator_1d.2} parent=1 // pred_check
      _
    $region11: #{fourier_operator_1d.2} parent=1 // pred_check_branch
      %23 = sbr.rel (0) target = $region13
    $region12: #{fourier_operator_1d.2} parent=1 // pred_region
      %24 = dma.done [#allocation3], 65536
    $region13: #{fourier_operator_1d.2} parent=1 // pred_fallthru
      _
    %v25 = vld [vmem:[%s0] sm:$0xff]
    %v26 = vld [vmem:[#allocation2] sm:$0xff]
    %v27 = vld [vmem:[#allocation2 + $0x8] sm:$0xff]
    %v28 = vld [vmem:[#allocation2 + $0x10] sm:$0xff]
    %v29 = vld [vmem:[#allocation2 + $0x18] sm:$0xff]
    %v30 = vld [vmem:[#allocation2 + $0x20] sm:$0xff]
    %v31 = vld [vmem:[#allocation2 + $0x28] sm:$0xff]
    %v32 = vld [vmem:[#allocation2 + $0x30] sm:$0xff]
    %v33 = vld [vmem:[#allocation2 + $0x38] sm:$0xff]
    %v34 = vld [vmem:[#allocation2 + $0x40] sm:$0xff]
    %v35 = vld [vmem:[#allocation2 + $0x48] sm:$0xff]
    %v36 = vld [vmem:[#allocation2 + $0x50] sm:$0xff]
    %v37 = vld [vmem:[#allocation2 + $0x58] sm:$0xff]
    %v38 = vld [vmem:[#allocation2 + $0x60] sm:$0xff]
    %v39 = vld [vmem:[#allocation2 + $0x68] sm:$0xff]
    %v40 = vld [vmem:[#allocation2 + $0x70] sm:$0xff]
    %v41 = vld [vmem:[#allocation2 + $0x78] sm:$0xff]
    %v42 = vld [vmem:[#allocation2 + $0x80] sm:$0xff]
    %v43 = vld [vmem:[#allocation2 + $0x88] sm:$0xff]
    %v44 = vld [vmem:[#allocation2 + $0x90] sm:$0xff]
    %v45 = vld [vmem:[#allocation2 + $0x98] sm:$0xff]
    %v46 = vld [vmem:[#allocation2 + $0xa0] sm:$0xff]
    %v47 = vld [vmem:[#allocation2 + $0xa8] sm:$0xff]
    %v48 = vld [vmem:[#allocation2 + $0xb0] sm:$0xff]
    %v49 = vld [vmem:[#allocation2 + $0xb8] sm:$0xff]
    %v50 = vld [vmem:[#allocation2 + $0xc0] sm:$0xff]
    %v51 = vld [vmem:[#allocation2 + $0xc8] sm:$0xff]
    %v52 = vld [vmem:[#allocation2 + $0xd0] sm:$0xff]
    %v53 = vld [vmem:[#allocation2 + $0xd8] sm:$0xff]
    %v54 = vld [vmem:[#allocation2 + $0xe0] sm:$0xff]
    %v55 = vld [vmem:[#allocation2 + $0xe8] sm:$0xff]
    %v56 = vld [vmem:[#allocation2 + $0xf0] sm:$0xff]
    %v57 = vld [vmem:[#allocation2 + $0xf8] sm:$0xff]
    %v58 = vld [vmem:[#allocation2 + $0x100] sm:$0xff]
    %v59 = vld [vmem:[#allocation2 + $0x108] sm:$0xff]
    %v60 = vld [vmem:[#allocation2 + $0x110] sm:$0xff]
    %v61 = vld [vmem:[#allocation2 + $0x118] sm:$0xff]
    %v62 = vld [vmem:[#allocation2 + $0x120] sm:$0xff]
    %v63 = vld [vmem:[#allocation2 + $0x128] sm:$0xff]
    %v64 = vld [vmem:[#allocation2 + $0x130] sm:$0xff]
    %v65 = vld [vmem:[#allocation2 + $0x138] sm:$0xff]
    %v66 = vld [vmem:[#allocation2 + $0x140] sm:$0xff]
    %v67 = vld [vmem:[#allocation2 + $0x148] sm:$0xff]
    %v68 = vld [vmem:[#allocation2 + $0x150] sm:$0xff]
    %v69 = vld [vmem:[#allocation2 + $0x158] sm:$0xff]
    %v70 = vld [vmem:[#allocation2 + $0x160] sm:$0xff]
    %v71 = vld [vmem:[#allocation2 + $0x168] sm:$0xff]
    %v72 = vld [vmem:[#allocation2 + $0x170] sm:$0xff]
    %v73 = vld [vmem:[#allocation2 + $0x178] sm:$0xff]
    %v74 = vld [vmem:[#allocation2 + $0x180] sm:$0xff]
    %v75 = vld [vmem:[#allocation2 + $0x188] sm:$0xff]
    %v76 = vld [vmem:[#allocation2 + $0x190] sm:$0xff]
    %v77 = vld [vmem:[#allocation2 + $0x198] sm:$0xff]
    %v78 = vld [vmem:[#allocation2 + $0x1a0] sm:$0xff]
    %v79 = vld [vmem:[#allocation2 + $0x1a8] sm:$0xff]
    %v80 = vld [vmem:[#allocation2 + $0x1b0] sm:$0xff]
    %v81 = vld [vmem:[#allocation2 + $0x1b8] sm:$0xff]
    %v82 = vld [vmem:[#allocation2 + $0x1c0] sm:$0xff]
    %v83 = vld [vmem:[#allocation2 + $0x1c8] sm:$0xff]
    %v84 = vld [vmem:[#allocation2 + $0x1d0] sm:$0xff]
    %v85 = vld [vmem:[#allocation2 + $0x1d8] sm:$0xff]
    %v86 = vld [vmem:[#allocation2 + $0x1e0] sm:$0xff]
    %v87 = vld [vmem:[#allocation2 + $0x1e8] sm:$0xff]
    %v88 = vld [vmem:[#allocation2 + $0x1f0] sm:$0xff]
    %v89 = vld [vmem:[#allocation2 + $0x1f8] sm:$0xff]
    %v90 = vld [vmem:[#allocation2 + $0x200] sm:$0xff]
    %v91 = vld [vmem:[#allocation2 + $0x208] sm:$0xff]
    %v92 = vld [vmem:[#allocation2 + $0x210] sm:$0xff]
    %v93 = vld [vmem:[#allocation2 + $0x218] sm:$0xff]
    %v94 = vld [vmem:[#allocation2 + $0x220] sm:$0xff]
    %v95 = vld [vmem:[#allocation2 + $0x228] sm:$0xff]
    %v96 = vld [vmem:[#allocation2 + $0x230] sm:$0xff]
    %v97 = vld [vmem:[#allocation2 + $0x238] sm:$0xff]
    %v98 = vld [vmem:[#allocation2 + $0x240] sm:$0xff]
    %v99 = vld [vmem:[#allocation2 + $0x248] sm:$0xff]
    %v100 = vld [vmem:[#allocation2 + $0x250] sm:$0xff]
    %v101 = vld [vmem:[#allocation2 + $0x258] sm:$0xff]
    %v102 = vld [vmem:[#allocation2 + $0x260] sm:$0xff]
    %v103 = vld [vmem:[#allocation2 + $0x268] sm:$0xff]
    %v104 = vld [vmem:[#allocation2 + $0x270] sm:$0xff]
    %v105 = vld [vmem:[#allocation2 + $0x278] sm:$0xff]
    %v106 = vld [vmem:[#allocation2 + $0x280] sm:$0xff]
    %v107 = vld [vmem:[#allocation2 + $0x288] sm:$0xff]
    %v108 = vld [vmem:[#allocation2 + $0x290] sm:$0xff]
    %v109 = vld [vmem:[#allocation2 + $0x298] sm:$0xff]
    %v110 = vld [vmem:[#allocation2 + $0x2a0] sm:$0xff]
    %v111 = vld [vmem:[#allocation2 + $0x2a8] sm:$0xff]
    %v112 = vld [vmem:[#allocation2 + $0x2b0] sm:$0xff]
    %v113 = vld [vmem:[#allocation2 + $0x2b8] sm:$0xff]
    %v114 = vld [vmem:[#allocation2 + $0x2c0] sm:$0xff]
    %v115 = vld [vmem:[#allocation2 + $0x2c8] sm:$0xff]
    %v116 = vld [vmem:[#allocation2 + $0x2d0] sm:$0xff]
    %v117 = vld [vmem:[#allocation2 + $0x2d8] sm:$0xff]
    %v118 = vld [vmem:[#allocation2 + $0x2e0] sm:$0xff]
    %v119 = vld [vmem:[#allocation2 + $0x2e8] sm:$0xff]
    %v120 = vld [vmem:[#allocation2 + $0x2f0] sm:$0xff]
    %v121 = vld [vmem:[#allocation2 + $0x2f8] sm:$0xff]
    %v122 = vld [vmem:[#allocation2 + $0x300] sm:$0xff]
    %v123 = vld [vmem:[#allocation2 + $0x308] sm:$0xff]
    %v124 = vld [vmem:[#allocation2 + $0x310] sm:$0xff]
    %v125 = vld [vmem:[#allocation2 + $0x318] sm:$0xff]
    %v126 = vld [vmem:[#allocation2 + $0x320] sm:$0xff]
    %v127 = vld [vmem:[#allocation2 + $0x328] sm:$0xff]
    %v128 = vld [vmem:[#allocation2 + $0x330] sm:$0xff]
    %v129 = vld [vmem:[#allocation2 + $0x338] sm:$0xff]
    %v130 = vld [vmem:[#allocation2 + $0x340] sm:$0xff]
    %v131 = vld [vmem:[#allocation2 + $0x348] sm:$0xff]
    %v132 = vld [vmem:[#allocation2 + $0x350] sm:$0xff]
    %v133 = vld [vmem:[#allocation2 + $0x358] sm:$0xff]
    %v134 = vld [vmem:[#allocation2 + $0x360] sm:$0xff]
    %v135 = vld [vmem:[#allocation2 + $0x368] sm:$0xff]
    %v136 = vld [vmem:[#allocation2 + $0x370] sm:$0xff]
    %v137 = vld [vmem:[#allocation2 + $0x378] sm:$0xff]
    %v138 = vld [vmem:[#allocation2 + $0x380] sm:$0xff]
    %v139 = vld [vmem:[#allocation2 + $0x388] sm:$0xff]
    %v140 = vld [vmem:[#allocation2 + $0x390] sm:$0xff]
    %v141 = vld [vmem:[#allocation2 + $0x398] sm:$0xff]
    %v142 = vld [vmem:[#allocation2 + $0x3a0] sm:$0xff]
    %v143 = vld [vmem:[#allocation2 + $0x3a8] sm:$0xff]
    %v144 = vld [vmem:[#allocation2 + $0x3b0] sm:$0xff]
    %v145 = vld [vmem:[#allocation2 + $0x3b8] sm:$0xff]
    %v146 = vld [vmem:[#allocation2 + $0x3c0] sm:$0xff]
    %v147 = vld [vmem:[#allocation2 + $0x3c8] sm:$0xff]
    %v148 = vld [vmem:[#allocation2 + $0x3d0] sm:$0xff]
    %v149 = vld [vmem:[#allocation2 + $0x3d8] sm:$0xff]
    %v150 = vld [vmem:[#allocation2 + $0x3e0] sm:$0xff]
    %v151 = vld [vmem:[#allocation2 + $0x3e8] sm:$0xff]
    %v152 = vld [vmem:[#allocation2 + $0x3f0] sm:$0xff]
    %v153 = vld [vmem:[#allocation2 + $0x3f8] sm:$0xff]
    %v154 = vld [vmem:[#allocation2 + $0x400] sm:$0xff]
    %v155 = vld [vmem:[#allocation2 + $0x408] sm:$0xff]
    %v156 = vld [vmem:[#allocation2 + $0x410] sm:$0xff]
    %v157 = vld [vmem:[#allocation2 + $0x418] sm:$0xff]
    %v158 = vld [vmem:[#allocation2 + $0x420] sm:$0xff]
    %v159 = vld [vmem:[#allocation2 + $0x428] sm:$0xff]
    %v160 = vld [vmem:[#allocation2 + $0x430] sm:$0xff]
    %v161 = vld [vmem:[#allocation2 + $0x438] sm:$0xff]
    %v162 = vld [vmem:[#allocation2 + $0x440] sm:$0xff]
    %v163 = vld [vmem:[#allocation2 + $0x448] sm:$0xff]
    %v164 = vld [vmem:[#allocation2 + $0x450] sm:$0xff]
    %v165 = vld [vmem:[#allocation2 + $0x458] sm:$0xff]
    %v166 = vld [vmem:[#allocation2 + $0x460] sm:$0xff]
    %v167 = vld [vmem:[#allocation2 + $0x468] sm:$0xff]
    %v168 = vld [vmem:[#allocation2 + $0x470] sm:$0xff]
    %v169 = vld [vmem:[#allocation2 + $0x478] sm:$0xff]
    %v170 = vld [vmem:[#allocation2 + $0x480] sm:$0xff]
    %v171 = vld [vmem:[#allocation2 + $0x488] sm:$0xff]
    %v172 = vld [vmem:[#allocation2 + $0x490] sm:$0xff]
    %v173 = vld [vmem:[#allocation2 + $0x498] sm:$0xff]
    %v174 = vld [vmem:[#allocation2 + $0x4a0] sm:$0xff]
    %v175 = vld [vmem:[#allocation2 + $0x4a8] sm:$0xff]
    %v176 = vld [vmem:[#allocation2 + $0x4b0] sm:$0xff]
    %v177 = vld [vmem:[#allocation2 + $0x4b8] sm:$0xff]
    %v178 = vld [vmem:[#allocation2 + $0x4c0] sm:$0xff]
    %v179 = vld [vmem:[#allocation2 + $0x4c8] sm:$0xff]
    %v180 = vld [vmem:[#allocation2 + $0x4d0] sm:$0xff]
    %v181 = vld [vmem:[#allocation2 + $0x4d8] sm:$0xff]
    %v182 = vld [vmem:[#allocation2 + $0x4e0] sm:$0xff]
    %v183 = vld [vmem:[#allocation2 + $0x4e8] sm:$0xff]
    %v184 = vld [vmem:[#allocation2 + $0x4f0] sm:$0xff]
    %v185 = vld [vmem:[#allocation2 + $0x4f8] sm:$0xff]
    %v186 = vld [vmem:[#allocation2 + $0x500] sm:$0xff]
    %v187 = vld [vmem:[#allocation2 + $0x508] sm:$0xff]
    %v188 = vld [vmem:[#allocation2 + $0x510] sm:$0xff]
    %v189 = vld [vmem:[#allocation2 + $0x518] sm:$0xff]
    %v190 = vld [vmem:[#allocation2 + $0x520] sm:$0xff]
    %v191 = vld [vmem:[#allocation2 + $0x528] sm:$0xff]
    %v192 = vld [vmem:[#allocation2 + $0x530] sm:$0xff]
    %v193 = vld [vmem:[#allocation2 + $0x538] sm:$0xff]
    %v194 = vld [vmem:[#allocation2 + $0x540] sm:$0xff]
    %v195 = vld [vmem:[#allocation2 + $0x548] sm:$0xff]
    %v196 = vld [vmem:[#allocation2 + $0x550] sm:$0xff]
    %v197 = vld [vmem:[#allocation2 + $0x558] sm:$0xff]
    %v198 = vld [vmem:[#allocation2 + $0x560] sm:$0xff]
    %v199 = vld [vmem:[#allocation2 + $0x568] sm:$0xff]
    %v200 = vld [vmem:[#allocation2 + $0x570] sm:$0xff]
    %v201 = vld [vmem:[#allocation2 + $0x578] sm:$0xff]
    %v202 = vld [vmem:[#allocation2 + $0x580] sm:$0xff]
    %v203 = vld [vmem:[#allocation2 + $0x588] sm:$0xff]
    %v204 = vld [vmem:[#allocation2 + $0x590] sm:$0xff]
    %v205 = vld [vmem:[#allocation2 + $0x598] sm:$0xff]
    %v206 = vld [vmem:[#allocation2 + $0x5a0] sm:$0xff]
    %v207 = vld [vmem:[#allocation2 + $0x5a8] sm:$0xff]
    %v208 = vld [vmem:[#allocation2 + $0x5b0] sm:$0xff]
    %v209 = vld [vmem:[#allocation2 + $0x5b8] sm:$0xff]
    %v210 = vld [vmem:[#allocation2 + $0x5c0] sm:$0xff]
    %v211 = vld [vmem:[#allocation2 + $0x5c8] sm:$0xff]
    %v212 = vld [vmem:[#allocation2 + $0x5d0] sm:$0xff]
    %v213 = vld [vmem:[#allocation2 + $0x5d8] sm:$0xff]
    %v214 = vld [vmem:[#allocation2 + $0x5e0] sm:$0xff]
    %v215 = vld [vmem:[#allocation2 + $0x5e8] sm:$0xff]
    %v216 = vld [vmem:[#allocation2 + $0x5f0] sm:$0xff]
    %v217 = vld [vmem:[#allocation2 + $0x5f8] sm:$0xff]
    %v218 = vld [vmem:[#allocation2 + $0x600] sm:$0xff]
    %v219 = vld [vmem:[#allocation2 + $0x608] sm:$0xff]
    %v220 = vld [vmem:[#allocation2 + $0x610] sm:$0xff]
    %v221 = vld [vmem:[#allocation2 + $0x618] sm:$0xff]
    %v222 = vld [vmem:[#allocation2 + $0x620] sm:$0xff]
    %v223 = vld [vmem:[#allocation2 + $0x628] sm:$0xff]
    %v224 = vld [vmem:[#allocation2 + $0x630] sm:$0xff]
    %v225 = vld [vmem:[#allocation2 + $0x638] sm:$0xff]
    %v226 = vld [vmem:[#allocation2 + $0x640] sm:$0xff]
    %v227 = vld [vmem:[#allocation2 + $0x648] sm:$0xff]
    %v228 = vld [vmem:[#allocation2 + $0x650] sm:$0xff]
    %v229 = vld [vmem:[#allocation2 + $0x658] sm:$0xff]
    %v230 = vld [vmem:[#allocation2 + $0x660] sm:$0xff]
    %v231 = vld [vmem:[#allocation2 + $0x668] sm:$0xff]
    %v232 = vld [vmem:[#allocation2 + $0x670] sm:$0xff]
    %v233 = vld [vmem:[#allocation2 + $0x678] sm:$0xff]
    %v234 = vld [vmem:[#allocation2 + $0x680] sm:$0xff]
    %v235 = vld [vmem:[#allocation2 + $0x688] sm:$0xff]
    %v236 = vld [vmem:[#allocation2 + $0x690] sm:$0xff]
    %v237 = vld [vmem:[#allocation2 + $0x698] sm:$0xff]
    %v238 = vld [vmem:[#allocation2 + $0x6a0] sm:$0xff]
    %v239 = vld [vmem:[#allocation2 + $0x6a8] sm:$0xff]
    %v240 = vld [vmem:[#allocation2 + $0x6b0] sm:$0xff]
    %v241 = vld [vmem:[#allocation2 + $0x6b8] sm:$0xff]
    %v242 = vld [vmem:[#allocation2 + $0x6c0] sm:$0xff]
    %v243 = vld [vmem:[#allocation2 + $0x6c8] sm:$0xff]
    %v244 = vld [vmem:[#allocation2 + $0x6d0] sm:$0xff]
    %v245 = vld [vmem:[#allocation2 + $0x6d8] sm:$0xff]
    %v246 = vld [vmem:[#allocation2 + $0x6e0] sm:$0xff]
    %v247 = vld [vmem:[#allocation2 + $0x6e8] sm:$0xff]
    %v248 = vld [vmem:[#allocation2 + $0x6f0] sm:$0xff]
    %v249 = vld [vmem:[#allocation2 + $0x6f8] sm:$0xff]
    %v250 = vld [vmem:[#allocation2 + $0x700] sm:$0xff]
    %v251 = vld [vmem:[#allocation2 + $0x708] sm:$0xff]
    %v252 = vld [vmem:[#allocation2 + $0x710] sm:$0xff]
    %v253 = vld [vmem:[#allocation2 + $0x718] sm:$0xff]
    %v254 = vld [vmem:[#allocation2 + $0x720] sm:$0xff]
    %v255 = vld [vmem:[#allocation2 + $0x728] sm:$0xff]
    %v256 = vld [vmem:[#allocation2 + $0x730] sm:$0xff]
    %v257 = vld [vmem:[#allocation2 + $0x738] sm:$0xff]
    %v258 = vld [vmem:[#allocation2 + $0x740] sm:$0xff]
    %v259 = vld [vmem:[#allocation2 + $0x748] sm:$0xff]
    %v260 = vld [vmem:[#allocation2 + $0x750] sm:$0xff]
    %v261 = vld [vmem:[#allocation2 + $0x758] sm:$0xff]
    %v262 = vld [vmem:[#allocation2 + $0x760] sm:$0xff]
    %v263 = vld [vmem:[#allocation2 + $0x768] sm:$0xff]
    %v264 = vld [vmem:[#allocation2 + $0x770] sm:$0xff]
    %v265 = vld [vmem:[#allocation2 + $0x778] sm:$0xff]
    %v266 = vld [vmem:[#allocation2 + $0x780] sm:$0xff]
    %v267 = vld [vmem:[#allocation2 + $0x788] sm:$0xff]
    %v268 = vld [vmem:[#allocation2 + $0x790] sm:$0xff]
    %v269 = vld [vmem:[#allocation2 + $0x798] sm:$0xff]
    %v270 = vld [vmem:[#allocation2 + $0x7a0] sm:$0xff]
    %v271 = vld [vmem:[#allocation2 + $0x7a8] sm:$0xff]
    %v272 = vld [vmem:[#allocation2 + $0x7b0] sm:$0xff]
    %v273 = vld [vmem:[#allocation2 + $0x7b8] sm:$0xff]
    %v274 = vld [vmem:[#allocation2 + $0x7c0] sm:$0xff]
    %v275 = vld [vmem:[#allocation2 + $0x7c8] sm:$0xff]
    %v276 = vld [vmem:[#allocation2 + $0x7d0] sm:$0xff]
    %v277 = vld [vmem:[#allocation2 + $0x7d8] sm:$0xff]
    %v278 = vld [vmem:[#allocation2 + $0x7e0] sm:$0xff]
    %v279 = vld [vmem:[#allocation2 + $0x7e8] sm:$0xff]
    %v280 = vld [vmem:[#allocation2 + $0x7f0] sm:$0xff]
    %v281 = vld [vmem:[#allocation2 + $0x7f8] sm:$0xff]
    %v282 = vld [vmem:[#allocation2 + $0x800] sm:$0xff]
    %v283 = vld [vmem:[#allocation2 + $0x808] sm:$0xff]
    %v284 = vld [vmem:[#allocation2 + $0x810] sm:$0xff]
    %v285 = vld [vmem:[#allocation2 + $0x818] sm:$0xff]
    %v286 = vld [vmem:[#allocation2 + $0x820] sm:$0xff]
    %v287 = vld [vmem:[#allocation2 + $0x828] sm:$0xff]
    %v288 = vld [vmem:[#allocation2 + $0x830] sm:$0xff]
    %v289 = vld [vmem:[#allocation2 + $0x838] sm:$0xff]
    %v290 = vld [vmem:[#allocation2 + $0x840] sm:$0xff]
    %v291 = vld [vmem:[#allocation2 + $0x848] sm:$0xff]
    %v292 = vld [vmem:[#allocation2 + $0x850] sm:$0xff]
    %v293 = vld [vmem:[#allocation2 + $0x858] sm:$0xff]
    %v294 = vld [vmem:[#allocation2 + $0x860] sm:$0xff]
    %v295 = vld [vmem:[#allocation2 + $0x868] sm:$0xff]
    %v296 = vld [vmem:[#allocation2 + $0x870] sm:$0xff]
    %v297 = vld [vmem:[#allocation2 + $0x878] sm:$0xff]
    %v298 = vld [vmem:[#allocation2 + $0x880] sm:$0xff]
    %v299 = vld [vmem:[#allocation2 + $0x888] sm:$0xff]
    %v300 = vld [vmem:[#allocation2 + $0x890] sm:$0xff]
    %v301 = vld [vmem:[#allocation2 + $0x898] sm:$0xff]
    %v302 = vld [vmem:[#allocation2 + $0x8a0] sm:$0xff]
    %v303 = vld [vmem:[#allocation2 + $0x8a8] sm:$0xff]
    %v304 = vld [vmem:[#allocation2 + $0x8b0] sm:$0xff]
    %v305 = vld [vmem:[#allocation2 + $0x8b8] sm:$0xff]
    %v306 = vld [vmem:[#allocation2 + $0x8c0] sm:$0xff]
    %v307 = vld [vmem:[#allocation2 + $0x8c8] sm:$0xff]
    %v308 = vld [vmem:[#allocation2 + $0x8d0] sm:$0xff]
    %v309 = vld [vmem:[#allocation2 + $0x8d8] sm:$0xff]
    %v310 = vld [vmem:[#allocation2 + $0x8e0] sm:$0xff]
    %v311 = vld [vmem:[#allocation2 + $0x8e8] sm:$0xff]
    %v312 = vld [vmem:[#allocation2 + $0x8f0] sm:$0xff]
    %v313 = vld [vmem:[#allocation2 + $0x8f8] sm:$0xff]
    %v314 = vld [vmem:[#allocation2 + $0x900] sm:$0xff]
    %v315 = vld [vmem:[#allocation2 + $0x908] sm:$0xff]
    %v316 = vld [vmem:[#allocation2 + $0x910] sm:$0xff]
    %v317 = vld [vmem:[#allocation2 + $0x918] sm:$0xff]
    %v318 = vld [vmem:[#allocation2 + $0x920] sm:$0xff]
    %v319 = vld [vmem:[#allocation2 + $0x928] sm:$0xff]
    %v320 = vld [vmem:[#allocation2 + $0x930] sm:$0xff]
    %v321 = vld [vmem:[#allocation2 + $0x938] sm:$0xff]
    %v322 = vld [vmem:[#allocation2 + $0x940] sm:$0xff]
    %v323 = vld [vmem:[#allocation2 + $0x948] sm:$0xff]
    %v324 = vld [vmem:[#allocation2 + $0x950] sm:$0xff]
    %v325 = vld [vmem:[#allocation2 + $0x958] sm:$0xff]
    %v326 = vld [vmem:[#allocation2 + $0x960] sm:$0xff]
    %v327 = vld [vmem:[#allocation2 + $0x968] sm:$0xff]
    %v328 = vld [vmem:[#allocation2 + $0x970] sm:$0xff]
    %v329 = vld [vmem:[#allocation2 + $0x978] sm:$0xff]
    %v330 = vld [vmem:[#allocation2 + $0x980] sm:$0xff]
    %v331 = vld [vmem:[#allocation2 + $0x988] sm:$0xff]
    %v332 = vld [vmem:[#allocation2 + $0x990] sm:$0xff]
    %v333 = vld [vmem:[#allocation2 + $0x998] sm:$0xff]
    %v334 = vld [vmem:[#allocation2 + $0x9a0] sm:$0xff]
    %v335 = vld [vmem:[#allocation2 + $0x9a8] sm:$0xff]
    %v336 = vld [vmem:[#allocation2 + $0x9b0] sm:$0xff]
    %v337 = vld [vmem:[#allocation2 + $0x9b8] sm:$0xff]
    %v338 = vld [vmem:[#allocation2 + $0x9c0] sm:$0xff]
    %v339 = vld [vmem:[#allocation2 + $0x9c8] sm:$0xff]
    %v340 = vld [vmem:[#allocation2 + $0x9d0] sm:$0xff]
    %v341 = vld [vmem:[#allocation2 + $0x9d8] sm:$0xff]
    %v342 = vld [vmem:[#allocation2 + $0x9e0] sm:$0xff]
    %v343 = vld [vmem:[#allocation2 + $0x9e8] sm:$0xff]
    %v344 = vld [vmem:[#allocation2 + $0x9f0] sm:$0xff]
    %v345 = vld [vmem:[#allocation2 + $0x9f8] sm:$0xff]
    %v346 = vld [vmem:[#allocation2 + $0xa00] sm:$0xff]
    %v347 = vld [vmem:[#allocation2 + $0xa08] sm:$0xff]
    %v348 = vld [vmem:[#allocation2 + $0xa10] sm:$0xff]
    %v349 = vld [vmem:[#allocation2 + $0xa18] sm:$0xff]
    %v350 = vld [vmem:[#allocation2 + $0xa20] sm:$0xff]
    %v351 = vld [vmem:[#allocation2 + $0xa28] sm:$0xff]
    %v352 = vld [vmem:[#allocation2 + $0xa30] sm:$0xff]
    %v353 = vld [vmem:[#allocation2 + $0xa38] sm:$0xff]
    %v354 = vld [vmem:[#allocation2 + $0xa40] sm:$0xff]
    %v355 = vld [vmem:[#allocation2 + $0xa48] sm:$0xff]
    %v356 = vld [vmem:[#allocation2 + $0xa50] sm:$0xff]
    %v357 = vld [vmem:[#allocation2 + $0xa58] sm:$0xff]
    %v358 = vld [vmem:[#allocation2 + $0xa60] sm:$0xff]
    %v359 = vld [vmem:[#allocation2 + $0xa68] sm:$0xff]
    %v360 = vld [vmem:[#allocation2 + $0xa70] sm:$0xff]
    %v361 = vld [vmem:[#allocation2 + $0xa78] sm:$0xff]
    %v362 = vld [vmem:[#allocation2 + $0xa80] sm:$0xff]
    %v363 = vld [vmem:[#allocation2 + $0xa88] sm:$0xff]
    %v364 = vld [vmem:[#allocation2 + $0xa90] sm:$0xff]
    %v365 = vld [vmem:[#allocation2 + $0xa98] sm:$0xff]
    %v366 = vld [vmem:[#allocation2 + $0xaa0] sm:$0xff]
    %v367 = vld [vmem:[#allocation2 + $0xaa8] sm:$0xff]
    %v368 = vld [vmem:[#allocation2 + $0xab0] sm:$0xff]
    %v369 = vld [vmem:[#allocation2 + $0xab8] sm:$0xff]
    %v370 = vld [vmem:[#allocation2 + $0xac0] sm:$0xff]
    %v371 = vld [vmem:[#allocation2 + $0xac8] sm:$0xff]
    %v372 = vld [vmem:[#allocation2 + $0xad0] sm:$0xff]
    %v373 = vld [vmem:[#allocation2 + $0xad8] sm:$0xff]
    %v374 = vld [vmem:[#allocation2 + $0xae0] sm:$0xff]
    %v375 = vld [vmem:[#allocation2 + $0xae8] sm:$0xff]
    %v376 = vld [vmem:[#allocation2 + $0xaf0] sm:$0xff]
    %v377 = vld [vmem:[#allocation2 + $0xaf8] sm:$0xff]
    %v378 = vld [vmem:[#allocation2 + $0xb00] sm:$0xff]
    %v379 = vld [vmem:[#allocation2 + $0xb08] sm:$0xff]
    %v380 = vld [vmem:[#allocation2 + $0xb10] sm:$0xff]
    %v381 = vld [vmem:[#allocation2 + $0xb18] sm:$0xff]
    %v382 = vld [vmem:[#allocation2 + $0xb20] sm:$0xff]
    %v383 = vld [vmem:[#allocation2 + $0xb28] sm:$0xff]
    %v384 = vld [vmem:[#allocation2 + $0xb30] sm:$0xff]
    %v385 = vld [vmem:[#allocation2 + $0xb38] sm:$0xff]
    %v386 = vld [vmem:[#allocation2 + $0xb40] sm:$0xff]
    %v387 = vld [vmem:[#allocation2 + $0xb48] sm:$0xff]
    %v388 = vld [vmem:[#allocation2 + $0xb50] sm:$0xff]
    %v389 = vld [vmem:[#allocation2 + $0xb58] sm:$0xff]
    %v390 = vld [vmem:[#allocation2 + $0xb60] sm:$0xff]
    %v391 = vld [vmem:[#allocation2 + $0xb68] sm:$0xff]
    %v392 = vld [vmem:[#allocation2 + $0xb70] sm:$0xff]
    %v393 = vld [vmem:[#allocation2 + $0xb78] sm:$0xff]
    %v394 = vld [vmem:[#allocation2 + $0xb80] sm:$0xff]
    %v395 = vld [vmem:[#allocation2 + $0xb88] sm:$0xff]
    %v396 = vld [vmem:[#allocation2 + $0xb90] sm:$0xff]
    %v397 = vld [vmem:[#allocation2 + $0xb98] sm:$0xff]
    %v398 = vld [vmem:[#allocation2 + $0xba0] sm:$0xff]
    %v399 = vld [vmem:[#allocation2 + $0xba8] sm:$0xff]
    %v400 = vld [vmem:[#allocation2 + $0xbb0] sm:$0xff]
    %v401 = vld [vmem:[#allocation2 + $0xbb8] sm:$0xff]
    %v402 = vld [vmem:[#allocation2 + $0xbc0] sm:$0xff]
    %v403 = vld [vmem:[#allocation2 + $0xbc8] sm:$0xff]
    %v404 = vld [vmem:[#allocation2 + $0xbd0] sm:$0xff]
    %v405 = vld [vmem:[#allocation2 + $0xbd8] sm:$0xff]
    %v406 = vld [vmem:[#allocation2 + $0xbe0] sm:$0xff]
    %v407 = vld [vmem:[#allocation2 + $0xbe8] sm:$0xff]
    %v408 = vld [vmem:[#allocation2 + $0xbf0] sm:$0xff]
    %v409 = vld [vmem:[#allocation2 + $0xbf8] sm:$0xff]
    %v410 = vld [vmem:[#allocation2 + $0xc00] sm:$0xff]
    %v411 = vld [vmem:[#allocation2 + $0xc08] sm:$0xff]
    %v412 = vld [vmem:[#allocation2 + $0xc10] sm:$0xff]
    %v413 = vld [vmem:[#allocation2 + $0xc18] sm:$0xff]
    %v414 = vld [vmem:[#allocation2 + $0xc20] sm:$0xff]
    %v415 = vld [vmem:[#allocation2 + $0xc28] sm:$0xff]
    %v416 = vld [vmem:[#allocation2 + $0xc30] sm:$0xff]
    %v417 = vld [vmem:[#allocation2 + $0xc38] sm:$0xff]
    %v418 = vld [vmem:[#allocation2 + $0xc40] sm:$0xff]
    %v419 = vld [vmem:[#allocation2 + $0xc48] sm:$0xff]
    %v420 = vld [vmem:[#allocation2 + $0xc50] sm:$0xff]
    %v421 = vld [vmem:[#allocation2 + $0xc58] sm:$0xff]
    %v422 = vld [vmem:[#allocation2 + $0xc60] sm:$0xff]
    %v423 = vld [vmem:[#allocation2 + $0xc68] sm:$0xff]
    %v424 = vld [vmem:[#allocation2 + $0xc70] sm:$0xff]
    %v425 = vld [vmem:[#allocation2 + $0xc78] sm:$0xff]
    %v426 = vld [vmem:[#allocation2 + $0xc80] sm:$0xff]
    %v427 = vld [vmem:[#allocation2 + $0xc88] sm:$0xff]
    %v428 = vld [vmem:[#allocation2 + $0xc90] sm:$0xff]
    %v429 = vld [vmem:[#allocation2 + $0xc98] sm:$0xff]
    %v430 = vld [vmem:[#allocation2 + $0xca0] sm:$0xff]
    %v431 = vld [vmem:[#allocation2 + $0xca8] sm:$0xff]
    %v432 = vld [vmem:[#allocation2 + $0xcb0] sm:$0xff]
    %v433 = vld [vmem:[#allocation2 + $0xcb8] sm:$0xff]
    %v434 = vld [vmem:[#allocation2 + $0xcc0] sm:$0xff]
    %v435 = vld [vmem:[#allocation2 + $0xcc8] sm:$0xff]
    %v436 = vld [vmem:[#allocation2 + $0xcd0] sm:$0xff]
    %v437 = vld [vmem:[#allocation2 + $0xcd8] sm:$0xff]
    %v438 = vld [vmem:[#allocation2 + $0xce0] sm:$0xff]
    %v439 = vld [vmem:[#allocation2 + $0xce8] sm:$0xff]
    %v440 = vld [vmem:[#allocation2 + $0xcf0] sm:$0xff]
    %v441 = vld [vmem:[#allocation2 + $0xcf8] sm:$0xff]
    %v442 = vld [vmem:[#allocation2 + $0xd00] sm:$0xff]
    %v443 = vld [vmem:[#allocation2 + $0xd08] sm:$0xff]
    %v444 = vld [vmem:[#allocation2 + $0xd10] sm:$0xff]
    %v445 = vld [vmem:[#allocation2 + $0xd18] sm:$0xff]
    %v446 = vld [vmem:[#allocation2 + $0xd20] sm:$0xff]
    %v447 = vld [vmem:[#allocation2 + $0xd28] sm:$0xff]
    %v448 = vld [vmem:[#allocation2 + $0xd30] sm:$0xff]
    %v449 = vld [vmem:[#allocation2 + $0xd38] sm:$0xff]
    %v450 = vld [vmem:[#allocation2 + $0xd40] sm:$0xff]
    %v451 = vld [vmem:[#allocation2 + $0xd48] sm:$0xff]
    %v452 = vld [vmem:[#allocation2 + $0xd50] sm:$0xff]
    %v453 = vld [vmem:[#allocation2 + $0xd58] sm:$0xff]
    %v454 = vld [vmem:[#allocation2 + $0xd60] sm:$0xff]
    %v455 = vld [vmem:[#allocation2 + $0xd68] sm:$0xff]
    %v456 = vld [vmem:[#allocation2 + $0xd70] sm:$0xff]
    %v457 = vld [vmem:[#allocation2 + $0xd78] sm:$0xff]
    %v458 = vld [vmem:[#allocation2 + $0xd80] sm:$0xff]
    %v459 = vld [vmem:[#allocation2 + $0xd88] sm:$0xff]
    %v460 = vld [vmem:[#allocation2 + $0xd90] sm:$0xff]
    %v461 = vld [vmem:[#allocation2 + $0xd98] sm:$0xff]
    %v462 = vld [vmem:[#allocation2 + $0xda0] sm:$0xff]
    %v463 = vld [vmem:[#allocation2 + $0xda8] sm:$0xff]
    %v464 = vld [vmem:[#allocation2 + $0xdb0] sm:$0xff]
    %v465 = vld [vmem:[#allocation2 + $0xdb8] sm:$0xff]
    %v466 = vld [vmem:[#allocation2 + $0xdc0] sm:$0xff]
    %v467 = vld [vmem:[#allocation2 + $0xdc8] sm:$0xff]
    %v468 = vld [vmem:[#allocation2 + $0xdd0] sm:$0xff]
    %v469 = vld [vmem:[#allocation2 + $0xdd8] sm:$0xff]
    %v470 = vld [vmem:[#allocation2 + $0xde0] sm:$0xff]
    %v471 = vld [vmem:[#allocation2 + $0xde8] sm:$0xff]
    %v472 = vld [vmem:[#allocation2 + $0xdf0] sm:$0xff]
    %v473 = vld [vmem:[#allocation2 + $0xdf8] sm:$0xff]
    %v474 = vld [vmem:[#allocation2 + $0xe00] sm:$0xff]
    %v475 = vld [vmem:[#allocation2 + $0xe08] sm:$0xff]
    %v476 = vld [vmem:[#allocation2 + $0xe10] sm:$0xff]
    %v477 = vld [vmem:[#allocation2 + $0xe18] sm:$0xff]
    %v478 = vld [vmem:[#allocation2 + $0xe20] sm:$0xff]
    %v479 = vld [vmem:[#allocation2 + $0xe28] sm:$0xff]
    %v480 = vld [vmem:[#allocation2 + $0xe30] sm:$0xff]
    %v481 = vld [vmem:[#allocation2 + $0xe38] sm:$0xff]
    %v482 = vld [vmem:[#allocation2 + $0xe40] sm:$0xff]
    %v483 = vld [vmem:[#allocation2 + $0xe48] sm:$0xff]
    %v484 = vld [vmem:[#allocation2 + $0xe50] sm:$0xff]
    %v485 = vld [vmem:[#allocation2 + $0xe58] sm:$0xff]
    %v486 = vld [vmem:[#allocation2 + $0xe60] sm:$0xff]
    %v487 = vld [vmem:[#allocation2 + $0xe68] sm:$0xff]
    %v488 = vld [vmem:[#allocation2 + $0xe70] sm:$0xff]
    %v489 = vld [vmem:[#allocation2 + $0xe78] sm:$0xff]
    %v490 = vld [vmem:[#allocation2 + $0xe80] sm:$0xff]
    %v491 = vld [vmem:[#allocation2 + $0xe88] sm:$0xff]
    %v492 = vld [vmem:[#allocation2 + $0xe90] sm:$0xff]
    %v493 = vld [vmem:[#allocation2 + $0xe98] sm:$0xff]
    %v494 = vld [vmem:[#allocation2 + $0xea0] sm:$0xff]
    %v495 = vld [vmem:[#allocation2 + $0xea8] sm:$0xff]
    %v496 = vld [vmem:[#allocation2 + $0xeb0] sm:$0xff]
    %v497 = vld [vmem:[#allocation2 + $0xeb8] sm:$0xff]
    %v498 = vld [vmem:[#allocation2 + $0xec0] sm:$0xff]
    %v499 = vld [vmem:[#allocation2 + $0xec8] sm:$0xff]
    %v500 = vld [vmem:[#allocation2 + $0xed0] sm:$0xff]
    %v501 = vld [vmem:[#allocation2 + $0xed8] sm:$0xff]
    %v502 = vld [vmem:[#allocation2 + $0xee0] sm:$0xff]
    %v503 = vld [vmem:[#allocation2 + $0xee8] sm:$0xff]
    %v504 = vld [vmem:[#allocation2 + $0xef0] sm:$0xff]
    %v505 = vld [vmem:[#allocation2 + $0xef8] sm:$0xff]
    %v506 = vld [vmem:[#allocation2 + $0xf00] sm:$0xff]
    %v507 = vld [vmem:[#allocation2 + $0xf08] sm:$0xff]
    %v508 = vld [vmem:[#allocation2 + $0xf10] sm:$0xff]
    %v509 = vld [vmem:[#allocation2 + $0xf18] sm:$0xff]
    %v510 = vld [vmem:[#allocation2 + $0xf20] sm:$0xff]
    %v511 = vld [vmem:[#allocation2 + $0xf28] sm:$0xff]
    %v512 = vld [vmem:[#allocation2 + $0xf30] sm:$0xff]
    %v513 = vld [vmem:[#allocation2 + $0xf38] sm:$0xff]
    %v514 = vld [vmem:[#allocation2 + $0xf40] sm:$0xff]
    %v515 = vld [vmem:[#allocation2 + $0xf48] sm:$0xff]
    %v516 = vld [vmem:[#allocation2 + $0xf50] sm:$0xff]
    %v517 = vld [vmem:[#allocation2 + $0xf58] sm:$0xff]
    %v518 = vld [vmem:[#allocation2 + $0xf60] sm:$0xff]
    %v519 = vld [vmem:[#allocation2 + $0xf68] sm:$0xff]
    %v520 = vld [vmem:[#allocation2 + $0xf70] sm:$0xff]
    %v521 = vld [vmem:[#allocation2 + $0xf78] sm:$0xff]
    %v522 = vld [vmem:[#allocation2 + $0xf80] sm:$0xff]
    %v523 = vld [vmem:[#allocation2 + $0xf88] sm:$0xff]
    %v524 = vld [vmem:[#allocation2 + $0xf90] sm:$0xff]
    %v525 = vld [vmem:[#allocation2 + $0xf98] sm:$0xff]
    %v526 = vld [vmem:[#allocation2 + $0xfa0] sm:$0xff]
    %v527 = vld [vmem:[#allocation2 + $0xfa8] sm:$0xff]
    %v528 = vld [vmem:[#allocation2 + $0xfb0] sm:$0xff]
    %v529 = vld [vmem:[#allocation2 + $0xfb8] sm:$0xff]
    %v530 = vld [vmem:[#allocation2 + $0xfc0] sm:$0xff]
    %v531 = vld [vmem:[#allocation2 + $0xfc8] sm:$0xff]
    %v532 = vld [vmem:[#allocation2 + $0xfd0] sm:$0xff]
    %v533 = vld [vmem:[#allocation2 + $0xfd8] sm:$0xff]
    %v534 = vld [vmem:[#allocation2 + $0xfe0] sm:$0xff]
    %v535 = vld [vmem:[#allocation2 + $0xfe8] sm:$0xff]
    %v536 = vld [vmem:[#allocation2 + $0xff0] sm:$0xff]
    %v537 = vld [vmem:[#allocation2 + $0xff8] sm:$0xff]
    %v539 = vcombine.high %v25, %v25
    %v541 = vunpack.c.l.s4 1966171168
    %v542 = vunpack.c.0.s8 %v541
    %v543 = vlaneseq
    %v544 = vshrl.u32 %v543, 7
    %v545 = vsub.s32 %v542, %v544
    %v546 = vrot.slane %v25, %v545
    %v548 = vunpack.c.l.s4 1966171168
    %v549 = vunpack.c.0.s8 %v548
    %v550 = vlaneseq
    %v551 = vshrl.u32 %v550, 7
    %v552 = vsub.s32 %v549, %v551
    %v553 = vrot.slane %v539, %v552
    %v554 = vcombine.high %v546, %v546
    %v555 = vcombine.high %v553, %v553
    %v557 = vunpack.c.l.s4 1966171168
    %v558 = vunpack.c.0.s8 %v557
    %v559 = vlaneseq
    %v560 = vshrl.u32 %v559, 7
    %v561 = vsub.s32 %v558, %v560
    %v562 = vrot.slane %v546, %v561
    %v564 = vunpack.c.l.s4 1966171168
    %v565 = vunpack.c.0.s8 %v564
    %v566 = vlaneseq
    %v567 = vshrl.u32 %v566, 7
    %v568 = vsub.s32 %v565, %v567
    %v569 = vrot.slane %v553, %v568
    %v571 = vunpack.c.l.s4 1966171168
    %v572 = vunpack.c.0.s8 %v571
    %v573 = vlaneseq
    %v574 = vshrl.u32 %v573, 7
    %v575 = vsub.s32 %v572, %v574
    %v576 = vrot.slane %v554, %v575
    %v578 = vunpack.c.l.s4 1966171168
    %v579 = vunpack.c.0.s8 %v578
    %v580 = vlaneseq
    %v581 = vshrl.u32 %v580, 7
    %v582 = vsub.s32 %v579, %v581
    %v583 = vrot.slane %v555, %v582
    %v584 = vcombine.high %v562, %v562
    %v585 = vcombine.high %v569, %v569
    %v586 = vcombine.high %v576, %v576
    %v587 = vcombine.high %v583, %v583
    %v1108 = vunpack.c.l.b16 %v26
    %v1109 = vunpack.c.h.b16 %v26
    %v1110 = vunpack.c.l.b16 %v27
    %v1111 = vunpack.c.h.b16 %v27
    %v1112 = vunpack.c.l.b16 %v28
    %v1113 = vunpack.c.h.b16 %v28
    %v1114 = vunpack.c.l.b16 %v29
    %v1115 = vunpack.c.h.b16 %v29
    %v1116 = vunpack.c.l.b16 %v30
    %v1117 = vunpack.c.h.b16 %v30
    %v1118 = vunpack.c.l.b16 %v31
    %v1119 = vunpack.c.h.b16 %v31
    %v1120 = vunpack.c.l.b16 %v32
    %v1121 = vunpack.c.h.b16 %v32
    %v1122 = vunpack.c.l.b16 %v33
    %v1123 = vunpack.c.h.b16 %v33
    %v1124 = vunpack.c.l.b16 %v34
    %v1125 = vunpack.c.h.b16 %v34
    %v1126 = vunpack.c.l.b16 %v35
    %v1127 = vunpack.c.h.b16 %v35
    %v1128 = vunpack.c.l.b16 %v36
    %v1129 = vunpack.c.h.b16 %v36
    %v1130 = vunpack.c.l.b16 %v37
    %v1131 = vunpack.c.h.b16 %v37
    %v1132 = vunpack.c.l.b16 %v38
    %v1133 = vunpack.c.h.b16 %v38
    %v1134 = vunpack.c.l.b16 %v39
    %v1135 = vunpack.c.h.b16 %v39
    %v1136 = vunpack.c.l.b16 %v40
    %v1137 = vunpack.c.h.b16 %v40
    %v1138 = vunpack.c.l.b16 %v41
    %v1139 = vunpack.c.h.b16 %v41
    %v1140 = vunpack.c.l.b16 %v42
    %v1141 = vunpack.c.h.b16 %v42
    %v1142 = vunpack.c.l.b16 %v43
    %v1143 = vunpack.c.h.b16 %v43
    %v1144 = vunpack.c.l.b16 %v44
    %v1145 = vunpack.c.h.b16 %v44
    %v1146 = vunpack.c.l.b16 %v45
    %v1147 = vunpack.c.h.b16 %v45
    %v1148 = vunpack.c.l.b16 %v46
    %v1149 = vunpack.c.h.b16 %v46
    %v1150 = vunpack.c.l.b16 %v47
    %v1151 = vunpack.c.h.b16 %v47
    %v1152 = vunpack.c.l.b16 %v48
    %v1153 = vunpack.c.h.b16 %v48
    %v1154 = vunpack.c.l.b16 %v49
    %v1155 = vunpack.c.h.b16 %v49
    %v1156 = vunpack.c.l.b16 %v50
    %v1157 = vunpack.c.h.b16 %v50
    %v1158 = vunpack.c.l.b16 %v51
    %v1159 = vunpack.c.h.b16 %v51
    %v1160 = vunpack.c.l.b16 %v52
    %v1161 = vunpack.c.h.b16 %v52
    %v1162 = vunpack.c.l.b16 %v53
    %v1163 = vunpack.c.h.b16 %v53
    %v1164 = vunpack.c.l.b16 %v54
    %v1165 = vunpack.c.h.b16 %v54
    %v1166 = vunpack.c.l.b16 %v55
    %v1167 = vunpack.c.h.b16 %v55
    %v1168 = vunpack.c.l.b16 %v56
    %v1169 = vunpack.c.h.b16 %v56
    %v1170 = vunpack.c.l.b16 %v57
    %v1171 = vunpack.c.h.b16 %v57
    %v1172 = vunpack.c.l.b16 %v58
    %v1173 = vunpack.c.h.b16 %v58
    %v1174 = vunpack.c.l.b16 %v59
    %v1175 = vunpack.c.h.b16 %v59
    %v1176 = vunpack.c.l.b16 %v60
    %v1177 = vunpack.c.h.b16 %v60
    %v1178 = vunpack.c.l.b16 %v61
    %v1179 = vunpack.c.h.b16 %v61
    %v1180 = vunpack.c.l.b16 %v62
    %v1181 = vunpack.c.h.b16 %v62
    %v1182 = vunpack.c.l.b16 %v63
    %v1183 = vunpack.c.h.b16 %v63
    %v1184 = vunpack.c.l.b16 %v64
    %v1185 = vunpack.c.h.b16 %v64
    %v1186 = vunpack.c.l.b16 %v65
    %v1187 = vunpack.c.h.b16 %v65
    %v1188 = vunpack.c.l.b16 %v66
    %v1189 = vunpack.c.h.b16 %v66
    %v1190 = vunpack.c.l.b16 %v67
    %v1191 = vunpack.c.h.b16 %v67
    %v1192 = vunpack.c.l.b16 %v68
    %v1193 = vunpack.c.h.b16 %v68
    %v1194 = vunpack.c.l.b16 %v69
    %v1195 = vunpack.c.h.b16 %v69
    %v1196 = vunpack.c.l.b16 %v70
    %v1197 = vunpack.c.h.b16 %v70
    %v1198 = vunpack.c.l.b16 %v71
    %v1199 = vunpack.c.h.b16 %v71
    %v1200 = vunpack.c.l.b16 %v72
    %v1201 = vunpack.c.h.b16 %v72
    %v1202 = vunpack.c.l.b16 %v73
    %v1203 = vunpack.c.h.b16 %v73
    %v1204 = vunpack.c.l.b16 %v74
    %v1205 = vunpack.c.h.b16 %v74
    %v1206 = vunpack.c.l.b16 %v75
    %v1207 = vunpack.c.h.b16 %v75
    %v1208 = vunpack.c.l.b16 %v76
    %v1209 = vunpack.c.h.b16 %v76
    %v1210 = vunpack.c.l.b16 %v77
    %v1211 = vunpack.c.h.b16 %v77
    %v1212 = vunpack.c.l.b16 %v78
    %v1213 = vunpack.c.h.b16 %v78
    %v1214 = vunpack.c.l.b16 %v79
    %v1215 = vunpack.c.h.b16 %v79
    %v1216 = vunpack.c.l.b16 %v80
    %v1217 = vunpack.c.h.b16 %v80
    %v1218 = vunpack.c.l.b16 %v81
    %v1219 = vunpack.c.h.b16 %v81
    %v1220 = vunpack.c.l.b16 %v82
    %v1221 = vunpack.c.h.b16 %v82
    %v1222 = vunpack.c.l.b16 %v83
    %v1223 = vunpack.c.h.b16 %v83
    %v1224 = vunpack.c.l.b16 %v84
    %v1225 = vunpack.c.h.b16 %v84
    %v1226 = vunpack.c.l.b16 %v85
    %v1227 = vunpack.c.h.b16 %v85
    %v1228 = vunpack.c.l.b16 %v86
    %v1229 = vunpack.c.h.b16 %v86
    %v1230 = vunpack.c.l.b16 %v87
    %v1231 = vunpack.c.h.b16 %v87
    %v1232 = vunpack.c.l.b16 %v88
    %v1233 = vunpack.c.h.b16 %v88
    %v1234 = vunpack.c.l.b16 %v89
    %v1235 = vunpack.c.h.b16 %v89
    %v1236 = vunpack.c.l.b16 %v90
    %v1237 = vunpack.c.h.b16 %v90
    %v1238 = vunpack.c.l.b16 %v91
    %v1239 = vunpack.c.h.b16 %v91
    %v1240 = vunpack.c.l.b16 %v92
    %v1241 = vunpack.c.h.b16 %v92
    %v1242 = vunpack.c.l.b16 %v93
    %v1243 = vunpack.c.h.b16 %v93
    %v1244 = vunpack.c.l.b16 %v94
    %v1245 = vunpack.c.h.b16 %v94
    %v1246 = vunpack.c.l.b16 %v95
    %v1247 = vunpack.c.h.b16 %v95
    %v1248 = vunpack.c.l.b16 %v96
    %v1249 = vunpack.c.h.b16 %v96
    %v1250 = vunpack.c.l.b16 %v97
    %v1251 = vunpack.c.h.b16 %v97
    %v1252 = vunpack.c.l.b16 %v98
    %v1253 = vunpack.c.h.b16 %v98
    %v1254 = vunpack.c.l.b16 %v99
    %v1255 = vunpack.c.h.b16 %v99
    %v1256 = vunpack.c.l.b16 %v100
    %v1257 = vunpack.c.h.b16 %v100
    %v1258 = vunpack.c.l.b16 %v101
    %v1259 = vunpack.c.h.b16 %v101
    %v1260 = vunpack.c.l.b16 %v102
    %v1261 = vunpack.c.h.b16 %v102
    %v1262 = vunpack.c.l.b16 %v103
    %v1263 = vunpack.c.h.b16 %v103
    %v1264 = vunpack.c.l.b16 %v104
    %v1265 = vunpack.c.h.b16 %v104
    %v1266 = vunpack.c.l.b16 %v105
    %v1267 = vunpack.c.h.b16 %v105
    %v1268 = vunpack.c.l.b16 %v106
    %v1269 = vunpack.c.h.b16 %v106
    %v1270 = vunpack.c.l.b16 %v107
    %v1271 = vunpack.c.h.b16 %v107
    %v1272 = vunpack.c.l.b16 %v108
    %v1273 = vunpack.c.h.b16 %v108
    %v1274 = vunpack.c.l.b16 %v109
    %v1275 = vunpack.c.h.b16 %v109
    %v1276 = vunpack.c.l.b16 %v110
    %v1277 = vunpack.c.h.b16 %v110
    %v1278 = vunpack.c.l.b16 %v111
    %v1279 = vunpack.c.h.b16 %v111
    %v1280 = vunpack.c.l.b16 %v112
    %v1281 = vunpack.c.h.b16 %v112
    %v1282 = vunpack.c.l.b16 %v113
    %v1283 = vunpack.c.h.b16 %v113
    %v1284 = vunpack.c.l.b16 %v114
    %v1285 = vunpack.c.h.b16 %v114
    %v1286 = vunpack.c.l.b16 %v115
    %v1287 = vunpack.c.h.b16 %v115
    %v1288 = vunpack.c.l.b16 %v116
    %v1289 = vunpack.c.h.b16 %v116
    %v1290 = vunpack.c.l.b16 %v117
    %v1291 = vunpack.c.h.b16 %v117
    %v1292 = vunpack.c.l.b16 %v118
    %v1293 = vunpack.c.h.b16 %v118
    %v1294 = vunpack.c.l.b16 %v119
    %v1295 = vunpack.c.h.b16 %v119
    %v1296 = vunpack.c.l.b16 %v120
    %v1297 = vunpack.c.h.b16 %v120
    %v1298 = vunpack.c.l.b16 %v121
    %v1299 = vunpack.c.h.b16 %v121
    %v1300 = vunpack.c.l.b16 %v122
    %v1301 = vunpack.c.h.b16 %v122
    %v1302 = vunpack.c.l.b16 %v123
    %v1303 = vunpack.c.h.b16 %v123
    %v1304 = vunpack.c.l.b16 %v124
    %v1305 = vunpack.c.h.b16 %v124
    %v1306 = vunpack.c.l.b16 %v125
    %v1307 = vunpack.c.h.b16 %v125
    %v1308 = vunpack.c.l.b16 %v126
    %v1309 = vunpack.c.h.b16 %v126
    %v1310 = vunpack.c.l.b16 %v127
    %v1311 = vunpack.c.h.b16 %v127
    %v1312 = vunpack.c.l.b16 %v128
    %v1313 = vunpack.c.h.b16 %v128
    %v1314 = vunpack.c.l.b16 %v129
    %v1315 = vunpack.c.h.b16 %v129
    %v1316 = vunpack.c.l.b16 %v130
    %v1317 = vunpack.c.h.b16 %v130
    %v1318 = vunpack.c.l.b16 %v131
    %v1319 = vunpack.c.h.b16 %v131
    %v1320 = vunpack.c.l.b16 %v132
    %v1321 = vunpack.c.h.b16 %v132
    %v1322 = vunpack.c.l.b16 %v133
    %v1323 = vunpack.c.h.b16 %v133
    %v1324 = vunpack.c.l.b16 %v134
    %v1325 = vunpack.c.h.b16 %v134
    %v1326 = vunpack.c.l.b16 %v135
    %v1327 = vunpack.c.h.b16 %v135
    %v1328 = vunpack.c.l.b16 %v136
    %v1329 = vunpack.c.h.b16 %v136
    %v1330 = vunpack.c.l.b16 %v137
    %v1331 = vunpack.c.h.b16 %v137
    %v1332 = vunpack.c.l.b16 %v138
    %v1333 = vunpack.c.h.b16 %v138
    %v1334 = vunpack.c.l.b16 %v139
    %v1335 = vunpack.c.h.b16 %v139
    %v1336 = vunpack.c.l.b16 %v140
    %v1337 = vunpack.c.h.b16 %v140
    %v1338 = vunpack.c.l.b16 %v141
    %v1339 = vunpack.c.h.b16 %v141
    %v1340 = vunpack.c.l.b16 %v142
    %v1341 = vunpack.c.h.b16 %v142
    %v1342 = vunpack.c.l.b16 %v143
    %v1343 = vunpack.c.h.b16 %v143
    %v1344 = vunpack.c.l.b16 %v144
    %v1345 = vunpack.c.h.b16 %v144
    %v1346 = vunpack.c.l.b16 %v145
    %v1347 = vunpack.c.h.b16 %v145
    %v1348 = vunpack.c.l.b16 %v146
    %v1349 = vunpack.c.h.b16 %v146
    %v1350 = vunpack.c.l.b16 %v147
    %v1351 = vunpack.c.h.b16 %v147
    %v1352 = vunpack.c.l.b16 %v148
    %v1353 = vunpack.c.h.b16 %v148
    %v1354 = vunpack.c.l.b16 %v149
    %v1355 = vunpack.c.h.b16 %v149
    %v1356 = vunpack.c.l.b16 %v150
    %v1357 = vunpack.c.h.b16 %v150
    %v1358 = vunpack.c.l.b16 %v151
    %v1359 = vunpack.c.h.b16 %v151
    %v1360 = vunpack.c.l.b16 %v152
    %v1361 = vunpack.c.h.b16 %v152
    %v1362 = vunpack.c.l.b16 %v153
    %v1363 = vunpack.c.h.b16 %v153
    %v1364 = vunpack.c.l.b16 %v154
    %v1365 = vunpack.c.h.b16 %v154
    %v1366 = vunpack.c.l.b16 %v155
    %v1367 = vunpack.c.h.b16 %v155
    %v1368 = vunpack.c.l.b16 %v156
    %v1369 = vunpack.c.h.b16 %v156
    %v1370 = vunpack.c.l.b16 %v157
    %v1371 = vunpack.c.h.b16 %v157
    %v1372 = vunpack.c.l.b16 %v158
    %v1373 = vunpack.c.h.b16 %v158
    %v1374 = vunpack.c.l.b16 %v159
    %v1375 = vunpack.c.h.b16 %v159
    %v1376 = vunpack.c.l.b16 %v160
    %v1377 = vunpack.c.h.b16 %v160
    %v1378 = vunpack.c.l.b16 %v161
    %v1379 = vunpack.c.h.b16 %v161
    %v1380 = vunpack.c.l.b16 %v162
    %v1381 = vunpack.c.h.b16 %v162
    %v1382 = vunpack.c.l.b16 %v163
    %v1383 = vunpack.c.h.b16 %v163
    %v1384 = vunpack.c.l.b16 %v164
    %v1385 = vunpack.c.h.b16 %v164
    %v1386 = vunpack.c.l.b16 %v165
    %v1387 = vunpack.c.h.b16 %v165
    %v1388 = vunpack.c.l.b16 %v166
    %v1389 = vunpack.c.h.b16 %v166
    %v1390 = vunpack.c.l.b16 %v167
    %v1391 = vunpack.c.h.b16 %v167
    %v1392 = vunpack.c.l.b16 %v168
    %v1393 = vunpack.c.h.b16 %v168
    %v1394 = vunpack.c.l.b16 %v169
    %v1395 = vunpack.c.h.b16 %v169
    %v1396 = vunpack.c.l.b16 %v170
    %v1397 = vunpack.c.h.b16 %v170
    %v1398 = vunpack.c.l.b16 %v171
    %v1399 = vunpack.c.h.b16 %v171
    %v1400 = vunpack.c.l.b16 %v172
    %v1401 = vunpack.c.h.b16 %v172
    %v1402 = vunpack.c.l.b16 %v173
    %v1403 = vunpack.c.h.b16 %v173
    %v1404 = vunpack.c.l.b16 %v174
    %v1405 = vunpack.c.h.b16 %v174
    %v1406 = vunpack.c.l.b16 %v175
    %v1407 = vunpack.c.h.b16 %v175
    %v1408 = vunpack.c.l.b16 %v176
    %v1409 = vunpack.c.h.b16 %v176
    %v1410 = vunpack.c.l.b16 %v177
    %v1411 = vunpack.c.h.b16 %v177
    %v1412 = vunpack.c.l.b16 %v178
    %v1413 = vunpack.c.h.b16 %v178
    %v1414 = vunpack.c.l.b16 %v179
    %v1415 = vunpack.c.h.b16 %v179
    %v1416 = vunpack.c.l.b16 %v180
    %v1417 = vunpack.c.h.b16 %v180
    %v1418 = vunpack.c.l.b16 %v181
    %v1419 = vunpack.c.h.b16 %v181
    %v1420 = vunpack.c.l.b16 %v182
    %v1421 = vunpack.c.h.b16 %v182
    %v1422 = vunpack.c.l.b16 %v183
    %v1423 = vunpack.c.h.b16 %v183
    %v1424 = vunpack.c.l.b16 %v184
    %v1425 = vunpack.c.h.b16 %v184
    %v1426 = vunpack.c.l.b16 %v185
    %v1427 = vunpack.c.h.b16 %v185
    %v1428 = vunpack.c.l.b16 %v186
    %v1429 = vunpack.c.h.b16 %v186
    %v1430 = vunpack.c.l.b16 %v187
    %v1431 = vunpack.c.h.b16 %v187
    %v1432 = vunpack.c.l.b16 %v188
    %v1433 = vunpack.c.h.b16 %v188
    %v1434 = vunpack.c.l.b16 %v189
    %v1435 = vunpack.c.h.b16 %v189
    %v1436 = vunpack.c.l.b16 %v190
    %v1437 = vunpack.c.h.b16 %v190
    %v1438 = vunpack.c.l.b16 %v191
    %v1439 = vunpack.c.h.b16 %v191
    %v1440 = vunpack.c.l.b16 %v192
    %v1441 = vunpack.c.h.b16 %v192
    %v1442 = vunpack.c.l.b16 %v193
    %v1443 = vunpack.c.h.b16 %v193
    %v1444 = vunpack.c.l.b16 %v194
    %v1445 = vunpack.c.h.b16 %v194
    %v1446 = vunpack.c.l.b16 %v195
    %v1447 = vunpack.c.h.b16 %v195
    %v1448 = vunpack.c.l.b16 %v196
    %v1449 = vunpack.c.h.b16 %v196
    %v1450 = vunpack.c.l.b16 %v197
    %v1451 = vunpack.c.h.b16 %v197
    %v1452 = vunpack.c.l.b16 %v198
    %v1453 = vunpack.c.h.b16 %v198
    %v1454 = vunpack.c.l.b16 %v199
    %v1455 = vunpack.c.h.b16 %v199
    %v1456 = vunpack.c.l.b16 %v200
    %v1457 = vunpack.c.h.b16 %v200
    %v1458 = vunpack.c.l.b16 %v201
    %v1459 = vunpack.c.h.b16 %v201
    %v1460 = vunpack.c.l.b16 %v202
    %v1461 = vunpack.c.h.b16 %v202
    %v1462 = vunpack.c.l.b16 %v203
    %v1463 = vunpack.c.h.b16 %v203
    %v1464 = vunpack.c.l.b16 %v204
    %v1465 = vunpack.c.h.b16 %v204
    %v1466 = vunpack.c.l.b16 %v205
    %v1467 = vunpack.c.h.b16 %v205
    %v1468 = vunpack.c.l.b16 %v206
    %v1469 = vunpack.c.h.b16 %v206
    %v1470 = vunpack.c.l.b16 %v207
    %v1471 = vunpack.c.h.b16 %v207
    %v1472 = vunpack.c.l.b16 %v208
    %v1473 = vunpack.c.h.b16 %v208
    %v1474 = vunpack.c.l.b16 %v209
    %v1475 = vunpack.c.h.b16 %v209
    %v1476 = vunpack.c.l.b16 %v210
    %v1477 = vunpack.c.h.b16 %v210
    %v1478 = vunpack.c.l.b16 %v211
    %v1479 = vunpack.c.h.b16 %v211
    %v1480 = vunpack.c.l.b16 %v212
    %v1481 = vunpack.c.h.b16 %v212
    %v1482 = vunpack.c.l.b16 %v213
    %v1483 = vunpack.c.h.b16 %v213
    %v1484 = vunpack.c.l.b16 %v214
    %v1485 = vunpack.c.h.b16 %v214
    %v1486 = vunpack.c.l.b16 %v215
    %v1487 = vunpack.c.h.b16 %v215
    %v1488 = vunpack.c.l.b16 %v216
    %v1489 = vunpack.c.h.b16 %v216
    %v1490 = vunpack.c.l.b16 %v217
    %v1491 = vunpack.c.h.b16 %v217
    %v1492 = vunpack.c.l.b16 %v218
    %v1493 = vunpack.c.h.b16 %v218
    %v1494 = vunpack.c.l.b16 %v219
    %v1495 = vunpack.c.h.b16 %v219
    %v1496 = vunpack.c.l.b16 %v220
    %v1497 = vunpack.c.h.b16 %v220
    %v1498 = vunpack.c.l.b16 %v221
    %v1499 = vunpack.c.h.b16 %v221
    %v1500 = vunpack.c.l.b16 %v222
    %v1501 = vunpack.c.h.b16 %v222
    %v1502 = vunpack.c.l.b16 %v223
    %v1503 = vunpack.c.h.b16 %v223
    %v1504 = vunpack.c.l.b16 %v224
    %v1505 = vunpack.c.h.b16 %v224
    %v1506 = vunpack.c.l.b16 %v225
    %v1507 = vunpack.c.h.b16 %v225
    %v1508 = vunpack.c.l.b16 %v226
    %v1509 = vunpack.c.h.b16 %v226
    %v1510 = vunpack.c.l.b16 %v227
    %v1511 = vunpack.c.h.b16 %v227
    %v1512 = vunpack.c.l.b16 %v228
    %v1513 = vunpack.c.h.b16 %v228
    %v1514 = vunpack.c.l.b16 %v229
    %v1515 = vunpack.c.h.b16 %v229
    %v1516 = vunpack.c.l.b16 %v230
    %v1517 = vunpack.c.h.b16 %v230
    %v1518 = vunpack.c.l.b16 %v231
    %v1519 = vunpack.c.h.b16 %v231
    %v1520 = vunpack.c.l.b16 %v232
    %v1521 = vunpack.c.h.b16 %v232
    %v1522 = vunpack.c.l.b16 %v233
    %v1523 = vunpack.c.h.b16 %v233
    %v1524 = vunpack.c.l.b16 %v234
    %v1525 = vunpack.c.h.b16 %v234
    %v1526 = vunpack.c.l.b16 %v235
    %v1527 = vunpack.c.h.b16 %v235
    %v1528 = vunpack.c.l.b16 %v236
    %v1529 = vunpack.c.h.b16 %v236
    %v1530 = vunpack.c.l.b16 %v237
    %v1531 = vunpack.c.h.b16 %v237
    %v1532 = vunpack.c.l.b16 %v238
    %v1533 = vunpack.c.h.b16 %v238
    %v1534 = vunpack.c.l.b16 %v239
    %v1535 = vunpack.c.h.b16 %v239
    %v1536 = vunpack.c.l.b16 %v240
    %v1537 = vunpack.c.h.b16 %v240
    %v1538 = vunpack.c.l.b16 %v241
    %v1539 = vunpack.c.h.b16 %v241
    %v1540 = vunpack.c.l.b16 %v242
    %v1541 = vunpack.c.h.b16 %v242
    %v1542 = vunpack.c.l.b16 %v243
    %v1543 = vunpack.c.h.b16 %v243
    %v1544 = vunpack.c.l.b16 %v244
    %v1545 = vunpack.c.h.b16 %v244
    %v1546 = vunpack.c.l.b16 %v245
    %v1547 = vunpack.c.h.b16 %v245
    %v1548 = vunpack.c.l.b16 %v246
    %v1549 = vunpack.c.h.b16 %v246
    %v1550 = vunpack.c.l.b16 %v247
    %v1551 = vunpack.c.h.b16 %v247
    %v1552 = vunpack.c.l.b16 %v248
    %v1553 = vunpack.c.h.b16 %v248
    %v1554 = vunpack.c.l.b16 %v249
    %v1555 = vunpack.c.h.b16 %v249
    %v1556 = vunpack.c.l.b16 %v250
    %v1557 = vunpack.c.h.b16 %v250
    %v1558 = vunpack.c.l.b16 %v251
    %v1559 = vunpack.c.h.b16 %v251
    %v1560 = vunpack.c.l.b16 %v252
    %v1561 = vunpack.c.h.b16 %v252
    %v1562 = vunpack.c.l.b16 %v253
    %v1563 = vunpack.c.h.b16 %v253
    %v1564 = vunpack.c.l.b16 %v254
    %v1565 = vunpack.c.h.b16 %v254
    %v1566 = vunpack.c.l.b16 %v255
    %v1567 = vunpack.c.h.b16 %v255
    %v1568 = vunpack.c.l.b16 %v256
    %v1569 = vunpack.c.h.b16 %v256
    %v1570 = vunpack.c.l.b16 %v257
    %v1571 = vunpack.c.h.b16 %v257
    %v1572 = vunpack.c.l.b16 %v258
    %v1573 = vunpack.c.h.b16 %v258
    %v1574 = vunpack.c.l.b16 %v259
    %v1575 = vunpack.c.h.b16 %v259
    %v1576 = vunpack.c.l.b16 %v260
    %v1577 = vunpack.c.h.b16 %v260
    %v1578 = vunpack.c.l.b16 %v261
    %v1579 = vunpack.c.h.b16 %v261
    %v1580 = vunpack.c.l.b16 %v262
    %v1581 = vunpack.c.h.b16 %v262
    %v1582 = vunpack.c.l.b16 %v263
    %v1583 = vunpack.c.h.b16 %v263
    %v1584 = vunpack.c.l.b16 %v264
    %v1585 = vunpack.c.h.b16 %v264
    %v1586 = vunpack.c.l.b16 %v265
    %v1587 = vunpack.c.h.b16 %v265
    %v1588 = vunpack.c.l.b16 %v266
    %v1589 = vunpack.c.h.b16 %v266
    %v1590 = vunpack.c.l.b16 %v267
    %v1591 = vunpack.c.h.b16 %v267
    %v1592 = vunpack.c.l.b16 %v268
    %v1593 = vunpack.c.h.b16 %v268
    %v1594 = vunpack.c.l.b16 %v269
    %v1595 = vunpack.c.h.b16 %v269
    %v1596 = vunpack.c.l.b16 %v270
    %v1597 = vunpack.c.h.b16 %v270
    %v1598 = vunpack.c.l.b16 %v271
    %v1599 = vunpack.c.h.b16 %v271
    %v1600 = vunpack.c.l.b16 %v272
    %v1601 = vunpack.c.h.b16 %v272
    %v1602 = vunpack.c.l.b16 %v273
    %v1603 = vunpack.c.h.b16 %v273
    %v1604 = vunpack.c.l.b16 %v274
    %v1605 = vunpack.c.h.b16 %v274
    %v1606 = vunpack.c.l.b16 %v275
    %v1607 = vunpack.c.h.b16 %v275
    %v1608 = vunpack.c.l.b16 %v276
    %v1609 = vunpack.c.h.b16 %v276
    %v1610 = vunpack.c.l.b16 %v277
    %v1611 = vunpack.c.h.b16 %v277
    %v1612 = vunpack.c.l.b16 %v278
    %v1613 = vunpack.c.h.b16 %v278
    %v1614 = vunpack.c.l.b16 %v279
    %v1615 = vunpack.c.h.b16 %v279
    %v1616 = vunpack.c.l.b16 %v280
    %v1617 = vunpack.c.h.b16 %v280
    %v1618 = vunpack.c.l.b16 %v281
    %v1619 = vunpack.c.h.b16 %v281
    %v1620 = vunpack.c.l.b16 %v282
    %v1621 = vunpack.c.h.b16 %v282
    %v1622 = vunpack.c.l.b16 %v283
    %v1623 = vunpack.c.h.b16 %v283
    %v1624 = vunpack.c.l.b16 %v284
    %v1625 = vunpack.c.h.b16 %v284
    %v1626 = vunpack.c.l.b16 %v285
    %v1627 = vunpack.c.h.b16 %v285
    %v1628 = vunpack.c.l.b16 %v286
    %v1629 = vunpack.c.h.b16 %v286
    %v1630 = vunpack.c.l.b16 %v287
    %v1631 = vunpack.c.h.b16 %v287
    %v1632 = vunpack.c.l.b16 %v288
    %v1633 = vunpack.c.h.b16 %v288
    %v1634 = vunpack.c.l.b16 %v289
    %v1635 = vunpack.c.h.b16 %v289
    %v1636 = vunpack.c.l.b16 %v290
    %v1637 = vunpack.c.h.b16 %v290
    %v1638 = vunpack.c.l.b16 %v291
    %v1639 = vunpack.c.h.b16 %v291
    %v1640 = vunpack.c.l.b16 %v292
    %v1641 = vunpack.c.h.b16 %v292
    %v1642 = vunpack.c.l.b16 %v293
    %v1643 = vunpack.c.h.b16 %v293
    %v1644 = vunpack.c.l.b16 %v294
    %v1645 = vunpack.c.h.b16 %v294
    %v1646 = vunpack.c.l.b16 %v295
    %v1647 = vunpack.c.h.b16 %v295
    %v1648 = vunpack.c.l.b16 %v296
    %v1649 = vunpack.c.h.b16 %v296
    %v1650 = vunpack.c.l.b16 %v297
    %v1651 = vunpack.c.h.b16 %v297
    %v1652 = vunpack.c.l.b16 %v298
    %v1653 = vunpack.c.h.b16 %v298
    %v1654 = vunpack.c.l.b16 %v299
    %v1655 = vunpack.c.h.b16 %v299
    %v1656 = vunpack.c.l.b16 %v300
    %v1657 = vunpack.c.h.b16 %v300
    %v1658 = vunpack.c.l.b16 %v301
    %v1659 = vunpack.c.h.b16 %v301
    %v1660 = vunpack.c.l.b16 %v302
    %v1661 = vunpack.c.h.b16 %v302
    %v1662 = vunpack.c.l.b16 %v303
    %v1663 = vunpack.c.h.b16 %v303
    %v1664 = vunpack.c.l.b16 %v304
    %v1665 = vunpack.c.h.b16 %v304
    %v1666 = vunpack.c.l.b16 %v305
    %v1667 = vunpack.c.h.b16 %v305
    %v1668 = vunpack.c.l.b16 %v306
    %v1669 = vunpack.c.h.b16 %v306
    %v1670 = vunpack.c.l.b16 %v307
    %v1671 = vunpack.c.h.b16 %v307
    %v1672 = vunpack.c.l.b16 %v308
    %v1673 = vunpack.c.h.b16 %v308
    %v1674 = vunpack.c.l.b16 %v309
    %v1675 = vunpack.c.h.b16 %v309
    %v1676 = vunpack.c.l.b16 %v310
    %v1677 = vunpack.c.h.b16 %v310
    %v1678 = vunpack.c.l.b16 %v311
    %v1679 = vunpack.c.h.b16 %v311
    %v1680 = vunpack.c.l.b16 %v312
    %v1681 = vunpack.c.h.b16 %v312
    %v1682 = vunpack.c.l.b16 %v313
    %v1683 = vunpack.c.h.b16 %v313
    %v1684 = vunpack.c.l.b16 %v314
    %v1685 = vunpack.c.h.b16 %v314
    %v1686 = vunpack.c.l.b16 %v315
    %v1687 = vunpack.c.h.b16 %v315
    %v1688 = vunpack.c.l.b16 %v316
    %v1689 = vunpack.c.h.b16 %v316
    %v1690 = vunpack.c.l.b16 %v317
    %v1691 = vunpack.c.h.b16 %v317
    %v1692 = vunpack.c.l.b16 %v318
    %v1693 = vunpack.c.h.b16 %v318
    %v1694 = vunpack.c.l.b16 %v319
    %v1695 = vunpack.c.h.b16 %v319
    %v1696 = vunpack.c.l.b16 %v320
    %v1697 = vunpack.c.h.b16 %v320
    %v1698 = vunpack.c.l.b16 %v321
    %v1699 = vunpack.c.h.b16 %v321
    %v1700 = vunpack.c.l.b16 %v322
    %v1701 = vunpack.c.h.b16 %v322
    %v1702 = vunpack.c.l.b16 %v323
    %v1703 = vunpack.c.h.b16 %v323
    %v1704 = vunpack.c.l.b16 %v324
    %v1705 = vunpack.c.h.b16 %v324
    %v1706 = vunpack.c.l.b16 %v325
    %v1707 = vunpack.c.h.b16 %v325
    %v1708 = vunpack.c.l.b16 %v326
    %v1709 = vunpack.c.h.b16 %v326
    %v1710 = vunpack.c.l.b16 %v327
    %v1711 = vunpack.c.h.b16 %v327
    %v1712 = vunpack.c.l.b16 %v328
    %v1713 = vunpack.c.h.b16 %v328
    %v1714 = vunpack.c.l.b16 %v329
    %v1715 = vunpack.c.h.b16 %v329
    %v1716 = vunpack.c.l.b16 %v330
    %v1717 = vunpack.c.h.b16 %v330
    %v1718 = vunpack.c.l.b16 %v331
    %v1719 = vunpack.c.h.b16 %v331
    %v1720 = vunpack.c.l.b16 %v332
    %v1721 = vunpack.c.h.b16 %v332
    %v1722 = vunpack.c.l.b16 %v333
    %v1723 = vunpack.c.h.b16 %v333
    %v1724 = vunpack.c.l.b16 %v334
    %v1725 = vunpack.c.h.b16 %v334
    %v1726 = vunpack.c.l.b16 %v335
    %v1727 = vunpack.c.h.b16 %v335
    %v1728 = vunpack.c.l.b16 %v336
    %v1729 = vunpack.c.h.b16 %v336
    %v1730 = vunpack.c.l.b16 %v337
    %v1731 = vunpack.c.h.b16 %v337
    %v1732 = vunpack.c.l.b16 %v338
    %v1733 = vunpack.c.h.b16 %v338
    %v1734 = vunpack.c.l.b16 %v339
    %v1735 = vunpack.c.h.b16 %v339
    %v1736 = vunpack.c.l.b16 %v340
    %v1737 = vunpack.c.h.b16 %v340
    %v1738 = vunpack.c.l.b16 %v341
    %v1739 = vunpack.c.h.b16 %v341
    %v1740 = vunpack.c.l.b16 %v342
    %v1741 = vunpack.c.h.b16 %v342
    %v1742 = vunpack.c.l.b16 %v343
    %v1743 = vunpack.c.h.b16 %v343
    %v1744 = vunpack.c.l.b16 %v344
    %v1745 = vunpack.c.h.b16 %v344
    %v1746 = vunpack.c.l.b16 %v345
    %v1747 = vunpack.c.h.b16 %v345
    %v1748 = vunpack.c.l.b16 %v346
    %v1749 = vunpack.c.h.b16 %v346
    %v1750 = vunpack.c.l.b16 %v347
    %v1751 = vunpack.c.h.b16 %v347
    %v1752 = vunpack.c.l.b16 %v348
    %v1753 = vunpack.c.h.b16 %v348
    %v1754 = vunpack.c.l.b16 %v349
    %v1755 = vunpack.c.h.b16 %v349
    %v1756 = vunpack.c.l.b16 %v350
    %v1757 = vunpack.c.h.b16 %v350
    %v1758 = vunpack.c.l.b16 %v351
    %v1759 = vunpack.c.h.b16 %v351
    %v1760 = vunpack.c.l.b16 %v352
    %v1761 = vunpack.c.h.b16 %v352
    %v1762 = vunpack.c.l.b16 %v353
    %v1763 = vunpack.c.h.b16 %v353
    %v1764 = vunpack.c.l.b16 %v354
    %v1765 = vunpack.c.h.b16 %v354
    %v1766 = vunpack.c.l.b16 %v355
    %v1767 = vunpack.c.h.b16 %v355
    %v1768 = vunpack.c.l.b16 %v356
    %v1769 = vunpack.c.h.b16 %v356
    %v1770 = vunpack.c.l.b16 %v357
    %v1771 = vunpack.c.h.b16 %v357
    %v1772 = vunpack.c.l.b16 %v358
    %v1773 = vunpack.c.h.b16 %v358
    %v1774 = vunpack.c.l.b16 %v359
    %v1775 = vunpack.c.h.b16 %v359
    %v1776 = vunpack.c.l.b16 %v360
    %v1777 = vunpack.c.h.b16 %v360
    %v1778 = vunpack.c.l.b16 %v361
    %v1779 = vunpack.c.h.b16 %v361
    %v1780 = vunpack.c.l.b16 %v362
    %v1781 = vunpack.c.h.b16 %v362
    %v1782 = vunpack.c.l.b16 %v363
    %v1783 = vunpack.c.h.b16 %v363
    %v1784 = vunpack.c.l.b16 %v364
    %v1785 = vunpack.c.h.b16 %v364
    %v1786 = vunpack.c.l.b16 %v365
    %v1787 = vunpack.c.h.b16 %v365
    %v1788 = vunpack.c.l.b16 %v366
    %v1789 = vunpack.c.h.b16 %v366
    %v1790 = vunpack.c.l.b16 %v367
    %v1791 = vunpack.c.h.b16 %v367
    %v1792 = vunpack.c.l.b16 %v368
    %v1793 = vunpack.c.h.b16 %v368
    %v1794 = vunpack.c.l.b16 %v369
    %v1795 = vunpack.c.h.b16 %v369
    %v1796 = vunpack.c.l.b16 %v370
    %v1797 = vunpack.c.h.b16 %v370
    %v1798 = vunpack.c.l.b16 %v371
    %v1799 = vunpack.c.h.b16 %v371
    %v1800 = vunpack.c.l.b16 %v372
    %v1801 = vunpack.c.h.b16 %v372
    %v1802 = vunpack.c.l.b16 %v373
    %v1803 = vunpack.c.h.b16 %v373
    %v1804 = vunpack.c.l.b16 %v374
    %v1805 = vunpack.c.h.b16 %v374
    %v1806 = vunpack.c.l.b16 %v375
    %v1807 = vunpack.c.h.b16 %v375
    %v1808 = vunpack.c.l.b16 %v376
    %v1809 = vunpack.c.h.b16 %v376
    %v1810 = vunpack.c.l.b16 %v377
    %v1811 = vunpack.c.h.b16 %v377
    %v1812 = vunpack.c.l.b16 %v378
    %v1813 = vunpack.c.h.b16 %v378
    %v1814 = vunpack.c.l.b16 %v379
    %v1815 = vunpack.c.h.b16 %v379
    %v1816 = vunpack.c.l.b16 %v380
    %v1817 = vunpack.c.h.b16 %v380
    %v1818 = vunpack.c.l.b16 %v381
    %v1819 = vunpack.c.h.b16 %v381
    %v1820 = vunpack.c.l.b16 %v382
    %v1821 = vunpack.c.h.b16 %v382
    %v1822 = vunpack.c.l.b16 %v383
    %v1823 = vunpack.c.h.b16 %v383
    %v1824 = vunpack.c.l.b16 %v384
    %v1825 = vunpack.c.h.b16 %v384
    %v1826 = vunpack.c.l.b16 %v385
    %v1827 = vunpack.c.h.b16 %v385
    %v1828 = vunpack.c.l.b16 %v386
    %v1829 = vunpack.c.h.b16 %v386
    %v1830 = vunpack.c.l.b16 %v387
    %v1831 = vunpack.c.h.b16 %v387
    %v1832 = vunpack.c.l.b16 %v388
    %v1833 = vunpack.c.h.b16 %v388
    %v1834 = vunpack.c.l.b16 %v389
    %v1835 = vunpack.c.h.b16 %v389
    %v1836 = vunpack.c.l.b16 %v390
    %v1837 = vunpack.c.h.b16 %v390
    %v1838 = vunpack.c.l.b16 %v391
    %v1839 = vunpack.c.h.b16 %v391
    %v1840 = vunpack.c.l.b16 %v392
    %v1841 = vunpack.c.h.b16 %v392
    %v1842 = vunpack.c.l.b16 %v393
    %v1843 = vunpack.c.h.b16 %v393
    %v1844 = vunpack.c.l.b16 %v394
    %v1845 = vunpack.c.h.b16 %v394
    %v1846 = vunpack.c.l.b16 %v395
    %v1847 = vunpack.c.h.b16 %v395
    %v1848 = vunpack.c.l.b16 %v396
    %v1849 = vunpack.c.h.b16 %v396
    %v1850 = vunpack.c.l.b16 %v397
    %v1851 = vunpack.c.h.b16 %v397
    %v1852 = vunpack.c.l.b16 %v398
    %v1853 = vunpack.c.h.b16 %v398
    %v1854 = vunpack.c.l.b16 %v399
    %v1855 = vunpack.c.h.b16 %v399
    %v1856 = vunpack.c.l.b16 %v400
    %v1857 = vunpack.c.h.b16 %v400
    %v1858 = vunpack.c.l.b16 %v401
    %v1859 = vunpack.c.h.b16 %v401
    %v1860 = vunpack.c.l.b16 %v402
    %v1861 = vunpack.c.h.b16 %v402
    %v1862 = vunpack.c.l.b16 %v403
    %v1863 = vunpack.c.h.b16 %v403
    %v1864 = vunpack.c.l.b16 %v404
    %v1865 = vunpack.c.h.b16 %v404
    %v1866 = vunpack.c.l.b16 %v405
    %v1867 = vunpack.c.h.b16 %v405
    %v1868 = vunpack.c.l.b16 %v406
    %v1869 = vunpack.c.h.b16 %v406
    %v1870 = vunpack.c.l.b16 %v407
    %v1871 = vunpack.c.h.b16 %v407
    %v1872 = vunpack.c.l.b16 %v408
    %v1873 = vunpack.c.h.b16 %v408
    %v1874 = vunpack.c.l.b16 %v409
    %v1875 = vunpack.c.h.b16 %v409
    %v1876 = vunpack.c.l.b16 %v410
    %v1877 = vunpack.c.h.b16 %v410
    %v1878 = vunpack.c.l.b16 %v411
    %v1879 = vunpack.c.h.b16 %v411
    %v1880 = vunpack.c.l.b16 %v412
    %v1881 = vunpack.c.h.b16 %v412
    %v1882 = vunpack.c.l.b16 %v413
    %v1883 = vunpack.c.h.b16 %v413
    %v1884 = vunpack.c.l.b16 %v414
    %v1885 = vunpack.c.h.b16 %v414
    %v1886 = vunpack.c.l.b16 %v415
    %v1887 = vunpack.c.h.b16 %v415
    %v1888 = vunpack.c.l.b16 %v416
    %v1889 = vunpack.c.h.b16 %v416
    %v1890 = vunpack.c.l.b16 %v417
    %v1891 = vunpack.c.h.b16 %v417
    %v1892 = vunpack.c.l.b16 %v418
    %v1893 = vunpack.c.h.b16 %v418
    %v1894 = vunpack.c.l.b16 %v419
    %v1895 = vunpack.c.h.b16 %v419
    %v1896 = vunpack.c.l.b16 %v420
    %v1897 = vunpack.c.h.b16 %v420
    %v1898 = vunpack.c.l.b16 %v421
    %v1899 = vunpack.c.h.b16 %v421
    %v1900 = vunpack.c.l.b16 %v422
    %v1901 = vunpack.c.h.b16 %v422
    %v1902 = vunpack.c.l.b16 %v423
    %v1903 = vunpack.c.h.b16 %v423
    %v1904 = vunpack.c.l.b16 %v424
    %v1905 = vunpack.c.h.b16 %v424
    %v1906 = vunpack.c.l.b16 %v425
    %v1907 = vunpack.c.h.b16 %v425
    %v1908 = vunpack.c.l.b16 %v426
    %v1909 = vunpack.c.h.b16 %v426
    %v1910 = vunpack.c.l.b16 %v427
    %v1911 = vunpack.c.h.b16 %v427
    %v1912 = vunpack.c.l.b16 %v428
    %v1913 = vunpack.c.h.b16 %v428
    %v1914 = vunpack.c.l.b16 %v429
    %v1915 = vunpack.c.h.b16 %v429
    %v1916 = vunpack.c.l.b16 %v430
    %v1917 = vunpack.c.h.b16 %v430
    %v1918 = vunpack.c.l.b16 %v431
    %v1919 = vunpack.c.h.b16 %v431
    %v1920 = vunpack.c.l.b16 %v432
    %v1921 = vunpack.c.h.b16 %v432
    %v1922 = vunpack.c.l.b16 %v433
    %v1923 = vunpack.c.h.b16 %v433
    %v1924 = vunpack.c.l.b16 %v434
    %v1925 = vunpack.c.h.b16 %v434
    %v1926 = vunpack.c.l.b16 %v435
    %v1927 = vunpack.c.h.b16 %v435
    %v1928 = vunpack.c.l.b16 %v436
    %v1929 = vunpack.c.h.b16 %v436
    %v1930 = vunpack.c.l.b16 %v437
    %v1931 = vunpack.c.h.b16 %v437
    %v1932 = vunpack.c.l.b16 %v438
    %v1933 = vunpack.c.h.b16 %v438
    %v1934 = vunpack.c.l.b16 %v439
    %v1935 = vunpack.c.h.b16 %v439
    %v1936 = vunpack.c.l.b16 %v440
    %v1937 = vunpack.c.h.b16 %v440
    %v1938 = vunpack.c.l.b16 %v441
    %v1939 = vunpack.c.h.b16 %v441
    %v1940 = vunpack.c.l.b16 %v442
    %v1941 = vunpack.c.h.b16 %v442
    %v1942 = vunpack.c.l.b16 %v443
    %v1943 = vunpack.c.h.b16 %v443
    %v1944 = vunpack.c.l.b16 %v444
    %v1945 = vunpack.c.h.b16 %v444
    %v1946 = vunpack.c.l.b16 %v445
    %v1947 = vunpack.c.h.b16 %v445
    %v1948 = vunpack.c.l.b16 %v446
    %v1949 = vunpack.c.h.b16 %v446
    %v1950 = vunpack.c.l.b16 %v447
    %v1951 = vunpack.c.h.b16 %v447
    %v1952 = vunpack.c.l.b16 %v448
    %v1953 = vunpack.c.h.b16 %v448
    %v1954 = vunpack.c.l.b16 %v449
    %v1955 = vunpack.c.h.b16 %v449
    %v1956 = vunpack.c.l.b16 %v450
    %v1957 = vunpack.c.h.b16 %v450
    %v1958 = vunpack.c.l.b16 %v451
    %v1959 = vunpack.c.h.b16 %v451
    %v1960 = vunpack.c.l.b16 %v452
    %v1961 = vunpack.c.h.b16 %v452
    %v1962 = vunpack.c.l.b16 %v453
    %v1963 = vunpack.c.h.b16 %v453
    %v1964 = vunpack.c.l.b16 %v454
    %v1965 = vunpack.c.h.b16 %v454
    %v1966 = vunpack.c.l.b16 %v455
    %v1967 = vunpack.c.h.b16 %v455
    %v1968 = vunpack.c.l.b16 %v456
    %v1969 = vunpack.c.h.b16 %v456
    %v1970 = vunpack.c.l.b16 %v457
    %v1971 = vunpack.c.h.b16 %v457
    %v1972 = vunpack.c.l.b16 %v458
    %v1973 = vunpack.c.h.b16 %v458
    %v1974 = vunpack.c.l.b16 %v459
    %v1975 = vunpack.c.h.b16 %v459
    %v1976 = vunpack.c.l.b16 %v460
    %v1977 = vunpack.c.h.b16 %v460
    %v1978 = vunpack.c.l.b16 %v461
    %v1979 = vunpack.c.h.b16 %v461
    %v1980 = vunpack.c.l.b16 %v462
    %v1981 = vunpack.c.h.b16 %v462
    %v1982 = vunpack.c.l.b16 %v463
    %v1983 = vunpack.c.h.b16 %v463
    %v1984 = vunpack.c.l.b16 %v464
    %v1985 = vunpack.c.h.b16 %v464
    %v1986 = vunpack.c.l.b16 %v465
    %v1987 = vunpack.c.h.b16 %v465
    %v1988 = vunpack.c.l.b16 %v466
    %v1989 = vunpack.c.h.b16 %v466
    %v1990 = vunpack.c.l.b16 %v467
    %v1991 = vunpack.c.h.b16 %v467
    %v1992 = vunpack.c.l.b16 %v468
    %v1993 = vunpack.c.h.b16 %v468
    %v1994 = vunpack.c.l.b16 %v469
    %v1995 = vunpack.c.h.b16 %v469
    %v1996 = vunpack.c.l.b16 %v470
    %v1997 = vunpack.c.h.b16 %v470
    %v1998 = vunpack.c.l.b16 %v471
    %v1999 = vunpack.c.h.b16 %v471
    %v2000 = vunpack.c.l.b16 %v472
    %v2001 = vunpack.c.h.b16 %v472
    %v2002 = vunpack.c.l.b16 %v473
    %v2003 = vunpack.c.h.b16 %v473
    %v2004 = vunpack.c.l.b16 %v474
    %v2005 = vunpack.c.h.b16 %v474
    %v2006 = vunpack.c.l.b16 %v475
    %v2007 = vunpack.c.h.b16 %v475
    %v2008 = vunpack.c.l.b16 %v476
    %v2009 = vunpack.c.h.b16 %v476
    %v2010 = vunpack.c.l.b16 %v477
    %v2011 = vunpack.c.h.b16 %v477
    %v2012 = vunpack.c.l.b16 %v478
    %v2013 = vunpack.c.h.b16 %v478
    %v2014 = vunpack.c.l.b16 %v479
    %v2015 = vunpack.c.h.b16 %v479
    %v2016 = vunpack.c.l.b16 %v480
    %v2017 = vunpack.c.h.b16 %v480
    %v2018 = vunpack.c.l.b16 %v481
    %v2019 = vunpack.c.h.b16 %v481
    %v2020 = vunpack.c.l.b16 %v482
    %v2021 = vunpack.c.h.b16 %v482
    %v2022 = vunpack.c.l.b16 %v483
    %v2023 = vunpack.c.h.b16 %v483
    %v2024 = vunpack.c.l.b16 %v484
    %v2025 = vunpack.c.h.b16 %v484
    %v2026 = vunpack.c.l.b16 %v485
    %v2027 = vunpack.c.h.b16 %v485
    %v2028 = vunpack.c.l.b16 %v486
    %v2029 = vunpack.c.h.b16 %v486
    %v2030 = vunpack.c.l.b16 %v487
    %v2031 = vunpack.c.h.b16 %v487
    %v2032 = vunpack.c.l.b16 %v488
    %v2033 = vunpack.c.h.b16 %v488
    %v2034 = vunpack.c.l.b16 %v489
    %v2035 = vunpack.c.h.b16 %v489
    %v2036 = vunpack.c.l.b16 %v490
    %v2037 = vunpack.c.h.b16 %v490
    %v2038 = vunpack.c.l.b16 %v491
    %v2039 = vunpack.c.h.b16 %v491
    %v2040 = vunpack.c.l.b16 %v492
    %v2041 = vunpack.c.h.b16 %v492
    %v2042 = vunpack.c.l.b16 %v493
    %v2043 = vunpack.c.h.b16 %v493
    %v2044 = vunpack.c.l.b16 %v494
    %v2045 = vunpack.c.h.b16 %v494
    %v2046 = vunpack.c.l.b16 %v495
    %v2047 = vunpack.c.h.b16 %v495
    %v2048 = vunpack.c.l.b16 %v496
    %v2049 = vunpack.c.h.b16 %v496
    %v2050 = vunpack.c.l.b16 %v497
    %v2051 = vunpack.c.h.b16 %v497
    %v2052 = vunpack.c.l.b16 %v498
    %v2053 = vunpack.c.h.b16 %v498
    %v2054 = vunpack.c.l.b16 %v499
    %v2055 = vunpack.c.h.b16 %v499
    %v2056 = vunpack.c.l.b16 %v500
    %v2057 = vunpack.c.h.b16 %v500
    %v2058 = vunpack.c.l.b16 %v501
    %v2059 = vunpack.c.h.b16 %v501
    %v2060 = vunpack.c.l.b16 %v502
    %v2061 = vunpack.c.h.b16 %v502
    %v2062 = vunpack.c.l.b16 %v503
    %v2063 = vunpack.c.h.b16 %v503
    %v2064 = vunpack.c.l.b16 %v504
    %v2065 = vunpack.c.h.b16 %v504
    %v2066 = vunpack.c.l.b16 %v505
    %v2067 = vunpack.c.h.b16 %v505
    %v2068 = vunpack.c.l.b16 %v506
    %v2069 = vunpack.c.h.b16 %v506
    %v2070 = vunpack.c.l.b16 %v507
    %v2071 = vunpack.c.h.b16 %v507
    %v2072 = vunpack.c.l.b16 %v508
    %v2073 = vunpack.c.h.b16 %v508
    %v2074 = vunpack.c.l.b16 %v509
    %v2075 = vunpack.c.h.b16 %v509
    %v2076 = vunpack.c.l.b16 %v510
    %v2077 = vunpack.c.h.b16 %v510
    %v2078 = vunpack.c.l.b16 %v511
    %v2079 = vunpack.c.h.b16 %v511
    %v2080 = vunpack.c.l.b16 %v512
    %v2081 = vunpack.c.h.b16 %v512
    %v2082 = vunpack.c.l.b16 %v513
    %v2083 = vunpack.c.h.b16 %v513
    %v2084 = vunpack.c.l.b16 %v514
    %v2085 = vunpack.c.h.b16 %v514
    %v2086 = vunpack.c.l.b16 %v515
    %v2087 = vunpack.c.h.b16 %v515
    %v2088 = vunpack.c.l.b16 %v516
    %v2089 = vunpack.c.h.b16 %v516
    %v2090 = vunpack.c.l.b16 %v517
    %v2091 = vunpack.c.h.b16 %v517
    %v2092 = vunpack.c.l.b16 %v518
    %v2093 = vunpack.c.h.b16 %v518
    %v2094 = vunpack.c.l.b16 %v519
    %v2095 = vunpack.c.h.b16 %v519
    %v2096 = vunpack.c.l.b16 %v520
    %v2097 = vunpack.c.h.b16 %v520
    %v2098 = vunpack.c.l.b16 %v521
    %v2099 = vunpack.c.h.b16 %v521
    %v2100 = vunpack.c.l.b16 %v522
    %v2101 = vunpack.c.h.b16 %v522
    %v2102 = vunpack.c.l.b16 %v523
    %v2103 = vunpack.c.h.b16 %v523
    %v2104 = vunpack.c.l.b16 %v524
    %v2105 = vunpack.c.h.b16 %v524
    %v2106 = vunpack.c.l.b16 %v525
    %v2107 = vunpack.c.h.b16 %v525
    %v2108 = vunpack.c.l.b16 %v526
    %v2109 = vunpack.c.h.b16 %v526
    %v2110 = vunpack.c.l.b16 %v527
    %v2111 = vunpack.c.h.b16 %v527
    %v2112 = vunpack.c.l.b16 %v528
    %v2113 = vunpack.c.h.b16 %v528
    %v2114 = vunpack.c.l.b16 %v529
    %v2115 = vunpack.c.h.b16 %v529
    %v2116 = vunpack.c.l.b16 %v530
    %v2117 = vunpack.c.h.b16 %v530
    %v2118 = vunpack.c.l.b16 %v531
    %v2119 = vunpack.c.h.b16 %v531
    %v2120 = vunpack.c.l.b16 %v532
    %v2121 = vunpack.c.h.b16 %v532
    %v2122 = vunpack.c.l.b16 %v533
    %v2123 = vunpack.c.h.b16 %v533
    %v2124 = vunpack.c.l.b16 %v534
    %v2125 = vunpack.c.h.b16 %v534
    %v2126 = vunpack.c.l.b16 %v535
    %v2127 = vunpack.c.h.b16 %v535
    %v2128 = vunpack.c.l.b16 %v536
    %v2129 = vunpack.c.h.b16 %v536
    %v2130 = vunpack.c.l.b16 %v537
    %v2131 = vunpack.c.h.b16 %v537
    %v2132 = vpack.c.b16 %v1116, %v1108
    %v2133 = vpack.c.b16 %v1117, %v1109
    %v2134 = vpack.c.b16 %v1118, %v1110
    %v2135 = vpack.c.b16 %v1119, %v1111
    %v2136 = vpack.c.b16 %v1120, %v1112
    %v2137 = vpack.c.b16 %v1121, %v1113
    %v2138 = vpack.c.b16 %v1122, %v1114
    %v2139 = vpack.c.b16 %v1123, %v1115
    %v2140 = vpack.c.b16 %v1132, %v1124
    %v2141 = vpack.c.b16 %v1133, %v1125
    %v2142 = vpack.c.b16 %v1134, %v1126
    %v2143 = vpack.c.b16 %v1135, %v1127
    %v2144 = vpack.c.b16 %v1136, %v1128
    %v2145 = vpack.c.b16 %v1137, %v1129
    %v2146 = vpack.c.b16 %v1138, %v1130
    %v2147 = vpack.c.b16 %v1139, %v1131
    %v2148 = vpack.c.b16 %v1148, %v1140
    %v2149 = vpack.c.b16 %v1149, %v1141
    %v2150 = vpack.c.b16 %v1150, %v1142
    %v2151 = vpack.c.b16 %v1151, %v1143
    %v2152 = vpack.c.b16 %v1152, %v1144
    %v2153 = vpack.c.b16 %v1153, %v1145
    %v2154 = vpack.c.b16 %v1154, %v1146
    %v2155 = vpack.c.b16 %v1155, %v1147
    %v2156 = vpack.c.b16 %v1164, %v1156
    %v2157 = vpack.c.b16 %v1165, %v1157
    %v2158 = vpack.c.b16 %v1166, %v1158
    %v2159 = vpack.c.b16 %v1167, %v1159
    %v2160 = vpack.c.b16 %v1168, %v1160
    %v2161 = vpack.c.b16 %v1169, %v1161
    %v2162 = vpack.c.b16 %v1170, %v1162
    %v2163 = vpack.c.b16 %v1171, %v1163
    %v2164 = vpack.c.b16 %v1180, %v1172
    %v2165 = vpack.c.b16 %v1181, %v1173
    %v2166 = vpack.c.b16 %v1182, %v1174
    %v2167 = vpack.c.b16 %v1183, %v1175
    %v2168 = vpack.c.b16 %v1184, %v1176
    %v2169 = vpack.c.b16 %v1185, %v1177
    %v2170 = vpack.c.b16 %v1186, %v1178
    %v2171 = vpack.c.b16 %v1187, %v1179
    %v2172 = vpack.c.b16 %v1196, %v1188
    %v2173 = vpack.c.b16 %v1197, %v1189
    %v2174 = vpack.c.b16 %v1198, %v1190
    %v2175 = vpack.c.b16 %v1199, %v1191
    %v2176 = vpack.c.b16 %v1200, %v1192
    %v2177 = vpack.c.b16 %v1201, %v1193
    %v2178 = vpack.c.b16 %v1202, %v1194
    %v2179 = vpack.c.b16 %v1203, %v1195
    %v2180 = vpack.c.b16 %v1212, %v1204
    %v2181 = vpack.c.b16 %v1213, %v1205
    %v2182 = vpack.c.b16 %v1214, %v1206
    %v2183 = vpack.c.b16 %v1215, %v1207
    %v2184 = vpack.c.b16 %v1216, %v1208
    %v2185 = vpack.c.b16 %v1217, %v1209
    %v2186 = vpack.c.b16 %v1218, %v1210
    %v2187 = vpack.c.b16 %v1219, %v1211
    %v2188 = vpack.c.b16 %v1228, %v1220
    %v2189 = vpack.c.b16 %v1229, %v1221
    %v2190 = vpack.c.b16 %v1230, %v1222
    %v2191 = vpack.c.b16 %v1231, %v1223
    %v2192 = vpack.c.b16 %v1232, %v1224
    %v2193 = vpack.c.b16 %v1233, %v1225
    %v2194 = vpack.c.b16 %v1234, %v1226
    %v2195 = vpack.c.b16 %v1235, %v1227
    %v2196 = vpack.c.b16 %v1244, %v1236
    %v2197 = vpack.c.b16 %v1245, %v1237
    %v2198 = vpack.c.b16 %v1246, %v1238
    %v2199 = vpack.c.b16 %v1247, %v1239
    %v2200 = vpack.c.b16 %v1248, %v1240
    %v2201 = vpack.c.b16 %v1249, %v1241
    %v2202 = vpack.c.b16 %v1250, %v1242
    %v2203 = vpack.c.b16 %v1251, %v1243
    %v2204 = vpack.c.b16 %v1260, %v1252
    %v2205 = vpack.c.b16 %v1261, %v1253
    %v2206 = vpack.c.b16 %v1262, %v1254
    %v2207 = vpack.c.b16 %v1263, %v1255
    %v2208 = vpack.c.b16 %v1264, %v1256
    %v2209 = vpack.c.b16 %v1265, %v1257
    %v2210 = vpack.c.b16 %v1266, %v1258
    %v2211 = vpack.c.b16 %v1267, %v1259
    %v2212 = vpack.c.b16 %v1276, %v1268
    %v2213 = vpack.c.b16 %v1277, %v1269
    %v2214 = vpack.c.b16 %v1278, %v1270
    %v2215 = vpack.c.b16 %v1279, %v1271
    %v2216 = vpack.c.b16 %v1280, %v1272
    %v2217 = vpack.c.b16 %v1281, %v1273
    %v2218 = vpack.c.b16 %v1282, %v1274
    %v2219 = vpack.c.b16 %v1283, %v1275
    %v2220 = vpack.c.b16 %v1292, %v1284
    %v2221 = vpack.c.b16 %v1293, %v1285
    %v2222 = vpack.c.b16 %v1294, %v1286
    %v2223 = vpack.c.b16 %v1295, %v1287
    %v2224 = vpack.c.b16 %v1296, %v1288
    %v2225 = vpack.c.b16 %v1297, %v1289
    %v2226 = vpack.c.b16 %v1298, %v1290
    %v2227 = vpack.c.b16 %v1299, %v1291
    %v2228 = vpack.c.b16 %v1308, %v1300
    %v2229 = vpack.c.b16 %v1309, %v1301
    %v2230 = vpack.c.b16 %v1310, %v1302
    %v2231 = vpack.c.b16 %v1311, %v1303
    %v2232 = vpack.c.b16 %v1312, %v1304
    %v2233 = vpack.c.b16 %v1313, %v1305
    %v2234 = vpack.c.b16 %v1314, %v1306
    %v2235 = vpack.c.b16 %v1315, %v1307
    %v2236 = vpack.c.b16 %v1324, %v1316
    %v2237 = vpack.c.b16 %v1325, %v1317
    %v2238 = vpack.c.b16 %v1326, %v1318
    %v2239 = vpack.c.b16 %v1327, %v1319
    %v2240 = vpack.c.b16 %v1328, %v1320
    %v2241 = vpack.c.b16 %v1329, %v1321
    %v2242 = vpack.c.b16 %v1330, %v1322
    %v2243 = vpack.c.b16 %v1331, %v1323
    %v2244 = vpack.c.b16 %v1340, %v1332
    %v2245 = vpack.c.b16 %v1341, %v1333
    %v2246 = vpack.c.b16 %v1342, %v1334
    %v2247 = vpack.c.b16 %v1343, %v1335
    %v2248 = vpack.c.b16 %v1344, %v1336
    %v2249 = vpack.c.b16 %v1345, %v1337
    %v2250 = vpack.c.b16 %v1346, %v1338
    %v2251 = vpack.c.b16 %v1347, %v1339
    %v2252 = vpack.c.b16 %v1356, %v1348
    %v2253 = vpack.c.b16 %v1357, %v1349
    %v2254 = vpack.c.b16 %v1358, %v1350
    %v2255 = vpack.c.b16 %v1359, %v1351
    %v2256 = vpack.c.b16 %v1360, %v1352
    %v2257 = vpack.c.b16 %v1361, %v1353
    %v2258 = vpack.c.b16 %v1362, %v1354
    %v2259 = vpack.c.b16 %v1363, %v1355
    %v2260 = vpack.c.b16 %v1372, %v1364
    %v2261 = vpack.c.b16 %v1373, %v1365
    %v2262 = vpack.c.b16 %v1374, %v1366
    %v2263 = vpack.c.b16 %v1375, %v1367
    %v2264 = vpack.c.b16 %v1376, %v1368
    %v2265 = vpack.c.b16 %v1377, %v1369
    %v2266 = vpack.c.b16 %v1378, %v1370
    %v2267 = vpack.c.b16 %v1379, %v1371
    %v2268 = vpack.c.b16 %v1388, %v1380
    %v2269 = vpack.c.b16 %v1389, %v1381
    %v2270 = vpack.c.b16 %v1390, %v1382
    %v2271 = vpack.c.b16 %v1391, %v1383
    %v2272 = vpack.c.b16 %v1392, %v1384
    %v2273 = vpack.c.b16 %v1393, %v1385
    %v2274 = vpack.c.b16 %v1394, %v1386
    %v2275 = vpack.c.b16 %v1395, %v1387
    %v2276 = vpack.c.b16 %v1404, %v1396
    %v2277 = vpack.c.b16 %v1405, %v1397
    %v2278 = vpack.c.b16 %v1406, %v1398
    %v2279 = vpack.c.b16 %v1407, %v1399
    %v2280 = vpack.c.b16 %v1408, %v1400
    %v2281 = vpack.c.b16 %v1409, %v1401
    %v2282 = vpack.c.b16 %v1410, %v1402
    %v2283 = vpack.c.b16 %v1411, %v1403
    %v2284 = vpack.c.b16 %v1420, %v1412
    %v2285 = vpack.c.b16 %v1421, %v1413
    %v2286 = vpack.c.b16 %v1422, %v1414
    %v2287 = vpack.c.b16 %v1423, %v1415
    %v2288 = vpack.c.b16 %v1424, %v1416
    %v2289 = vpack.c.b16 %v1425, %v1417
    %v2290 = vpack.c.b16 %v1426, %v1418
    %v2291 = vpack.c.b16 %v1427, %v1419
    %v2292 = vpack.c.b16 %v1436, %v1428
    %v2293 = vpack.c.b16 %v1437, %v1429
    %v2294 = vpack.c.b16 %v1438, %v1430
    %v2295 = vpack.c.b16 %v1439, %v1431
    %v2296 = vpack.c.b16 %v1440, %v1432
    %v2297 = vpack.c.b16 %v1441, %v1433
    %v2298 = vpack.c.b16 %v1442, %v1434
    %v2299 = vpack.c.b16 %v1443, %v1435
    %v2300 = vpack.c.b16 %v1452, %v1444
    %v2301 = vpack.c.b16 %v1453, %v1445
    %v2302 = vpack.c.b16 %v1454, %v1446
    %v2303 = vpack.c.b16 %v1455, %v1447
    %v2304 = vpack.c.b16 %v1456, %v1448
    %v2305 = vpack.c.b16 %v1457, %v1449
    %v2306 = vpack.c.b16 %v1458, %v1450
    %v2307 = vpack.c.b16 %v1459, %v1451
    %v2308 = vpack.c.b16 %v1468, %v1460
    %v2309 = vpack.c.b16 %v1469, %v1461
    %v2310 = vpack.c.b16 %v1470, %v1462
    %v2311 = vpack.c.b16 %v1471, %v1463
    %v2312 = vpack.c.b16 %v1472, %v1464
    %v2313 = vpack.c.b16 %v1473, %v1465
    %v2314 = vpack.c.b16 %v1474, %v1466
    %v2315 = vpack.c.b16 %v1475, %v1467
    %v2316 = vpack.c.b16 %v1484, %v1476
    %v2317 = vpack.c.b16 %v1485, %v1477
    %v2318 = vpack.c.b16 %v1486, %v1478
    %v2319 = vpack.c.b16 %v1487, %v1479
    %v2320 = vpack.c.b16 %v1488, %v1480
    %v2321 = vpack.c.b16 %v1489, %v1481
    %v2322 = vpack.c.b16 %v1490, %v1482
    %v2323 = vpack.c.b16 %v1491, %v1483
    %v2324 = vpack.c.b16 %v1500, %v1492
    %v2325 = vpack.c.b16 %v1501, %v1493
    %v2326 = vpack.c.b16 %v1502, %v1494
    %v2327 = vpack.c.b16 %v1503, %v1495
    %v2328 = vpack.c.b16 %v1504, %v1496
    %v2329 = vpack.c.b16 %v1505, %v1497
    %v2330 = vpack.c.b16 %v1506, %v1498
    %v2331 = vpack.c.b16 %v1507, %v1499
    %v2332 = vpack.c.b16 %v1516, %v1508
    %v2333 = vpack.c.b16 %v1517, %v1509
    %v2334 = vpack.c.b16 %v1518, %v1510
    %v2335 = vpack.c.b16 %v1519, %v1511
    %v2336 = vpack.c.b16 %v1520, %v1512
    %v2337 = vpack.c.b16 %v1521, %v1513
    %v2338 = vpack.c.b16 %v1522, %v1514
    %v2339 = vpack.c.b16 %v1523, %v1515
    %v2340 = vpack.c.b16 %v1532, %v1524
    %v2341 = vpack.c.b16 %v1533, %v1525
    %v2342 = vpack.c.b16 %v1534, %v1526
    %v2343 = vpack.c.b16 %v1535, %v1527
    %v2344 = vpack.c.b16 %v1536, %v1528
    %v2345 = vpack.c.b16 %v1537, %v1529
    %v2346 = vpack.c.b16 %v1538, %v1530
    %v2347 = vpack.c.b16 %v1539, %v1531
    %v2348 = vpack.c.b16 %v1548, %v1540
    %v2349 = vpack.c.b16 %v1549, %v1541
    %v2350 = vpack.c.b16 %v1550, %v1542
    %v2351 = vpack.c.b16 %v1551, %v1543
    %v2352 = vpack.c.b16 %v1552, %v1544
    %v2353 = vpack.c.b16 %v1553, %v1545
    %v2354 = vpack.c.b16 %v1554, %v1546
    %v2355 = vpack.c.b16 %v1555, %v1547
    %v2356 = vpack.c.b16 %v1564, %v1556
    %v2357 = vpack.c.b16 %v1565, %v1557
    %v2358 = vpack.c.b16 %v1566, %v1558
    %v2359 = vpack.c.b16 %v1567, %v1559
    %v2360 = vpack.c.b16 %v1568, %v1560
    %v2361 = vpack.c.b16 %v1569, %v1561
    %v2362 = vpack.c.b16 %v1570, %v1562
    %v2363 = vpack.c.b16 %v1571, %v1563
    %v2364 = vpack.c.b16 %v1580, %v1572
    %v2365 = vpack.c.b16 %v1581, %v1573
    %v2366 = vpack.c.b16 %v1582, %v1574
    %v2367 = vpack.c.b16 %v1583, %v1575
    %v2368 = vpack.c.b16 %v1584, %v1576
    %v2369 = vpack.c.b16 %v1585, %v1577
    %v2370 = vpack.c.b16 %v1586, %v1578
    %v2371 = vpack.c.b16 %v1587, %v1579
    %v2372 = vpack.c.b16 %v1596, %v1588
    %v2373 = vpack.c.b16 %v1597, %v1589
    %v2374 = vpack.c.b16 %v1598, %v1590
    %v2375 = vpack.c.b16 %v1599, %v1591
    %v2376 = vpack.c.b16 %v1600, %v1592
    %v2377 = vpack.c.b16 %v1601, %v1593
    %v2378 = vpack.c.b16 %v1602, %v1594
    %v2379 = vpack.c.b16 %v1603, %v1595
    %v2380 = vpack.c.b16 %v1612, %v1604
    %v2381 = vpack.c.b16 %v1613, %v1605
    %v2382 = vpack.c.b16 %v1614, %v1606
    %v2383 = vpack.c.b16 %v1615, %v1607
    %v2384 = vpack.c.b16 %v1616, %v1608
    %v2385 = vpack.c.b16 %v1617, %v1609
    %v2386 = vpack.c.b16 %v1618, %v1610
    %v2387 = vpack.c.b16 %v1619, %v1611
    %v2388 = vpack.c.b16 %v1628, %v1620
    %v2389 = vpack.c.b16 %v1629, %v1621
    %v2390 = vpack.c.b16 %v1630, %v1622
    %v2391 = vpack.c.b16 %v1631, %v1623
    %v2392 = vpack.c.b16 %v1632, %v1624
    %v2393 = vpack.c.b16 %v1633, %v1625
    %v2394 = vpack.c.b16 %v1634, %v1626
    %v2395 = vpack.c.b16 %v1635, %v1627
    %v2396 = vpack.c.b16 %v1644, %v1636
    %v2397 = vpack.c.b16 %v1645, %v1637
    %v2398 = vpack.c.b16 %v1646, %v1638
    %v2399 = vpack.c.b16 %v1647, %v1639
    %v2400 = vpack.c.b16 %v1648, %v1640
    %v2401 = vpack.c.b16 %v1649, %v1641
    %v2402 = vpack.c.b16 %v1650, %v1642
    %v2403 = vpack.c.b16 %v1651, %v1643
    %v2404 = vpack.c.b16 %v1660, %v1652
    %v2405 = vpack.c.b16 %v1661, %v1653
    %v2406 = vpack.c.b16 %v1662, %v1654
    %v2407 = vpack.c.b16 %v1663, %v1655
    %v2408 = vpack.c.b16 %v1664, %v1656
    %v2409 = vpack.c.b16 %v1665, %v1657
    %v2410 = vpack.c.b16 %v1666, %v1658
    %v2411 = vpack.c.b16 %v1667, %v1659
    %v2412 = vpack.c.b16 %v1676, %v1668
    %v2413 = vpack.c.b16 %v1677, %v1669
    %v2414 = vpack.c.b16 %v1678, %v1670
    %v2415 = vpack.c.b16 %v1679, %v1671
    %v2416 = vpack.c.b16 %v1680, %v1672
    %v2417 = vpack.c.b16 %v1681, %v1673
    %v2418 = vpack.c.b16 %v1682, %v1674
    %v2419 = vpack.c.b16 %v1683, %v1675
    %v2420 = vpack.c.b16 %v1692, %v1684
    %v2421 = vpack.c.b16 %v1693, %v1685
    %v2422 = vpack.c.b16 %v1694, %v1686
    %v2423 = vpack.c.b16 %v1695, %v1687
    %v2424 = vpack.c.b16 %v1696, %v1688
    %v2425 = vpack.c.b16 %v1697, %v1689
    %v2426 = vpack.c.b16 %v1698, %v1690
    %v2427 = vpack.c.b16 %v1699, %v1691
    %v2428 = vpack.c.b16 %v1708, %v1700
    %v2429 = vpack.c.b16 %v1709, %v1701
    %v2430 = vpack.c.b16 %v1710, %v1702
    %v2431 = vpack.c.b16 %v1711, %v1703
    %v2432 = vpack.c.b16 %v1712, %v1704
    %v2433 = vpack.c.b16 %v1713, %v1705
    %v2434 = vpack.c.b16 %v1714, %v1706
    %v2435 = vpack.c.b16 %v1715, %v1707
    %v2436 = vpack.c.b16 %v1724, %v1716
    %v2437 = vpack.c.b16 %v1725, %v1717
    %v2438 = vpack.c.b16 %v1726, %v1718
    %v2439 = vpack.c.b16 %v1727, %v1719
    %v2440 = vpack.c.b16 %v1728, %v1720
    %v2441 = vpack.c.b16 %v1729, %v1721
    %v2442 = vpack.c.b16 %v1730, %v1722
    %v2443 = vpack.c.b16 %v1731, %v1723
    %v2444 = vpack.c.b16 %v1740, %v1732
    %v2445 = vpack.c.b16 %v1741, %v1733
    %v2446 = vpack.c.b16 %v1742, %v1734
    %v2447 = vpack.c.b16 %v1743, %v1735
    %v2448 = vpack.c.b16 %v1744, %v1736
    %v2449 = vpack.c.b16 %v1745, %v1737
    %v2450 = vpack.c.b16 %v1746, %v1738
    %v2451 = vpack.c.b16 %v1747, %v1739
    %v2452 = vpack.c.b16 %v1756, %v1748
    %v2453 = vpack.c.b16 %v1757, %v1749
    %v2454 = vpack.c.b16 %v1758, %v1750
    %v2455 = vpack.c.b16 %v1759, %v1751
    %v2456 = vpack.c.b16 %v1760, %v1752
    %v2457 = vpack.c.b16 %v1761, %v1753
    %v2458 = vpack.c.b16 %v1762, %v1754
    %v2459 = vpack.c.b16 %v1763, %v1755
    %v2460 = vpack.c.b16 %v1772, %v1764
    %v2461 = vpack.c.b16 %v1773, %v1765
    %v2462 = vpack.c.b16 %v1774, %v1766
    %v2463 = vpack.c.b16 %v1775, %v1767
    %v2464 = vpack.c.b16 %v1776, %v1768
    %v2465 = vpack.c.b16 %v1777, %v1769
    %v2466 = vpack.c.b16 %v1778, %v1770
    %v2467 = vpack.c.b16 %v1779, %v1771
    %v2468 = vpack.c.b16 %v1788, %v1780
    %v2469 = vpack.c.b16 %v1789, %v1781
    %v2470 = vpack.c.b16 %v1790, %v1782
    %v2471 = vpack.c.b16 %v1791, %v1783
    %v2472 = vpack.c.b16 %v1792, %v1784
    %v2473 = vpack.c.b16 %v1793, %v1785
    %v2474 = vpack.c.b16 %v1794, %v1786
    %v2475 = vpack.c.b16 %v1795, %v1787
    %v2476 = vpack.c.b16 %v1804, %v1796
    %v2477 = vpack.c.b16 %v1805, %v1797
    %v2478 = vpack.c.b16 %v1806, %v1798
    %v2479 = vpack.c.b16 %v1807, %v1799
    %v2480 = vpack.c.b16 %v1808, %v1800
    %v2481 = vpack.c.b16 %v1809, %v1801
    %v2482 = vpack.c.b16 %v1810, %v1802
    %v2483 = vpack.c.b16 %v1811, %v1803
    %v2484 = vpack.c.b16 %v1820, %v1812
    %v2485 = vpack.c.b16 %v1821, %v1813
    %v2486 = vpack.c.b16 %v1822, %v1814
    %v2487 = vpack.c.b16 %v1823, %v1815
    %v2488 = vpack.c.b16 %v1824, %v1816
    %v2489 = vpack.c.b16 %v1825, %v1817
    %v2490 = vpack.c.b16 %v1826, %v1818
    %v2491 = vpack.c.b16 %v1827, %v1819
    %v2492 = vpack.c.b16 %v1836, %v1828
    %v2493 = vpack.c.b16 %v1837, %v1829
    %v2494 = vpack.c.b16 %v1838, %v1830
    %v2495 = vpack.c.b16 %v1839, %v1831
    %v2496 = vpack.c.b16 %v1840, %v1832
    %v2497 = vpack.c.b16 %v1841, %v1833
    %v2498 = vpack.c.b16 %v1842, %v1834
    %v2499 = vpack.c.b16 %v1843, %v1835
    %v2500 = vpack.c.b16 %v1852, %v1844
    %v2501 = vpack.c.b16 %v1853, %v1845
    %v2502 = vpack.c.b16 %v1854, %v1846
    %v2503 = vpack.c.b16 %v1855, %v1847
    %v2504 = vpack.c.b16 %v1856, %v1848
    %v2505 = vpack.c.b16 %v1857, %v1849
    %v2506 = vpack.c.b16 %v1858, %v1850
    %v2507 = vpack.c.b16 %v1859, %v1851
    %v2508 = vpack.c.b16 %v1868, %v1860
    %v2509 = vpack.c.b16 %v1869, %v1861
    %v2510 = vpack.c.b16 %v1870, %v1862
    %v2511 = vpack.c.b16 %v1871, %v1863
    %v2512 = vpack.c.b16 %v1872, %v1864
    %v2513 = vpack.c.b16 %v1873, %v1865
    %v2514 = vpack.c.b16 %v1874, %v1866
    %v2515 = vpack.c.b16 %v1875, %v1867
    %v2516 = vpack.c.b16 %v1884, %v1876
    %v2517 = vpack.c.b16 %v1885, %v1877
    %v2518 = vpack.c.b16 %v1886, %v1878
    %v2519 = vpack.c.b16 %v1887, %v1879
    %v2520 = vpack.c.b16 %v1888, %v1880
    %v2521 = vpack.c.b16 %v1889, %v1881
    %v2522 = vpack.c.b16 %v1890, %v1882
    %v2523 = vpack.c.b16 %v1891, %v1883
    %v2524 = vpack.c.b16 %v1900, %v1892
    %v2525 = vpack.c.b16 %v1901, %v1893
    %v2526 = vpack.c.b16 %v1902, %v1894
    %v2527 = vpack.c.b16 %v1903, %v1895
    %v2528 = vpack.c.b16 %v1904, %v1896
    %v2529 = vpack.c.b16 %v1905, %v1897
    %v2530 = vpack.c.b16 %v1906, %v1898
    %v2531 = vpack.c.b16 %v1907, %v1899
    %v2532 = vpack.c.b16 %v1916, %v1908
    %v2533 = vpack.c.b16 %v1917, %v1909
    %v2534 = vpack.c.b16 %v1918, %v1910
    %v2535 = vpack.c.b16 %v1919, %v1911
    %v2536 = vpack.c.b16 %v1920, %v1912
    %v2537 = vpack.c.b16 %v1921, %v1913
    %v2538 = vpack.c.b16 %v1922, %v1914
    %v2539 = vpack.c.b16 %v1923, %v1915
    %v2540 = vpack.c.b16 %v1932, %v1924
    %v2541 = vpack.c.b16 %v1933, %v1925
    %v2542 = vpack.c.b16 %v1934, %v1926
    %v2543 = vpack.c.b16 %v1935, %v1927
    %v2544 = vpack.c.b16 %v1936, %v1928
    %v2545 = vpack.c.b16 %v1937, %v1929
    %v2546 = vpack.c.b16 %v1938, %v1930
    %v2547 = vpack.c.b16 %v1939, %v1931
    %v2548 = vpack.c.b16 %v1948, %v1940
    %v2549 = vpack.c.b16 %v1949, %v1941
    %v2550 = vpack.c.b16 %v1950, %v1942
    %v2551 = vpack.c.b16 %v1951, %v1943
    %v2552 = vpack.c.b16 %v1952, %v1944
    %v2553 = vpack.c.b16 %v1953, %v1945
    %v2554 = vpack.c.b16 %v1954, %v1946
    %v2555 = vpack.c.b16 %v1955, %v1947
    %v2556 = vpack.c.b16 %v1964, %v1956
    %v2557 = vpack.c.b16 %v1965, %v1957
    %v2558 = vpack.c.b16 %v1966, %v1958
    %v2559 = vpack.c.b16 %v1967, %v1959
    %v2560 = vpack.c.b16 %v1968, %v1960
    %v2561 = vpack.c.b16 %v1969, %v1961
    %v2562 = vpack.c.b16 %v1970, %v1962
    %v2563 = vpack.c.b16 %v1971, %v1963
    %v2564 = vpack.c.b16 %v1980, %v1972
    %v2565 = vpack.c.b16 %v1981, %v1973
    %v2566 = vpack.c.b16 %v1982, %v1974
    %v2567 = vpack.c.b16 %v1983, %v1975
    %v2568 = vpack.c.b16 %v1984, %v1976
    %v2569 = vpack.c.b16 %v1985, %v1977
    %v2570 = vpack.c.b16 %v1986, %v1978
    %v2571 = vpack.c.b16 %v1987, %v1979
    %v2572 = vpack.c.b16 %v1996, %v1988
    %v2573 = vpack.c.b16 %v1997, %v1989
    %v2574 = vpack.c.b16 %v1998, %v1990
    %v2575 = vpack.c.b16 %v1999, %v1991
    %v2576 = vpack.c.b16 %v2000, %v1992
    %v2577 = vpack.c.b16 %v2001, %v1993
    %v2578 = vpack.c.b16 %v2002, %v1994
    %v2579 = vpack.c.b16 %v2003, %v1995
    %v2580 = vpack.c.b16 %v2012, %v2004
    %v2581 = vpack.c.b16 %v2013, %v2005
    %v2582 = vpack.c.b16 %v2014, %v2006
    %v2583 = vpack.c.b16 %v2015, %v2007
    %v2584 = vpack.c.b16 %v2016, %v2008
    %v2585 = vpack.c.b16 %v2017, %v2009
    %v2586 = vpack.c.b16 %v2018, %v2010
    %v2587 = vpack.c.b16 %v2019, %v2011
    %v2588 = vpack.c.b16 %v2028, %v2020
    %v2589 = vpack.c.b16 %v2029, %v2021
    %v2590 = vpack.c.b16 %v2030, %v2022
    %v2591 = vpack.c.b16 %v2031, %v2023
    %v2592 = vpack.c.b16 %v2032, %v2024
    %v2593 = vpack.c.b16 %v2033, %v2025
    %v2594 = vpack.c.b16 %v2034, %v2026
    %v2595 = vpack.c.b16 %v2035, %v2027
    %v2596 = vpack.c.b16 %v2044, %v2036
    %v2597 = vpack.c.b16 %v2045, %v2037
    %v2598 = vpack.c.b16 %v2046, %v2038
    %v2599 = vpack.c.b16 %v2047, %v2039
    %v2600 = vpack.c.b16 %v2048, %v2040
    %v2601 = vpack.c.b16 %v2049, %v2041
    %v2602 = vpack.c.b16 %v2050, %v2042
    %v2603 = vpack.c.b16 %v2051, %v2043
    %v2604 = vpack.c.b16 %v2060, %v2052
    %v2605 = vpack.c.b16 %v2061, %v2053
    %v2606 = vpack.c.b16 %v2062, %v2054
    %v2607 = vpack.c.b16 %v2063, %v2055
    %v2608 = vpack.c.b16 %v2064, %v2056
    %v2609 = vpack.c.b16 %v2065, %v2057
    %v2610 = vpack.c.b16 %v2066, %v2058
    %v2611 = vpack.c.b16 %v2067, %v2059
    %v2612 = vpack.c.b16 %v2076, %v2068
    %v2613 = vpack.c.b16 %v2077, %v2069
    %v2614 = vpack.c.b16 %v2078, %v2070
    %v2615 = vpack.c.b16 %v2079, %v2071
    %v2616 = vpack.c.b16 %v2080, %v2072
    %v2617 = vpack.c.b16 %v2081, %v2073
    %v2618 = vpack.c.b16 %v2082, %v2074
    %v2619 = vpack.c.b16 %v2083, %v2075
    %v2620 = vpack.c.b16 %v2092, %v2084
    %v2621 = vpack.c.b16 %v2093, %v2085
    %v2622 = vpack.c.b16 %v2094, %v2086
    %v2623 = vpack.c.b16 %v2095, %v2087
    %v2624 = vpack.c.b16 %v2096, %v2088
    %v2625 = vpack.c.b16 %v2097, %v2089
    %v2626 = vpack.c.b16 %v2098, %v2090
    %v2627 = vpack.c.b16 %v2099, %v2091
    %v2628 = vpack.c.b16 %v2108, %v2100
    %v2629 = vpack.c.b16 %v2109, %v2101
    %v2630 = vpack.c.b16 %v2110, %v2102
    %v2631 = vpack.c.b16 %v2111, %v2103
    %v2632 = vpack.c.b16 %v2112, %v2104
    %v2633 = vpack.c.b16 %v2113, %v2105
    %v2634 = vpack.c.b16 %v2114, %v2106
    %v2635 = vpack.c.b16 %v2115, %v2107
    %v2636 = vpack.c.b16 %v2124, %v2116
    %v2637 = vpack.c.b16 %v2125, %v2117
    %v2638 = vpack.c.b16 %v2126, %v2118
    %v2639 = vpack.c.b16 %v2127, %v2119
    %v2640 = vpack.c.b16 %v2128, %v2120
    %v2641 = vpack.c.b16 %v2129, %v2121
    %v2642 = vpack.c.b16 %v2130, %v2122
    %v2643 = vpack.c.b16 %v2131, %v2123
    %3156 = vmatprep.subr.bf16.mxu0 %v2133
    %3157 = vmatpush1.bf16.msra.mxu0 %v2132
    %3158 = vmatprep.subr.bf16.mxu0 %v2141
    %3159 = vmatpush1.bf16.msra.mxu0 %v2140
    %3160 = vmatprep.subr.bf16.mxu0 %v2149
    %3161 = vmatpush1.bf16.msra.mxu0 %v2148
    %3162 = vmatprep.subr.bf16.mxu0 %v2157
    %3163 = vmatpush1.bf16.msra.mxu0 %v2156
    %3164 = vmatprep.subr.bf16.mxu0 %v2165
    %3165 = vmatpush1.bf16.msra.mxu0 %v2164
    %3166 = vmatprep.subr.bf16.mxu0 %v2173
    %3167 = vmatpush1.bf16.msra.mxu0 %v2172
    %3168 = vmatprep.subr.bf16.mxu0 %v2181
    %3169 = vmatpush1.bf16.msra.mxu0 %v2180
    %3170 = vmatprep.subr.bf16.mxu0 %v2189
    %3171 = vmatpush1.bf16.msra.mxu0 %v2188
    %3172 = vmatprep.subr.bf16.mxu0 %v2197
    %3173 = vmatpush1.bf16.msra.mxu0 %v2196
    %3174 = vmatprep.subr.bf16.mxu0 %v2205
    %3175 = vmatpush1.bf16.msra.mxu0 %v2204
    %3176 = vmatprep.subr.bf16.mxu0 %v2213
    %3177 = vmatpush1.bf16.msra.mxu0 %v2212
    %3178 = vmatprep.subr.bf16.mxu0 %v2221
    %3179 = vmatpush1.bf16.msra.mxu0 %v2220
    %3180 = vmatprep.subr.bf16.mxu0 %v2229
    %3181 = vmatpush1.bf16.msra.mxu0 %v2228
    %3182 = vmatprep.subr.bf16.mxu0 %v2237
    %3183 = vmatpush1.bf16.msra.mxu0 %v2236
    %3184 = vmatprep.subr.bf16.mxu0 %v2245
    %3185 = vmatpush1.bf16.msra.mxu0 %v2244
    %3186 = vmatprep.subr.bf16.mxu0 %v2253
    %3187 = vmatpush1.bf16.msra.mxu0 %v2252
    %3188 = vmatprep.mubr.bf16.mxu0 %v576
    %3189 = vmatmul.mubr.bf16.gmra.mrb[0].mxu0 %v562
    %v3190 = vpop.f32.mrb[0].mxu0
    %v3191 = vadd.f32 0.0, %v3190
    %v3192 = vpop.f32.mrb[0].mxu0
    %v3193 = vadd.f32 0.0, %v3192
    %v3194 = vpop.f32.mrb[0].mxu0
    %v3195 = vpop.f32.mrb[0].mxu0
    %3196 = vdwg.mxu0
    %3197 = vmatprep.subr.bf16.mxu0 %v2261
    %3198 = vmatpush1.bf16.msra.mxu0 %v2260
    %3199 = vmatprep.subr.bf16.mxu0 %v2269
    %3200 = vmatpush1.bf16.msra.mxu0 %v2268
    %3201 = vmatprep.subr.bf16.mxu0 %v2277
    %3202 = vmatpush1.bf16.msra.mxu0 %v2276
    %3203 = vmatprep.subr.bf16.mxu0 %v2285
    %3204 = vmatpush1.bf16.msra.mxu0 %v2284
    %3205 = vmatprep.subr.bf16.mxu0 %v2293
    %3206 = vmatpush1.bf16.msra.mxu0 %v2292
    %3207 = vmatprep.subr.bf16.mxu0 %v2301
    %3208 = vmatpush1.bf16.msra.mxu0 %v2300
    %3209 = vmatprep.subr.bf16.mxu0 %v2309
    %3210 = vmatpush1.bf16.msra.mxu0 %v2308
    %3211 = vmatprep.subr.bf16.mxu0 %v2317
    %3212 = vmatpush1.bf16.msra.mxu0 %v2316
    %3213 = vmatprep.subr.bf16.mxu0 %v2325
    %3214 = vmatpush1.bf16.msra.mxu0 %v2324
    %3215 = vmatprep.subr.bf16.mxu0 %v2333
    %3216 = vmatpush1.bf16.msra.mxu0 %v2332
    %3217 = vmatprep.subr.bf16.mxu0 %v2341
    %3218 = vmatpush1.bf16.msra.mxu0 %v2340
    %3219 = vmatprep.subr.bf16.mxu0 %v2349
    %3220 = vmatpush1.bf16.msra.mxu0 %v2348
    %3221 = vmatprep.subr.bf16.mxu0 %v2357
    %3222 = vmatpush1.bf16.msra.mxu0 %v2356
    %3223 = vmatprep.subr.bf16.mxu0 %v2365
    %3224 = vmatpush1.bf16.msra.mxu0 %v2364
    %3225 = vmatprep.subr.bf16.mxu0 %v2373
    %3226 = vmatpush1.bf16.msra.mxu0 %v2372
    %3227 = vmatprep.subr.bf16.mxu0 %v2381
    %3228 = vmatpush1.bf16.msra.mxu0 %v2380
    %3229 = vmatprep.mubr.bf16.mxu0 %v586
    %3230 = vmatmul.mubr.bf16.gmra.mrb[0].mxu0 %v584
    %v3231 = vpop.f32.mrb[0].mxu0
    %v3232 = vadd.f32 %v3191, %v3231
    %v3233 = vpop.f32.mrb[0].mxu0
    %v3234 = vadd.f32 %v3193, %v3233
    %v3235 = vpop.f32.mrb[0].mxu0
    %v3236 = vpop.f32.mrb[0].mxu0
    %3237 = vdwg.mxu0
    %3238 = vmatprep.subr.bf16.mxu0 %v2389
    %3239 = vmatpush1.bf16.msra.mxu0 %v2388
    %3240 = vmatprep.subr.bf16.mxu0 %v2397
    %3241 = vmatpush1.bf16.msra.mxu0 %v2396
    %3242 = vmatprep.subr.bf16.mxu0 %v2405
    %3243 = vmatpush1.bf16.msra.mxu0 %v2404
    %3244 = vmatprep.subr.bf16.mxu0 %v2413
    %3245 = vmatpush1.bf16.msra.mxu0 %v2412
    %3246 = vmatprep.subr.bf16.mxu0 %v2421
    %3247 = vmatpush1.bf16.msra.mxu0 %v2420
    %3248 = vmatprep.subr.bf16.mxu0 %v2429
    %3249 = vmatpush1.bf16.msra.mxu0 %v2428
    %3250 = vmatprep.subr.bf16.mxu0 %v2437
    %3251 = vmatpush1.bf16.msra.mxu0 %v2436
    %3252 = vmatprep.subr.bf16.mxu0 %v2445
    %3253 = vmatpush1.bf16.msra.mxu0 %v2444
    %3254 = vmatprep.subr.bf16.mxu0 %v2453
    %3255 = vmatpush1.bf16.msra.mxu0 %v2452
    %3256 = vmatprep.subr.bf16.mxu0 %v2461
    %3257 = vmatpush1.bf16.msra.mxu0 %v2460
    %3258 = vmatprep.subr.bf16.mxu0 %v2469
    %3259 = vmatpush1.bf16.msra.mxu0 %v2468
    %3260 = vmatprep.subr.bf16.mxu0 %v2477
    %3261 = vmatpush1.bf16.msra.mxu0 %v2476
    %3262 = vmatprep.subr.bf16.mxu0 %v2485
    %3263 = vmatpush1.bf16.msra.mxu0 %v2484
    %3264 = vmatprep.subr.bf16.mxu0 %v2493
    %3265 = vmatpush1.bf16.msra.mxu0 %v2492
    %3266 = vmatprep.subr.bf16.mxu0 %v2501
    %3267 = vmatpush1.bf16.msra.mxu0 %v2500
    %3268 = vmatprep.subr.bf16.mxu0 %v2509
    %3269 = vmatpush1.bf16.msra.mxu0 %v2508
    %3270 = vmatprep.mubr.bf16.mxu0 %v583
    %3271 = vmatmul.mubr.bf16.gmra.mrb[0].mxu0 %v569
    %v3272 = vpop.f32.mrb[0].mxu0
    %v3273 = vadd.f32 %v3232, %v3272
    %v3274 = vpop.f32.mrb[0].mxu0
    %v3275 = vadd.f32 %v3234, %v3274
    %v3276 = vpop.f32.mrb[0].mxu0
    %v3277 = vpop.f32.mrb[0].mxu0
    %3278 = vdwg.mxu0
    %3279 = vmatprep.subr.bf16.mxu0 %v2517
    %3280 = vmatpush1.bf16.msra.mxu0 %v2516
    %3281 = vmatprep.subr.bf16.mxu0 %v2525
    %3282 = vmatpush1.bf16.msra.mxu0 %v2524
    %3283 = vmatprep.subr.bf16.mxu0 %v2533
    %3284 = vmatpush1.bf16.msra.mxu0 %v2532
    %3285 = vmatprep.subr.bf16.mxu0 %v2541
    %3286 = vmatpush1.bf16.msra.mxu0 %v2540
    %3287 = vmatprep.subr.bf16.mxu0 %v2549
    %3288 = vmatpush1.bf16.msra.mxu0 %v2548
    %3289 = vmatprep.subr.bf16.mxu0 %v2557
    %3290 = vmatpush1.bf16.msra.mxu0 %v2556
    %3291 = vmatprep.subr.bf16.mxu0 %v2565
    %3292 = vmatpush1.bf16.msra.mxu0 %v2564
    %3293 = vmatprep.subr.bf16.mxu0 %v2573
    %3294 = vmatpush1.bf16.msra.mxu0 %v2572
    %3295 = vmatprep.subr.bf16.mxu0 %v2581
    %3296 = vmatpush1.bf16.msra.mxu0 %v2580
    %3297 = vmatprep.subr.bf16.mxu0 %v2589
    %3298 = vmatpush1.bf16.msra.mxu0 %v2588
    %3299 = vmatprep.subr.bf16.mxu0 %v2597
    %3300 = vmatpush1.bf16.msra.mxu0 %v2596
    %3301 = vmatprep.subr.bf16.mxu0 %v2605
    %3302 = vmatpush1.bf16.msra.mxu0 %v2604
    %3303 = vmatprep.subr.bf16.mxu0 %v2613
    %3304 = vmatpush1.bf16.msra.mxu0 %v2612
    %3305 = vmatprep.subr.bf16.mxu0 %v2621
    %3306 = vmatpush1.bf16.msra.mxu0 %v2620
    %3307 = vmatprep.subr.bf16.mxu0 %v2629
    %3308 = vmatpush1.bf16.msra.mxu0 %v2628
    %3309 = vmatprep.subr.bf16.mxu0 %v2637
    %3310 = vmatpush1.bf16.msra.mxu0 %v2636
    %3311 = vmatprep.mubr.bf16.mxu0 %v587
    %3312 = vmatmul.mubr.bf16.gmra.mrb[0].mxu0 %v585
    %v3313 = vpop.f32.mrb[0].mxu0
    %v3314 = vadd.f32 %v3273, %v3313
    %v3315 = vpop.f32.mrb[0].mxu0
    %v3316 = vadd.f32 %v3275, %v3315
    %v3317 = vpop.f32.mrb[0].mxu0
    %v3318 = vpop.f32.mrb[0].mxu0
    %3319 = vdwg.mxu0
    %3320 = vmatprep.subr.bf16.mxu0 %v2135
    %3321 = vmatpush1.bf16.msra.mxu0 %v2134
    %3322 = vmatprep.subr.bf16.mxu0 %v2143
    %3323 = vmatpush1.bf16.msra.mxu0 %v2142
    %3324 = vmatprep.subr.bf16.mxu0 %v2151
    %3325 = vmatpush1.bf16.msra.mxu0 %v2150
    %3326 = vmatprep.subr.bf16.mxu0 %v2159
    %3327 = vmatpush1.bf16.msra.mxu0 %v2158
    %3328 = vmatprep.subr.bf16.mxu0 %v2167
    %3329 = vmatpush1.bf16.msra.mxu0 %v2166
    %3330 = vmatprep.subr.bf16.mxu0 %v2175
    %3331 = vmatpush1.bf16.msra.mxu0 %v2174
    %3332 = vmatprep.subr.bf16.mxu0 %v2183
    %3333 = vmatpush1.bf16.msra.mxu0 %v2182
    %3334 = vmatprep.subr.bf16.mxu0 %v2191
    %3335 = vmatpush1.bf16.msra.mxu0 %v2190
    %3336 = vmatprep.subr.bf16.mxu0 %v2199
    %3337 = vmatpush1.bf16.msra.mxu0 %v2198
    %3338 = vmatprep.subr.bf16.mxu0 %v2207
    %3339 = vmatpush1.bf16.msra.mxu0 %v2206
    %3340 = vmatprep.subr.bf16.mxu0 %v2215
    %3341 = vmatpush1.bf16.msra.mxu0 %v2214
    %3342 = vmatprep.subr.bf16.mxu0 %v2223
    %3343 = vmatpush1.bf16.msra.mxu0 %v2222
    %3344 = vmatprep.subr.bf16.mxu0 %v2231
    %3345 = vmatpush1.bf16.msra.mxu0 %v2230
    %3346 = vmatprep.subr.bf16.mxu0 %v2239
    %3347 = vmatpush1.bf16.msra.mxu0 %v2238
    %3348 = vmatprep.subr.bf16.mxu0 %v2247
    %3349 = vmatpush1.bf16.msra.mxu0 %v2246
    %3350 = vmatprep.subr.bf16.mxu0 %v2255
    %3351 = vmatpush1.bf16.msra.mxu0 %v2254
    %3352 = vmatprep.mubr.bf16.mxu0 %v576
    %3353 = vmatmul.mubr.bf16.gmra.mrb[0].mxu0 %v562
    %v3354 = vpop.f32.mrb[0].mxu0
    %v3355 = vadd.f32 0.0, %v3354
    %v3356 = vpop.f32.mrb[0].mxu0
    %v3357 = vadd.f32 0.0, %v3356
    %v3358 = vpop.f32.mrb[0].mxu0
    %v3359 = vpop.f32.mrb[0].mxu0
    %3360 = vdwg.mxu0
    %3361 = vmatprep.subr.bf16.mxu0 %v2263
    %3362 = vmatpush1.bf16.msra.mxu0 %v2262
    %3363 = vmatprep.subr.bf16.mxu0 %v2271
    %3364 = vmatpush1.bf16.msra.mxu0 %v2270
    %3365 = vmatprep.subr.bf16.mxu0 %v2279
    %3366 = vmatpush1.bf16.msra.mxu0 %v2278
    %3367 = vmatprep.subr.bf16.mxu0 %v2287
    %3368 = vmatpush1.bf16.msra.mxu0 %v2286
    %3369 = vmatprep.subr.bf16.mxu0 %v2295
    %3370 = vmatpush1.bf16.msra.mxu0 %v2294
    %3371 = vmatprep.subr.bf16.mxu0 %v2303
    %3372 = vmatpush1.bf16.msra.mxu0 %v2302
    %3373 = vmatprep.subr.bf16.mxu0 %v2311
    %3374 = vmatpush1.bf16.msra.mxu0 %v2310
    %3375 = vmatprep.subr.bf16.mxu0 %v2319
    %3376 = vmatpush1.bf16.msra.mxu0 %v2318
    %3377 = vmatprep.subr.bf16.mxu0 %v2327
    %3378 = vmatpush1.bf16.msra.mxu0 %v2326
    %3379 = vmatprep.subr.bf16.mxu0 %v2335
    %3380 = vmatpush1.bf16.msra.mxu0 %v2334
    %3381 = vmatprep.subr.bf16.mxu0 %v2343
    %3382 = vmatpush1.bf16.msra.mxu0 %v2342
    %3383 = vmatprep.subr.bf16.mxu0 %v2351
    %3384 = vmatpush1.bf16.msra.mxu0 %v2350
    %3385 = vmatprep.subr.bf16.mxu0 %v2359
    %3386 = vmatpush1.bf16.msra.mxu0 %v2358
    %3387 = vmatprep.subr.bf16.mxu0 %v2367
    %3388 = vmatpush1.bf16.msra.mxu0 %v2366
    %3389 = vmatprep.subr.bf16.mxu0 %v2375
    %3390 = vmatpush1.bf16.msra.mxu0 %v2374
    %3391 = vmatprep.subr.bf16.mxu0 %v2383
    %3392 = vmatpush1.bf16.msra.mxu0 %v2382
    %3393 = vmatprep.mubr.bf16.mxu0 %v586
    %3394 = vmatmul.mubr.bf16.gmra.mrb[0].mxu0 %v584
    %v3395 = vpop.f32.mrb[0].mxu0
    %v3396 = vadd.f32 %v3355, %v3395
    %v3397 = vpop.f32.mrb[0].mxu0
    %v3398 = vadd.f32 %v3357, %v3397
    %v3399 = vpop.f32.mrb[0].mxu0
    %v3400 = vpop.f32.mrb[0].mxu0
    %3401 = vdwg.mxu0
    %3402 = vmatprep.subr.bf16.mxu0 %v2391
    %3403 = vmatpush1.bf16.msra.mxu0 %v2390
    %3404 = vmatprep.subr.bf16.mxu0 %v2399
    %3405 = vmatpush1.bf16.msra.mxu0 %v2398
    %3406 = vmatprep.subr.bf16.mxu0 %v2407
    %3407 = vmatpush1.bf16.msra.mxu0 %v2406
    %3408 = vmatprep.subr.bf16.mxu0 %v2415
    %3409 = vmatpush1.bf16.msra.mxu0 %v2414
    %3410 = vmatprep.subr.bf16.mxu0 %v2423
    %3411 = vmatpush1.bf16.msra.mxu0 %v2422
    %3412 = vmatprep.subr.bf16.mxu0 %v2431
    %3413 = vmatpush1.bf16.msra.mxu0 %v2430
    %3414 = vmatprep.subr.bf16.mxu0 %v2439
    %3415 = vmatpush1.bf16.msra.mxu0 %v2438
    %3416 = vmatprep.subr.bf16.mxu0 %v2447
    %3417 = vmatpush1.bf16.msra.mxu0 %v2446
    %3418 = vmatprep.subr.bf16.mxu0 %v2455
    %3419 = vmatpush1.bf16.msra.mxu0 %v2454
    %3420 = vmatprep.subr.bf16.mxu0 %v2463
    %3421 = vmatpush1.bf16.msra.mxu0 %v2462
    %3422 = vmatprep.subr.bf16.mxu0 %v2471
    %3423 = vmatpush1.bf16.msra.mxu0 %v2470
    %3424 = vmatprep.subr.bf16.mxu0 %v2479
    %3425 = vmatpush1.bf16.msra.mxu0 %v2478
    %3426 = vmatprep.subr.bf16.mxu0 %v2487
    %3427 = vmatpush1.bf16.msra.mxu0 %v2486
    %3428 = vmatprep.subr.bf16.mxu0 %v2495
    %3429 = vmatpush1.bf16.msra.mxu0 %v2494
    %3430 = vmatprep.subr.bf16.mxu0 %v2503
    %3431 = vmatpush1.bf16.msra.mxu0 %v2502
    %3432 = vmatprep.subr.bf16.mxu0 %v2511
    %3433 = vmatpush1.bf16.msra.mxu0 %v2510
    %3434 = vmatprep.mubr.bf16.mxu0 %v583
    %3435 = vmatmul.mubr.bf16.gmra.mrb[0].mxu0 %v569
    %v3436 = vpop.f32.mrb[0].mxu0
    %v3437 = vadd.f32 %v3396, %v3436
    %v3438 = vpop.f32.mrb[0].mxu0
    %v3439 = vadd.f32 %v3398, %v3438
    %v3440 = vpop.f32.mrb[0].mxu0
    %v3441 = vpop.f32.mrb[0].mxu0
    %3442 = vdwg.mxu0
    %3443 = vmatprep.subr.bf16.mxu0 %v2519
    %3444 = vmatpush1.bf16.msra.mxu0 %v2518
    %3445 = vmatprep.subr.bf16.mxu0 %v2527
    %3446 = vmatpush1.bf16.msra.mxu0 %v2526
    %3447 = vmatprep.subr.bf16.mxu0 %v2535
    %3448 = vmatpush1.bf16.msra.mxu0 %v2534
    %3449 = vmatprep.subr.bf16.mxu0 %v2543
    %3450 = vmatpush1.bf16.msra.mxu0 %v2542
    %3451 = vmatprep.subr.bf16.mxu0 %v2551
    %3452 = vmatpush1.bf16.msra.mxu0 %v2550
    %3453 = vmatprep.subr.bf16.mxu0 %v2559
    %3454 = vmatpush1.bf16.msra.mxu0 %v2558
    %3455 = vmatprep.subr.bf16.mxu0 %v2567
    %3456 = vmatpush1.bf16.msra.mxu0 %v2566
    %3457 = vmatprep.subr.bf16.mxu0 %v2575
    %3458 = vmatpush1.bf16.msra.mxu0 %v2574
    %3459 = vmatprep.subr.bf16.mxu0 %v2583
    %3460 = vmatpush1.bf16.msra.mxu0 %v2582
    %3461 = vmatprep.subr.bf16.mxu0 %v2591
    %3462 = vmatpush1.bf16.msra.mxu0 %v2590
    %3463 = vmatprep.subr.bf16.mxu0 %v2599
    %3464 = vmatpush1.bf16.msra.mxu0 %v2598
    %3465 = vmatprep.subr.bf16.mxu0 %v2607
    %3466 = vmatpush1.bf16.msra.mxu0 %v2606
    %3467 = vmatprep.subr.bf16.mxu0 %v2615
    %3468 = vmatpush1.bf16.msra.mxu0 %v2614
    %3469 = vmatprep.subr.bf16.mxu0 %v2623
    %3470 = vmatpush1.bf16.msra.mxu0 %v2622
    %3471 = vmatprep.subr.bf16.mxu0 %v2631
    %3472 = vmatpush1.bf16.msra.mxu0 %v2630
    %3473 = vmatprep.subr.bf16.mxu0 %v2639
    %3474 = vmatpush1.bf16.msra.mxu0 %v2638
    %3475 = vmatprep.mubr.bf16.mxu0 %v587
    %3476 = vmatmul.mubr.bf16.gmra.mrb[0].mxu0 %v585
    %v3477 = vpop.f32.mrb[0].mxu0
    %v3478 = vadd.f32 %v3437, %v3477
    %v3479 = vpop.f32.mrb[0].mxu0
    %v3480 = vadd.f32 %v3439, %v3479
    %v3481 = vpop.f32.mrb[0].mxu0
    %v3482 = vpop.f32.mrb[0].mxu0
    %3483 = vdwg.mxu0
    %3484 = vmatprep.subr.bf16.mxu0 %v2137
    %3485 = vmatpush1.bf16.msra.mxu0 %v2136
    %3486 = vmatprep.subr.bf16.mxu0 %v2145
    %3487 = vmatpush1.bf16.msra.mxu0 %v2144
    %3488 = vmatprep.subr.bf16.mxu0 %v2153
    %3489 = vmatpush1.bf16.msra.mxu0 %v2152
    %3490 = vmatprep.subr.bf16.mxu0 %v2161
    %3491 = vmatpush1.bf16.msra.mxu0 %v2160
    %3492 = vmatprep.subr.bf16.mxu0 %v2169
    %3493 = vmatpush1.bf16.msra.mxu0 %v2168
    %3494 = vmatprep.subr.bf16.mxu0 %v2177
    %3495 = vmatpush1.bf16.msra.mxu0 %v2176
    %3496 = vmatprep.subr.bf16.mxu0 %v2185
    %3497 = vmatpush1.bf16.msra.mxu0 %v2184
    %3498 = vmatprep.subr.bf16.mxu0 %v2193
    %3499 = vmatpush1.bf16.msra.mxu0 %v2192
    %3500 = vmatprep.subr.bf16.mxu0 %v2201
    %3501 = vmatpush1.bf16.msra.mxu0 %v2200
    %3502 = vmatprep.subr.bf16.mxu0 %v2209
    %3503 = vmatpush1.bf16.msra.mxu0 %v2208
    %3504 = vmatprep.subr.bf16.mxu0 %v2217
    %3505 = vmatpush1.bf16.msra.mxu0 %v2216
    %3506 = vmatprep.subr.bf16.mxu0 %v2225
    %3507 = vmatpush1.bf16.msra.mxu0 %v2224
    %3508 = vmatprep.subr.bf16.mxu0 %v2233
    %3509 = vmatpush1.bf16.msra.mxu0 %v2232
    %3510 = vmatprep.subr.bf16.mxu0 %v2241
    %3511 = vmatpush1.bf16.msra.mxu0 %v2240
    %3512 = vmatprep.subr.bf16.mxu0 %v2249
    %3513 = vmatpush1.bf16.msra.mxu0 %v2248
    %3514 = vmatprep.subr.bf16.mxu0 %v2257
    %3515 = vmatpush1.bf16.msra.mxu0 %v2256
    %3516 = vmatprep.mubr.bf16.mxu0 %v576
    %3517 = vmatmul.mubr.bf16.gmra.mrb[0].mxu0 %v562
    %v3518 = vpop.f32.mrb[0].mxu0
    %v3519 = vadd.f32 0.0, %v3518
    %v3520 = vpop.f32.mrb[0].mxu0
    %v3521 = vadd.f32 0.0, %v3520
    %v3522 = vpop.f32.mrb[0].mxu0
    %v3523 = vpop.f32.mrb[0].mxu0
    %3524 = vdwg.mxu0
    %3525 = vmatprep.subr.bf16.mxu0 %v2265
    %3526 = vmatpush1.bf16.msra.mxu0 %v2264
    %3527 = vmatprep.subr.bf16.mxu0 %v2273
    %3528 = vmatpush1.bf16.msra.mxu0 %v2272
    %3529 = vmatprep.subr.bf16.mxu0 %v2281
    %3530 = vmatpush1.bf16.msra.mxu0 %v2280
    %3531 = vmatprep.subr.bf16.mxu0 %v2289
    %3532 = vmatpush1.bf16.msra.mxu0 %v2288
    %3533 = vmatprep.subr.bf16.mxu0 %v2297
    %3534 = vmatpush1.bf16.msra.mxu0 %v2296
    %3535 = vmatprep.subr.bf16.mxu0 %v2305
    %3536 = vmatpush1.bf16.msra.mxu0 %v2304
    %3537 = vmatprep.subr.bf16.mxu0 %v2313
    %3538 = vmatpush1.bf16.msra.mxu0 %v2312
    %3539 = vmatprep.subr.bf16.mxu0 %v2321
    %3540 = vmatpush1.bf16.msra.mxu0 %v2320
    %3541 = vmatprep.subr.bf16.mxu0 %v2329
    %3542 = vmatpush1.bf16.msra.mxu0 %v2328
    %3543 = vmatprep.subr.bf16.mxu0 %v2337
    %3544 = vmatpush1.bf16.msra.mxu0 %v2336
    %3545 = vmatprep.subr.bf16.mxu0 %v2345
    %3546 = vmatpush1.bf16.msra.mxu0 %v2344
    %3547 = vmatprep.subr.bf16.mxu0 %v2353
    %3548 = vmatpush1.bf16.msra.mxu0 %v2352
    %3549 = vmatprep.subr.bf16.mxu0 %v2361
    %3550 = vmatpush1.bf16.msra.mxu0 %v2360
    %3551 = vmatprep.subr.bf16.mxu0 %v2369
    %3552 = vmatpush1.bf16.msra.mxu0 %v2368
    %3553 = vmatprep.subr.bf16.mxu0 %v2377
    %3554 = vmatpush1.bf16.msra.mxu0 %v2376
    %3555 = vmatprep.subr.bf16.mxu0 %v2385
    %3556 = vmatpush1.bf16.msra.mxu0 %v2384
    %3557 = vmatprep.mubr.bf16.mxu0 %v586
    %3558 = vmatmul.mubr.bf16.gmra.mrb[0].mxu0 %v584
    %v3559 = vpop.f32.mrb[0].mxu0
    %v3560 = vadd.f32 %v3519, %v3559
    %v3561 = vpop.f32.mrb[0].mxu0
    %v3562 = vadd.f32 %v3521, %v3561
    %v3563 = vpop.f32.mrb[0].mxu0
    %v3564 = vpop.f32.mrb[0].mxu0
    %3565 = vdwg.mxu0
    %3566 = vmatprep.subr.bf16.mxu0 %v2393
    %3567 = vmatpush1.bf16.msra.mxu0 %v2392
    %3568 = vmatprep.subr.bf16.mxu0 %v2401
    %3569 = vmatpush1.bf16.msra.mxu0 %v2400
    %3570 = vmatprep.subr.bf16.mxu0 %v2409
    %3571 = vmatpush1.bf16.msra.mxu0 %v2408
    %3572 = vmatprep.subr.bf16.mxu0 %v2417
    %3573 = vmatpush1.bf16.msra.mxu0 %v2416
    %3574 = vmatprep.subr.bf16.mxu0 %v2425
    %3575 = vmatpush1.bf16.msra.mxu0 %v2424
    %3576 = vmatprep.subr.bf16.mxu0 %v2433
    %3577 = vmatpush1.bf16.msra.mxu0 %v2432
    %3578 = vmatprep.subr.bf16.mxu0 %v2441
    %3579 = vmatpush1.bf16.msra.mxu0 %v2440
    %3580 = vmatprep.subr.bf16.mxu0 %v2449
    %3581 = vmatpush1.bf16.msra.mxu0 %v2448
    %3582 = vmatprep.subr.bf16.mxu0 %v2457
    %3583 = vmatpush1.bf16.msra.mxu0 %v2456
    %3584 = vmatprep.subr.bf16.mxu0 %v2465
    %3585 = vmatpush1.bf16.msra.mxu0 %v2464
    %3586 = vmatprep.subr.bf16.mxu0 %v2473
    %3587 = vmatpush1.bf16.msra.mxu0 %v2472
    %3588 = vmatprep.subr.bf16.mxu0 %v2481
    %3589 = vmatpush1.bf16.msra.mxu0 %v2480
    %3590 = vmatprep.subr.bf16.mxu0 %v2489
    %3591 = vmatpush1.bf16.msra.mxu0 %v2488
    %3592 = vmatprep.subr.bf16.mxu0 %v2497
    %3593 = vmatpush1.bf16.msra.mxu0 %v2496
    %3594 = vmatprep.subr.bf16.mxu0 %v2505
    %3595 = vmatpush1.bf16.msra.mxu0 %v2504
    %3596 = vmatprep.subr.bf16.mxu0 %v2513
    %3597 = vmatpush1.bf16.msra.mxu0 %v2512
    %3598 = vmatprep.mubr.bf16.mxu0 %v583
    %3599 = vmatmul.mubr.bf16.gmra.mrb[0].mxu0 %v569
    %v3600 = vpop.f32.mrb[0].mxu0
    %v3601 = vadd.f32 %v3560, %v3600
    %v3602 = vpop.f32.mrb[0].mxu0
    %v3603 = vadd.f32 %v3562, %v3602
    %v3604 = vpop.f32.mrb[0].mxu0
    %v3605 = vpop.f32.mrb[0].mxu0
    %3606 = vdwg.mxu0
    %3607 = vmatprep.subr.bf16.mxu0 %v2521
    %3608 = vmatpush1.bf16.msra.mxu0 %v2520
    %3609 = vmatprep.subr.bf16.mxu0 %v2529
    %3610 = vmatpush1.bf16.msra.mxu0 %v2528
    %3611 = vmatprep.subr.bf16.mxu0 %v2537
    %3612 = vmatpush1.bf16.msra.mxu0 %v2536
    %3613 = vmatprep.subr.bf16.mxu0 %v2545
    %3614 = vmatpush1.bf16.msra.mxu0 %v2544
    %3615 = vmatprep.subr.bf16.mxu0 %v2553
    %3616 = vmatpush1.bf16.msra.mxu0 %v2552
    %3617 = vmatprep.subr.bf16.mxu0 %v2561
    %3618 = vmatpush1.bf16.msra.mxu0 %v2560
    %3619 = vmatprep.subr.bf16.mxu0 %v2569
    %3620 = vmatpush1.bf16.msra.mxu0 %v2568
    %3621 = vmatprep.subr.bf16.mxu0 %v2577
    %3622 = vmatpush1.bf16.msra.mxu0 %v2576
    %3623 = vmatprep.subr.bf16.mxu0 %v2585
    %3624 = vmatpush1.bf16.msra.mxu0 %v2584
    %3625 = vmatprep.subr.bf16.mxu0 %v2593
    %3626 = vmatpush1.bf16.msra.mxu0 %v2592
    %3627 = vmatprep.subr.bf16.mxu0 %v2601
    %3628 = vmatpush1.bf16.msra.mxu0 %v2600
    %3629 = vmatprep.subr.bf16.mxu0 %v2609
    %3630 = vmatpush1.bf16.msra.mxu0 %v2608
    %3631 = vmatprep.subr.bf16.mxu0 %v2617
    %3632 = vmatpush1.bf16.msra.mxu0 %v2616
    %3633 = vmatprep.subr.bf16.mxu0 %v2625
    %3634 = vmatpush1.bf16.msra.mxu0 %v2624
    %3635 = vmatprep.subr.bf16.mxu0 %v2633
    %3636 = vmatpush1.bf16.msra.mxu0 %v2632
    %3637 = vmatprep.subr.bf16.mxu0 %v2641
    %3638 = vmatpush1.bf16.msra.mxu0 %v2640
    %3639 = vmatprep.mubr.bf16.mxu0 %v587
    %3640 = vmatmul.mubr.bf16.gmra.mrb[0].mxu0 %v585
    %v3641 = vpop.f32.mrb[0].mxu0
    %v3642 = vadd.f32 %v3601, %v3641
    %v3643 = vpop.f32.mrb[0].mxu0
    %v3644 = vadd.f32 %v3603, %v3643
    %v3645 = vpop.f32.mrb[0].mxu0
    %v3646 = vpop.f32.mrb[0].mxu0
    %3647 = vdwg.mxu0
    %3648 = vmatprep.subr.bf16.mxu0 %v2139
    %3649 = vmatpush1.bf16.msra.mxu0 %v2138
    %3650 = vmatprep.subr.bf16.mxu0 %v2147
    %3651 = vmatpush1.bf16.msra.mxu0 %v2146
    %3652 = vmatprep.subr.bf16.mxu0 %v2155
    %3653 = vmatpush1.bf16.msra.mxu0 %v2154
    %3654 = vmatprep.subr.bf16.mxu0 %v2163
    %3655 = vmatpush1.bf16.msra.mxu0 %v2162
    %3656 = vmatprep.subr.bf16.mxu0 %v2171
    %3657 = vmatpush1.bf16.msra.mxu0 %v2170
    %3658 = vmatprep.subr.bf16.mxu0 %v2179
    %3659 = vmatpush1.bf16.msra.mxu0 %v2178
    %3660 = vmatprep.subr.bf16.mxu0 %v2187
    %3661 = vmatpush1.bf16.msra.mxu0 %v2186
    %3662 = vmatprep.subr.bf16.mxu0 %v2195
    %3663 = vmatpush1.bf16.msra.mxu0 %v2194
    %3664 = vmatprep.subr.bf16.mxu0 %v2203
    %3665 = vmatpush1.bf16.msra.mxu0 %v2202
    %3666 = vmatprep.subr.bf16.mxu0 %v2211
    %3667 = vmatpush1.bf16.msra.mxu0 %v2210
    %3668 = vmatprep.subr.bf16.mxu0 %v2219
    %3669 = vmatpush1.bf16.msra.mxu0 %v2218
    %3670 = vmatprep.subr.bf16.mxu0 %v2227
    %3671 = vmatpush1.bf16.msra.mxu0 %v2226
    %3672 = vmatprep.subr.bf16.mxu0 %v2235
    %3673 = vmatpush1.bf16.msra.mxu0 %v2234
    %3674 = vmatprep.subr.bf16.mxu0 %v2243
    %3675 = vmatpush1.bf16.msra.mxu0 %v2242
    %3676 = vmatprep.subr.bf16.mxu0 %v2251
    %3677 = vmatpush1.bf16.msra.mxu0 %v2250
    %3678 = vmatprep.subr.bf16.mxu0 %v2259
    %3679 = vmatpush1.bf16.msra.mxu0 %v2258
    %3680 = vmatprep.mubr.bf16.mxu0 %v576
    %3681 = vmatmul.mubr.bf16.gmra.mrb[0].mxu0 %v562
    %v3682 = vpop.f32.mrb[0].mxu0
    %v3683 = vadd.f32 0.0, %v3682
    %v3684 = vpop.f32.mrb[0].mxu0
    %v3685 = vadd.f32 0.0, %v3684
    %v3686 = vpop.f32.mrb[0].mxu0
    %v3687 = vpop.f32.mrb[0].mxu0
    %3688 = vdwg.mxu0
    %3689 = vmatprep.subr.bf16.mxu0 %v2267
    %3690 = vmatpush1.bf16.msra.mxu0 %v2266
    %3691 = vmatprep.subr.bf16.mxu0 %v2275
    %3692 = vmatpush1.bf16.msra.mxu0 %v2274
    %3693 = vmatprep.subr.bf16.mxu0 %v2283
    %3694 = vmatpush1.bf16.msra.mxu0 %v2282
    %3695 = vmatprep.subr.bf16.mxu0 %v2291
    %3696 = vmatpush1.bf16.msra.mxu0 %v2290
    %3697 = vmatprep.subr.bf16.mxu0 %v2299
    %3698 = vmatpush1.bf16.msra.mxu0 %v2298
    %3699 = vmatprep.subr.bf16.mxu0 %v2307
    %3700 = vmatpush1.bf16.msra.mxu0 %v2306
    %3701 = vmatprep.subr.bf16.mxu0 %v2315
    %3702 = vmatpush1.bf16.msra.mxu0 %v2314
    %3703 = vmatprep.subr.bf16.mxu0 %v2323
    %3704 = vmatpush1.bf16.msra.mxu0 %v2322
    %3705 = vmatprep.subr.bf16.mxu0 %v2331
    %3706 = vmatpush1.bf16.msra.mxu0 %v2330
    %3707 = vmatprep.subr.bf16.mxu0 %v2339
    %3708 = vmatpush1.bf16.msra.mxu0 %v2338
    %3709 = vmatprep.subr.bf16.mxu0 %v2347
    %3710 = vmatpush1.bf16.msra.mxu0 %v2346
    %3711 = vmatprep.subr.bf16.mxu0 %v2355
    %3712 = vmatpush1.bf16.msra.mxu0 %v2354
    %3713 = vmatprep.subr.bf16.mxu0 %v2363
    %3714 = vmatpush1.bf16.msra.mxu0 %v2362
    %3715 = vmatprep.subr.bf16.mxu0 %v2371
    %3716 = vmatpush1.bf16.msra.mxu0 %v2370
    %3717 = vmatprep.subr.bf16.mxu0 %v2379
    %3718 = vmatpush1.bf16.msra.mxu0 %v2378
    %3719 = vmatprep.subr.bf16.mxu0 %v2387
    %3720 = vmatpush1.bf16.msra.mxu0 %v2386
    %3721 = vmatprep.mubr.bf16.mxu0 %v586
    %3722 = vmatmul.mubr.bf16.gmra.mrb[0].mxu0 %v584
    %v3723 = vpop.f32.mrb[0].mxu0
    %v3724 = vadd.f32 %v3683, %v3723
    %v3725 = vpop.f32.mrb[0].mxu0
    %v3726 = vadd.f32 %v3685, %v3725
    %v3727 = vpop.f32.mrb[0].mxu0
    %v3728 = vpop.f32.mrb[0].mxu0
    %3729 = vdwg.mxu0
    %3730 = vmatprep.subr.bf16.mxu0 %v2395
    %3731 = vmatpush1.bf16.msra.mxu0 %v2394
    %3732 = vmatprep.subr.bf16.mxu0 %v2403
    %3733 = vmatpush1.bf16.msra.mxu0 %v2402
    %3734 = vmatprep.subr.bf16.mxu0 %v2411
    %3735 = vmatpush1.bf16.msra.mxu0 %v2410
    %3736 = vmatprep.subr.bf16.mxu0 %v2419
    %3737 = vmatpush1.bf16.msra.mxu0 %v2418
    %3738 = vmatprep.subr.bf16.mxu0 %v2427
    %3739 = vmatpush1.bf16.msra.mxu0 %v2426
    %3740 = vmatprep.subr.bf16.mxu0 %v2435
    %3741 = vmatpush1.bf16.msra.mxu0 %v2434
    %3742 = vmatprep.subr.bf16.mxu0 %v2443
    %3743 = vmatpush1.bf16.msra.mxu0 %v2442
    %3744 = vmatprep.subr.bf16.mxu0 %v2451
    %3745 = vmatpush1.bf16.msra.mxu0 %v2450
    %3746 = vmatprep.subr.bf16.mxu0 %v2459
    %3747 = vmatpush1.bf16.msra.mxu0 %v2458
    %3748 = vmatprep.subr.bf16.mxu0 %v2467
    %3749 = vmatpush1.bf16.msra.mxu0 %v2466
    %3750 = vmatprep.subr.bf16.mxu0 %v2475
    %3751 = vmatpush1.bf16.msra.mxu0 %v2474
    %3752 = vmatprep.subr.bf16.mxu0 %v2483
    %3753 = vmatpush1.bf16.msra.mxu0 %v2482
    %3754 = vmatprep.subr.bf16.mxu0 %v2491
    %3755 = vmatpush1.bf16.msra.mxu0 %v2490
    %3756 = vmatprep.subr.bf16.mxu0 %v2499
    %3757 = vmatpush1.bf16.msra.mxu0 %v2498
    %3758 = vmatprep.subr.bf16.mxu0 %v2507
    %3759 = vmatpush1.bf16.msra.mxu0 %v2506
    %3760 = vmatprep.subr.bf16.mxu0 %v2515
    %3761 = vmatpush1.bf16.msra.mxu0 %v2514
    %3762 = vmatprep.mubr.bf16.mxu0 %v583
    %3763 = vmatmul.mubr.bf16.gmra.mrb[0].mxu0 %v569
    %v3764 = vpop.f32.mrb[0].mxu0
    %v3765 = vadd.f32 %v3724, %v3764
    %v3766 = vpop.f32.mrb[0].mxu0
    %v3767 = vadd.f32 %v3726, %v3766
    %v3768 = vpop.f32.mrb[0].mxu0
    %v3769 = vpop.f32.mrb[0].mxu0
    %3770 = vdwg.mxu0
    %3771 = vmatprep.subr.bf16.mxu0 %v2523
    %3772 = vmatpush1.bf16.msra.mxu0 %v2522
    %3773 = vmatprep.subr.bf16.mxu0 %v2531
    %3774 = vmatpush1.bf16.msra.mxu0 %v2530
    %3775 = vmatprep.subr.bf16.mxu0 %v2539
    %3776 = vmatpush1.bf16.msra.mxu0 %v2538
    %3777 = vmatprep.subr.bf16.mxu0 %v2547
    %3778 = vmatpush1.bf16.msra.mxu0 %v2546
    %3779 = vmatprep.subr.bf16.mxu0 %v2555
    %3780 = vmatpush1.bf16.msra.mxu0 %v2554
    %3781 = vmatprep.subr.bf16.mxu0 %v2563
    %3782 = vmatpush1.bf16.msra.mxu0 %v2562
    %3783 = vmatprep.subr.bf16.mxu0 %v2571
    %3784 = vmatpush1.bf16.msra.mxu0 %v2570
    %3785 = vmatprep.subr.bf16.mxu0 %v2579
    %3786 = vmatpush1.bf16.msra.mxu0 %v2578
    %3787 = vmatprep.subr.bf16.mxu0 %v2587
    %3788 = vmatpush1.bf16.msra.mxu0 %v2586
    %3789 = vmatprep.subr.bf16.mxu0 %v2595
    %3790 = vmatpush1.bf16.msra.mxu0 %v2594
    %3791 = vmatprep.subr.bf16.mxu0 %v2603
    %3792 = vmatpush1.bf16.msra.mxu0 %v2602
    %3793 = vmatprep.subr.bf16.mxu0 %v2611
    %3794 = vmatpush1.bf16.msra.mxu0 %v2610
    %3795 = vmatprep.subr.bf16.mxu0 %v2619
    %3796 = vmatpush1.bf16.msra.mxu0 %v2618
    %3797 = vmatprep.subr.bf16.mxu0 %v2627
    %3798 = vmatpush1.bf16.msra.mxu0 %v2626
    %3799 = vmatprep.subr.bf16.mxu0 %v2635
    %3800 = vmatpush1.bf16.msra.mxu0 %v2634
    %3801 = vmatprep.subr.bf16.mxu0 %v2643
    %3802 = vmatpush1.bf16.msra.mxu0 %v2642
    %3803 = vmatprep.mubr.bf16.mxu0 %v587
    %3804 = vmatmul.mubr.bf16.gmra.mrb[0].mxu0 %v585
    %v3805 = vpop.f32.mrb[0].mxu0
    %v3806 = vadd.f32 %v3765, %v3805
    %v3807 = vpop.f32.mrb[0].mxu0
    %v3808 = vadd.f32 %v3767, %v3807
    %v3809 = vpop.f32.mrb[0].mxu0
    %v3810 = vpop.f32.mrb[0].mxu0
    %3811 = vdwg.mxu0
    %v3820 = vcombine.low %v3314, %v3316
    %v3821 = vcombine.low %v3478, %v3480
    %v3823 = vunpack.c.l.s4 1983009808
    %v3824 = vunpack.c.0.s8 %v3823
    %v3825 = vlaneseq
    %v3826 = vshrl.u32 %v3825, 7
    %v3827 = vsub.s32 %v3824, %v3826
    %v3828 = vrot.slane %v3820, %v3827
    %v3830 = vunpack.c.l.s4 1983009808
    %v3831 = vunpack.c.0.s8 %v3830
    %v3832 = vlaneseq
    %v3833 = vshrl.u32 %v3832, 7
    %v3834 = vsub.s32 %v3831, %v3833
    %v3835 = vrot.slane %v3821, %v3834
    %v3836 = vcombine.low %v3828, %v3835
    %v3837 = vcombine.low %v3642, %v3644
    %v3838 = vcombine.low %v3806, %v3808
    %v3840 = vunpack.c.l.s4 1983009808
    %v3841 = vunpack.c.0.s8 %v3840
    %v3842 = vlaneseq
    %v3843 = vshrl.u32 %v3842, 7
    %v3844 = vsub.s32 %v3841, %v3843
    %v3845 = vrot.slane %v3837, %v3844
    %v3847 = vunpack.c.l.s4 1983009808
    %v3848 = vunpack.c.0.s8 %v3847
    %v3849 = vlaneseq
    %v3850 = vshrl.u32 %v3849, 7
    %v3851 = vsub.s32 %v3848, %v3850
    %v3852 = vrot.slane %v3838, %v3851
    %v3853 = vcombine.low %v3845, %v3852
    %3856 = vst [vmem:[%s2] sm:$0xff] %v3836
    %3857 = vst [vmem:[%s2 + $0x8] sm:$0xff] %v3853
    // Predicated region
    $region14: #{fourier_operator_1d.2} parent=1 // pred_check
      _
    $region15: #{fourier_operator_1d.2} parent=1 // pred_check_branch
      %3859 = sbr.rel (0) target = $region17
    $region16: #{fourier_operator_1d.2} parent=1 // pred_region
      _
    $region17: #{fourier_operator_1d.2} parent=1 // pred_fallthru
      _
    // Predicated region
    $region18: #{fourier_operator_1d.2} parent=1 // pred_check
      _
    $region19: #{fourier_operator_1d.2} parent=1 // pred_check_branch
      %3861 = sbr.rel (0) target = $region21
    $region20: #{fourier_operator_1d.2} parent=1 // pred_region
      _
    $region21: #{fourier_operator_1d.2} parent=1 // pred_fallthru
      _
    %3862 = vsyncpa [#allocation3], 1

// kernel: reverse.1
$region0: #{reverse.1}
  %s0 = inlined_call_operand.vmem [shape: f32[2,32,127], index: 0, kind: input, shape index: {}]
  %s1 = inlined_call_operand.vmem [shape: f32[2,32,127], index: 1, kind: output, shape index: {}]
  %v2 = vlaneseq
  %v3 = vsub.s32 126, %v2
  %4 = vset.pattern.permute.xlu0 %v3
  $region1: #{reverse.1} parent=0
    #allocation0 [shape = 'u8[32768]{0}', space=vmem, size = 0x8000, scoped, tag = 'operand span for operand 0']
    #allocation1 [shape = 'u8[32768]{0}', space=vmem, size = 0x8000, scoped, tag = 'operand span for operand 1']
    // Predicated region
    $region2: #{reverse.1} parent=1 // pred_check
      _
    $region3: #{reverse.1} parent=1 // pred_check_branch
      %6 = sbr.rel (0) target = $region5
    $region4: #{reverse.1} parent=1 // pred_region
      // Predicated region
      $region6: #{reverse.1} parent=4 // pred_check
        _
      $region7: #{reverse.1} parent=4 // pred_check_branch
        %8 = sbr.rel (0) target = $region9
      $region8: #{reverse.1} parent=4 // pred_region
        // Predicated region
        $region21: #{reverse.1} parent=8 // pred_check
          _
        $region22: #{reverse.1} parent=8 // pred_check_branch
          %37 = sbr.rel (0) target = $region24
        $region23: #{reverse.1} parent=8 // pred_region
          loop: start=0, step=1, limit=1
          $region25: #{reverse.1} parent=23 // loop_pre_header
            _
          $region26: #{reverse.1} parent=23 // loop_header
            %s39 = sphi 0, %s43
            %p40 = scmp.ge.s32.totalorder %s39, 1
            %s44 = sphi %s0, %s0
            %s45 = sphi [#allocation0], [#allocation0]
          $region27: #{reverse.1} parent=23 // loop_header_branch
            %42 = sbr.rel (%p40) target = $region31
          $region28: #{reverse.1} parent=23 // loop_body
            %v46 = vld [vmem:[%s44] sm:$0xff]
            %47 = vst [vmem:[%s45] sm:$0xff] %v46
            %v48 = vld [vmem:[%s44 + $0x8] sm:$0xff]
            %49 = vst [vmem:[%s45 + $0x8] sm:$0xff] %v48
            %v50 = vld [vmem:[%s44 + $0x10] sm:$0xff]
            %51 = vst [vmem:[%s45 + $0x10] sm:$0xff] %v50
            %v52 = vld [vmem:[%s44 + $0x18] sm:$0xff]
            %53 = vst [vmem:[%s45 + $0x18] sm:$0xff] %v52
            %v54 = vld [vmem:[%s44 + $0x20] sm:$0xff]
            %55 = vst [vmem:[%s45 + $0x20] sm:$0xff] %v54
            %v56 = vld [vmem:[%s44 + $0x28] sm:$0xff]
            %57 = vst [vmem:[%s45 + $0x28] sm:$0xff] %v56
            %v58 = vld [vmem:[%s44 + $0x30] sm:$0xff]
            %59 = vst [vmem:[%s45 + $0x30] sm:$0xff] %v58
            %v60 = vld [vmem:[%s44 + $0x38] sm:$0xff]
            %61 = vst [vmem:[%s45 + $0x38] sm:$0xff] %v60
          $region29: #{reverse.1} parent=23 // loop_footer
            %s43 = sadd.s32 1, %s39
          $region30: #{reverse.1} parent=23 // loop_footer_branch
            %38 = sbr.rel target = $region26
          $region31: #{reverse.1} parent=23 // loop_exit
            _
        $region24: #{reverse.1} parent=8 // pred_fallthru
          _
        // Predicated region
        $region32: #{reverse.1} parent=8 // pred_check
          _
        $region33: #{reverse.1} parent=8 // pred_check_branch
          %63 = sbr.rel target = $region35
        $region34: #{reverse.1} parent=8 // pred_region
          _
        $region35: #{reverse.1} parent=8 // pred_fallthru
          _
      $region9: #{reverse.1} parent=4 // pred_fallthru
        _
      // Predicated region
      $region10: #{reverse.1} parent=4 // pred_check
        _
      $region11: #{reverse.1} parent=4 // pred_check_branch
        %10 = sbr.rel target = $region13
      $region12: #{reverse.1} parent=4 // pred_region
        loop: start=0, step=1, limit=1
        $region14: #{reverse.1} parent=12 // loop_pre_header
          _
        $region15: #{reverse.1} parent=12 // loop_header
          %s13 = sphi 0, %s17
          %p14 = scmp.ge.s32.totalorder %s13, 1
          %s18 = sphi %s0, %s0
          %s19 = sphi [#allocation0], [#allocation0]
        $region16: #{reverse.1} parent=12 // loop_header_branch
          %16 = sbr.rel (%p14) target = $region20
        $region17: #{reverse.1} parent=12 // loop_body
          %v20 = vld [vmem:[%s18] sm:$0xff]
          %21 = vst [vmem:[%s19] sm:$0xff] %v20
          %v22 = vld [vmem:[%s18 + $0x8] sm:$0xff]
          %23 = vst [vmem:[%s19 + $0x8] sm:$0xff] %v22
          %v24 = vld [vmem:[%s18 + $0x10] sm:$0xff]
          %25 = vst [vmem:[%s19 + $0x10] sm:$0xff] %v24
          %v26 = vld [vmem:[%s18 + $0x18] sm:$0xff]
          %27 = vst [vmem:[%s19 + $0x18] sm:$0xff] %v26
          %v28 = vld [vmem:[%s18 + $0x20] sm:$0xff]
          %29 = vst [vmem:[%s19 + $0x20] sm:$0xff] %v28
          %v30 = vld [vmem:[%s18 + $0x28] sm:$0xff]
          %31 = vst [vmem:[%s19 + $0x28] sm:$0xff] %v30
          %v32 = vld [vmem:[%s18 + $0x30] sm:$0xff]
          %33 = vst [vmem:[%s19 + $0x30] sm:$0xff] %v32
          %v34 = vld [vmem:[%s18 + $0x38] sm:$0xff]
          %35 = vst [vmem:[%s19 + $0x38] sm:$0xff] %v34
        $region18: #{reverse.1} parent=12 // loop_footer
          %s17 = sadd.s32 1, %s13
        $region19: #{reverse.1} parent=12 // loop_footer_branch
          %12 = sbr.rel target = $region15
        $region20: #{reverse.1} parent=12 // loop_exit
          _
      $region13: #{reverse.1} parent=4 // pred_fallthru
        _
    $region5: #{reverse.1} parent=1 // pred_fallthru
      _
    %64 = vnop
    %v65 = vld [vmem:[#allocation0] sm:$0xff]
    %66 = vperm.xlu0 %4, %v65
    %v67 = vpop.permute.xlu0 %66
    %68 = vst [vmem:[#allocation1] sm:$0xff] %v67
    %s69 = scalar_lea.vmem [#allocation1], 8
    %s70 = scalar_lea.vmem [#allocation0], 8
    %v71 = vld [vmem:[%s70] sm:$0xff]
    %72 = vperm.xlu0 %4, %v71
    %v73 = vpop.permute.xlu0 %72
    %74 = vst [vmem:[%s69] sm:$0xff] %v73
    %s75 = scalar_lea.vmem [#allocation1], 16
    %s76 = scalar_lea.vmem [#allocation0], 16
    %v77 = vld [vmem:[%s76] sm:$0xff]
    %78 = vperm.xlu0 %4, %v77
    %v79 = vpop.permute.xlu0 %78
    %80 = vst [vmem:[%s75] sm:$0xff] %v79
    %s81 = scalar_lea.vmem [#allocation1], 24
    %s82 = scalar_lea.vmem [#allocation0], 24
    %v83 = vld [vmem:[%s82] sm:$0xff]
    %84 = vperm.xlu0 %4, %v83
    %v85 = vpop.permute.xlu0 %84
    %86 = vst [vmem:[%s81] sm:$0xff] %v85
    %s87 = scalar_lea.vmem [#allocation1], 32
    %s88 = scalar_lea.vmem [#allocation0], 32
    %v89 = vld [vmem:[%s88] sm:$0xff]
    %90 = vperm.xlu0 %4, %v89
    %v91 = vpop.permute.xlu0 %90
    %92 = vst [vmem:[%s87] sm:$0xff] %v91
    %s93 = scalar_lea.vmem %s87, 8 [#allocation1]
    %s94 = scalar_lea.vmem %s88, 8 [#allocation0]
    %v95 = vld [vmem:[%s94] sm:$0xff]
    %96 = vperm.xlu0 %4, %v95
    %v97 = vpop.permute.xlu0 %96
    %98 = vst [vmem:[%s93] sm:$0xff] %v97
    %s99 = scalar_lea.vmem %s87, 16 [#allocation1]
    %s100 = scalar_lea.vmem %s88, 16 [#allocation0]
    %v101 = vld [vmem:[%s100] sm:$0xff]
    %102 = vperm.xlu0 %4, %v101
    %v103 = vpop.permute.xlu0 %102
    %104 = vst [vmem:[%s99] sm:$0xff] %v103
    %s105 = scalar_lea.vmem %s87, 24 [#allocation1]
    %s106 = scalar_lea.vmem %s88, 24 [#allocation0]
    %v107 = vld [vmem:[%s106] sm:$0xff]
    %108 = vperm.xlu0 %4, %v107
    %v109 = vpop.permute.xlu0 %108
    %110 = vst [vmem:[%s105] sm:$0xff] %v109
    // Predicated region
    $region36: #{reverse.1} parent=1 // pred_check
      _
    $region37: #{reverse.1} parent=1 // pred_check_branch
      %112 = sbr.rel (0) target = $region39
    $region38: #{reverse.1} parent=1 // pred_region
      // Predicated region
      $region40: #{reverse.1} parent=38 // pred_check
        _
      $region41: #{reverse.1} parent=38 // pred_check_branch
        %114 = sbr.rel (0) target = $region43
      $region42: #{reverse.1} parent=38 // pred_region
        // Predicated region
        $region55: #{reverse.1} parent=42 // pred_check
          _
        $region56: #{reverse.1} parent=42 // pred_check_branch
          %143 = sbr.rel (0) target = $region58
        $region57: #{reverse.1} parent=42 // pred_region
          loop: start=0, step=1, limit=1
          $region59: #{reverse.1} parent=57 // loop_pre_header
            _
          $region60: #{reverse.1} parent=57 // loop_header
            %s145 = sphi 0, %s149
            %p146 = scmp.ge.s32.totalorder %s145, 1
            %s150 = sphi [#allocation1], [#allocation1]
            %s151 = sphi %s1, %s1
          $region61: #{reverse.1} parent=57 // loop_header_branch
            %148 = sbr.rel (%p146) target = $region65
          $region62: #{reverse.1} parent=57 // loop_body
            %v152 = vld [vmem:[%s150] sm:$0xff]
            %153 = vst [vmem:[%s151] sm:$0xff] %v152
            %v154 = vld [vmem:[%s150 + $0x8] sm:$0xff]
            %155 = vst [vmem:[%s151 + $0x8] sm:$0xff] %v154
            %v156 = vld [vmem:[%s150 + $0x10] sm:$0xff]
            %157 = vst [vmem:[%s151 + $0x10] sm:$0xff] %v156
            %v158 = vld [vmem:[%s150 + $0x18] sm:$0xff]
            %159 = vst [vmem:[%s151 + $0x18] sm:$0xff] %v158
            %v160 = vld [vmem:[%s150 + $0x20] sm:$0xff]
            %161 = vst [vmem:[%s151 + $0x20] sm:$0xff] %v160
            %v162 = vld [vmem:[%s150 + $0x28] sm:$0xff]
            %163 = vst [vmem:[%s151 + $0x28] sm:$0xff] %v162
            %v164 = vld [vmem:[%s150 + $0x30] sm:$0xff]
            %165 = vst [vmem:[%s151 + $0x30] sm:$0xff] %v164
            %v166 = vld [vmem:[%s150 + $0x38] sm:$0xff]
            %167 = vst [vmem:[%s151 + $0x38] sm:$0xff] %v166
          $region63: #{reverse.1} parent=57 // loop_footer
            %s149 = sadd.s32 1, %s145
          $region64: #{reverse.1} parent=57 // loop_footer_branch
            %144 = sbr.rel target = $region60
          $region65: #{reverse.1} parent=57 // loop_exit
            _
        $region58: #{reverse.1} parent=42 // pred_fallthru
          _
        // Predicated region
        $region66: #{reverse.1} parent=42 // pred_check
          _
        $region67: #{reverse.1} parent=42 // pred_check_branch
          %169 = sbr.rel target = $region69
        $region68: #{reverse.1} parent=42 // pred_region
          _
        $region69: #{reverse.1} parent=42 // pred_fallthru
          _
      $region43: #{reverse.1} parent=38 // pred_fallthru
        _
      // Predicated region
      $region44: #{reverse.1} parent=38 // pred_check
        _
      $region45: #{reverse.1} parent=38 // pred_check_branch
        %116 = sbr.rel target = $region47
      $region46: #{reverse.1} parent=38 // pred_region
        loop: start=0, step=1, limit=1
        $region48: #{reverse.1} parent=46 // loop_pre_header
          _
        $region49: #{reverse.1} parent=46 // loop_header
          %s119 = sphi 0, %s123
          %p120 = scmp.ge.s32.totalorder %s119, 1
          %s124 = sphi [#allocation1], [#allocation1]
          %s125 = sphi %s1, %s1
        $region50: #{reverse.1} parent=46 // loop_header_branch
          %122 = sbr.rel (%p120) target = $region54
        $region51: #{reverse.1} parent=46 // loop_body
          %v126 = vld [vmem:[%s124] sm:$0xff]
          %127 = vst [vmem:[%s125] sm:$0xff] %v126
          %v128 = vld [vmem:[%s124 + $0x8] sm:$0xff]
          %129 = vst [vmem:[%s125 + $0x8] sm:$0xff] %v128
          %v130 = vld [vmem:[%s124 + $0x10] sm:$0xff]
          %131 = vst [vmem:[%s125 + $0x10] sm:$0xff] %v130
          %v132 = vld [vmem:[%s124 + $0x18] sm:$0xff]
          %133 = vst [vmem:[%s125 + $0x18] sm:$0xff] %v132
          %v134 = vld [vmem:[%s124 + $0x20] sm:$0xff]
          %135 = vst [vmem:[%s125 + $0x20] sm:$0xff] %v134
          %v136 = vld [vmem:[%s124 + $0x28] sm:$0xff]
          %137 = vst [vmem:[%s125 + $0x28] sm:$0xff] %v136
          %v138 = vld [vmem:[%s124 + $0x30] sm:$0xff]
          %139 = vst [vmem:[%s125 + $0x30] sm:$0xff] %v138
          %v140 = vld [vmem:[%s124 + $0x38] sm:$0xff]
          %141 = vst [vmem:[%s125 + $0x38] sm:$0xff] %v140
        $region52: #{reverse.1} parent=46 // loop_footer
          %s123 = sadd.s32 1, %s119
        $region53: #{reverse.1} parent=46 // loop_footer_branch
          %118 = sbr.rel target = $region49
        $region54: #{reverse.1} parent=46 // loop_exit
          _
      $region47: #{reverse.1} parent=38 // pred_fallthru
        _
    $region39: #{reverse.1} parent=1 // pred_fallthru
      _
    %170 = vnop

// kernel: fourier_operator_1d.3
$region0: #{fourier_operator_1d.3}
  #allocation0 [shape = 'u32[]', space=smem, size = 0x4, offset = 0x4, fixed_abs, tag = 'smem constant byte address 0x4 - core index']
  #allocation1 [shape = 'u32[144,128]{1,0:T(1,128)}', space=vmem, size = 0x12000, scoped, tag = 'internal scratch']
  %s0 = inlined_call_operand.vmem [shape: bf16[2,32,256], index: 0, kind: input, shape index: {}]
  %s1 = inlined_call_operand.vmem [shape: f32[2,32,256], index: 1, kind: input, shape index: {}]
  %s2 = inlined_call_operand.vmem [shape: bf16[32,32], index: 2, kind: input, shape index: {}]
  %s3 = inlined_call_operand.vmem [shape: f32[32,1], index: 3, kind: input, shape index: {}]
  %s4 = inlined_call_operand.hbm [shape: f32[2,32,256], index: 4, kind: output, shape index: {}]
  %s5 = sld [smem:[#allocation0]]
  $region49: #{fourier_operator_1d.3} parent=0
    _
  %s7 = ssub.s32 1, %s5
  %s8 = scalar_select 0, %s7, %s5
  $region1: #{fourier_operator_1d.3} parent=0
    #allocation2 [shape = 'u8[65536]{0}', space=vmem, size = 0x10000, scoped, tag = 'output window, operand 0']
    #allocation3 [shape = 's32[2]{0}', space=sflag, size = 0x8, scoped, tag = 'scoped memory for fourier_operator_1d.3']
    %9 = vsyncpa [#allocation3], 0
    %s10 = scalar_lea.sflag [#allocation3], 1
    %11 = vsyncpa %s10, 0
    loop: start=0, step=1, limit=4
    $region2: #{fourier_operator_1d.3} parent=1 // loop_pre_header
      _
    $region3: #{fourier_operator_1d.3} parent=1 // loop_header
      %s13 = sphi 0, %s17
      %p14 = scmp.ge.s32.totalorder %s13, 4
      %s20 = sphi 0, %s32
      %s21 = sphi 0, %s28
      %s22 = sphi 0, %s20
      %s23 = sphi 0, %s21
      %s24 = sphi 0, %s22
      %s25 = sphi 0, %s23
      %s37 = sphi 0, %s39
      %s40 = sphi 0, %s37
      %s41 = sphi 0, %s40
      %s57 = sphi 0, %s41
      %s65 = sphi 0, %s67
      %s68 = sphi 0, %s65
      %s69 = sphi 0, %s68
      %s85 = sphi 0, %s69
      %s89 = sphi 0, %s89
      %s91 = sphi 0, %s89
      %s92 = sphi 0, %s91
      %s106 = sphi 0, %s92
      %s110 = sphi 0, %s110
      %s112 = sphi 0, %s110
      %s113 = sphi 0, %s112
      %s127 = sphi 0, %s113
      %s135 = sphi 0, %s137
      %s138 = sphi 0, %s135
      %s139 = sphi 0, %s138
      %s155 = sphi 0, %s139
    $region4: #{fourier_operator_1d.3} parent=1 // loop_header_branch
      %16 = sbr.rel (%p14) target = $region8
    $region5: #{fourier_operator_1d.3} parent=1 // loop_body
      %s18 = ssub.s32 %s13, 1
      %s19 = ssub.s32 %s13, 2
      %s26 = sadd.s32 1, %s21
      %p27 = scmp.ge.s32.totalorder %s26, 1
      %s28 = scalar_select %p27, 0, %s26
      %s29 = sadd.s32 1, %s20
      %s30 = scalar_select %p27, %s29, %s20
      %p31 = scmp.ge.s32.totalorder %s30, 2
      %s32 = scalar_select %p31, 0, %s30
      %s33 = ssub.s32 %s20, %s32
      %s34 = ssub.s32 %s21, %s28
      %s35 = sor.u32 %s33, %s34
      %p36 = scmp.eq.s32.totalorder %s35, 0
      %s38 = sadd.s32 %s37, 1
      %s39 = scalar_select %p36, %s37, %s38
      %p42 = pneg %p36
      %p43 = scmp.eq.s32.totalorder %s13, 1
      %p44 = por %p42, %p43
      %p45 = scmp.ne.s32.totalorder %s37, %s40
      %p46 = scmp.eq.s32.totalorder %s13, 0
      %p47 = por %p45, %p46
      %p48 = scmp.ne.s32.totalorder %s37, %s40
      %p49 = scmp.eq.s32.totalorder %s18, 1
      %p50 = por %p48, %p49
      %p51 = scmp.ne.s32.totalorder %s40, %s41
      %p52 = scmp.eq.s32.totalorder %s18, 0
      %p53 = por %p51, %p52
      %p54 = scmp.ne.s32.totalorder %s40, %s41
      %p55 = scmp.eq.s32.totalorder %s19, 1
      %p56 = por %p54, %p55
      %p58 = scmp.ne.s32.totalorder %s41, %s57
      %p59 = scmp.eq.s32.totalorder %s19, 0
      %p60 = por %p58, %p59
      %s61 = ssub.s32 %s20, %s32
      %s62 = ssub.s32 %s21, %s28
      %s63 = sor.u32 %s61, %s62
      %p64 = scmp.eq.s32.totalorder %s63, 0
      %s66 = sadd.s32 %s65, 1
      %s67 = scalar_select %p64, %s65, %s66
      %p70 = pneg %p64
      %p71 = scmp.eq.s32.totalorder %s13, 1
      %p72 = por %p70, %p71
      %p73 = scmp.ne.s32.totalorder %s65, %s68
      %p74 = scmp.eq.s32.totalorder %s13, 0
      %p75 = por %p73, %p74
      %p76 = scmp.ne.s32.totalorder %s65, %s68
      %p77 = scmp.eq.s32.totalorder %s18, 1
      %p78 = por %p76, %p77
      %p79 = scmp.ne.s32.totalorder %s68, %s69
      %p80 = scmp.eq.s32.totalorder %s18, 0
      %p81 = por %p79, %p80
      %p82 = scmp.ne.s32.totalorder %s68, %s69
      %p83 = scmp.eq.s32.totalorder %s19, 1
      %p84 = por %p82, %p83
      %p86 = scmp.ne.s32.totalorder %s69, %s85
      %p87 = scmp.eq.s32.totalorder %s19, 0
      %p88 = por %p86, %p87
      %s90 = sadd.s32 %s89, 1
      %p93 = scmp.eq.s32.totalorder %s13, 1
      %p94 = scmp.ne.s32.totalorder %s89, %s91
      %p95 = scmp.eq.s32.totalorder %s13, 0
      %p96 = por %p94, %p95
      %p97 = scmp.ne.s32.totalorder %s89, %s91
      %p98 = scmp.eq.s32.totalorder %s18, 1
      %p99 = por %p97, %p98
      %p100 = scmp.ne.s32.totalorder %s91, %s92
      %p101 = scmp.eq.s32.totalorder %s18, 0
      %p102 = por %p100, %p101
      %p103 = scmp.ne.s32.totalorder %s91, %s92
      %p104 = scmp.eq.s32.totalorder %s19, 1
      %p105 = por %p103, %p104
      %p107 = scmp.ne.s32.totalorder %s92, %s106
      %p108 = scmp.eq.s32.totalorder %s19, 0
      %p109 = por %p107, %p108
      %s111 = sadd.s32 %s110, 1
      %p114 = scmp.eq.s32.totalorder %s13, 1
      %p115 = scmp.ne.s32.totalorder %s110, %s112
      %p116 = scmp.eq.s32.totalorder %s13, 0
      %p117 = por %p115, %p116
      %p118 = scmp.ne.s32.totalorder %s110, %s112
      %p119 = scmp.eq.s32.totalorder %s18, 1
      %p120 = por %p118, %p119
      %p121 = scmp.ne.s32.totalorder %s112, %s113
      %p122 = scmp.eq.s32.totalorder %s18, 0
      %p123 = por %p121, %p122
      %p124 = scmp.ne.s32.totalorder %s112, %s113
      %p125 = scmp.eq.s32.totalorder %s19, 1
      %p126 = por %p124, %p125
      %p128 = scmp.ne.s32.totalorder %s113, %s127
      %p129 = scmp.eq.s32.totalorder %s19, 0
      %p130 = por %p128, %p129
      %s131 = ssub.s32 %s20, %s32
      %s132 = ssub.s32 %s21, %s28
      %s133 = sor.u32 %s131, %s132
      %p134 = scmp.eq.s32.totalorder %s133, 0
      %s136 = sadd.s32 %s135, 1
      %s137 = scalar_select %p134, %s135, %s136
      %p140 = pneg %p134
      %p141 = scmp.eq.s32.totalorder %s13, 1
      %p142 = por %p140, %p141
      %p143 = scmp.ne.s32.totalorder %s135, %s138
      %p144 = scmp.eq.s32.totalorder %s13, 0
      %p145 = por %p143, %p144
      %p146 = scmp.ne.s32.totalorder %s135, %s138
      %p147 = scmp.eq.s32.totalorder %s18, 1
      %p148 = por %p146, %p147
      %p149 = scmp.ne.s32.totalorder %s138, %s139
      %p150 = scmp.eq.s32.totalorder %s18, 0
      %p151 = por %p149, %p150
      %p152 = scmp.ne.s32.totalorder %s138, %s139
      %p153 = scmp.eq.s32.totalorder %s19, 1
      %p154 = por %p152, %p153
      %p156 = scmp.ne.s32.totalorder %s139, %s155
      %p157 = scmp.eq.s32.totalorder %s19, 0
      %p158 = por %p156, %p157
      %p159 = scmp.le.s32.totalorder 1, %s13
      %p160 = scmp.lt.s32.totalorder %s13, 3
      %p161 = pnand %p159, %p160
      %p162 = pneg %p161
      // Predicated region
      $region9: #{fourier_operator_1d.3} parent=5 // pred_check
        _
      $region10: #{fourier_operator_1d.3} parent=5 // pred_check_branch
        %164 = sbr.rel (%p161) target = $region12
      $region11: #{fourier_operator_1d.3} parent=5 // pred_region
        %s165 = ssub.s32 %s13, 1
        // Predicated region
        $region13: #{fourier_operator_1d.3} parent=11 // pred_check
          %p166 = pneg %p102
        $region14: #{fourier_operator_1d.3} parent=11 // pred_check_branch
          %168 = sbr.rel (%p166) target = $region16
        $region15: #{fourier_operator_1d.3} parent=11 // pred_region
          _
        $region16: #{fourier_operator_1d.3} parent=11 // pred_fallthru
          _
        // Predicated region
        $region17: #{fourier_operator_1d.3} parent=11 // pred_check
          %p169 = pneg %p123
        $region18: #{fourier_operator_1d.3} parent=11 // pred_check_branch
          %171 = sbr.rel (%p169) target = $region20
        $region19: #{fourier_operator_1d.3} parent=11 // pred_region
          _
        $region20: #{fourier_operator_1d.3} parent=11 // pred_fallthru
          _
      $region12: #{fourier_operator_1d.3} parent=5 // pred_fallthru
        _
      %p172 = scmp.lt.s32.totalorder %s13, 2
      // Predicated region
      $region21: #{fourier_operator_1d.3} parent=5 // pred_check
        %p173 = pneg %p172
      $region22: #{fourier_operator_1d.3} parent=5 // pred_check_branch
        %175 = sbr.rel (%p173) target = $region24
      $region23: #{fourier_operator_1d.3} parent=5 // pred_region
        // Predicated region
        $region25: #{fourier_operator_1d.3} parent=23 // pred_check
          %p176 = pneg %p47
        $region26: #{fourier_operator_1d.3} parent=23 // pred_check_branch
          %178 = sbr.rel (%p176) target = $region28
        $region27: #{fourier_operator_1d.3} parent=23 // pred_region
          %s179 = smul.u32 2, %s21
          %p180 = scmp.lt.s32.totalorder %s20, 1
          %s181 = scalar_select %p180, %s20, 1
          %p182 = scmp.lt.s32.totalorder %s179, 1
          %s183 = scalar_select %p182, %s179, 1
          %s184 = smul.addr %s181, 8
          %s185 = sadd.s32 %s183, %s184
          %s186 = smul.addr %s185, 4
          %s187 = scalar_lea.vmem %s0, %s186
          %s188 = smul.u32 2, %s21
        $region28: #{fourier_operator_1d.3} parent=23 // pred_fallthru
          _
        // Predicated region
        $region29: #{fourier_operator_1d.3} parent=23 // pred_check
          %p189 = pneg %p75
        $region30: #{fourier_operator_1d.3} parent=23 // pred_check_branch
          %191 = sbr.rel (%p189) target = $region32
        $region31: #{fourier_operator_1d.3} parent=23 // pred_region
          %s192 = smul.u32 2, %s21
          %p193 = scmp.lt.s32.totalorder %s20, 1
          %s194 = scalar_select %p193, %s20, 1
          %p195 = scmp.lt.s32.totalorder %s192, 1
          %s196 = scalar_select %p195, %s192, 1
          %s197 = smul.addr %s194, 8
          %s198 = sadd.s32 %s196, %s197
          %s199 = smul.addr %s198, 8
          %s200 = scalar_lea.vmem %s1, %s199
          %s201 = smul.u32 2, %s21
        $region32: #{fourier_operator_1d.3} parent=23 // pred_fallthru
          _
      $region24: #{fourier_operator_1d.3} parent=5 // pred_fallthru
        _
      %p202 = scmp.le.s32.totalorder 1, %s13
      %p203 = scmp.lt.s32.totalorder %s13, 3
      %p204 = pnand %p202, %p203
      %p205 = pneg %p204
      // Predicated region
      $region33: #{fourier_operator_1d.3} parent=5 // pred_check
        _
      $region34: #{fourier_operator_1d.3} parent=5 // pred_check_branch
        %207 = sbr.rel (%p204) target = $region36
      $region35: #{fourier_operator_1d.3} parent=5 // pred_region
        %s208 = ssub.s32 %s13, 1
        %s209 = smul.u32 2, %s23
        %p210 = scmp.lt.s32.totalorder %s22, 1
        %s211 = scalar_select %p210, %s22, 1
        %p212 = scmp.lt.s32.totalorder %s209, 1
        %s213 = scalar_select %p212, %s209, 1
        %s214 = smul.addr %s211, 8
        %s215 = sadd.s32 %s213, %s214
        %s216 = smul.addr %s215, 4
        %s217 = scalar_lea.vmem %s0, %s216
        %p218 = pneg %p53
        %p219 = pneg %p50
        %s220 = smul.u32 2, %s23
        %p221 = scmp.lt.s32.totalorder %s22, 1
        %s222 = scalar_select %p221, %s22, 1
        %p223 = scmp.lt.s32.totalorder %s220, 1
        %s224 = scalar_select %p223, %s220, 1
        %s225 = smul.addr %s222, 8
        %s226 = sadd.s32 %s224, %s225
        %s227 = smul.addr %s226, 8
        %s228 = scalar_lea.vmem %s1, %s227
        %p229 = pneg %p81
        %p230 = pneg %p78
        %p231 = pneg %p102
        %p232 = pneg %p99
        %p233 = pneg %p123
        %p234 = pneg %p120
        %p235 = pneg %p151
        %p236 = pneg %p148
        %s237 = sand.u32 %s138, 1
        %s238 = scalar_lea.sflag [#allocation3], %s237
        %s239 = sand.u32 %s138, 1
        %s240 = smul.addr %s239, 64
        %s241 = scalar_lea.vmem [#allocation2], %s240
        %s242 = smul.u32 2, %s23
        %p243 = scmp.lt.s32.totalorder %s22, 1
        %s244 = scalar_select %p243, %s22, 1
        %p245 = scmp.lt.s32.totalorder %s242, 1
        %s246 = scalar_select %p245, %s242, 1
        %s247 = smul.addr %s244, 8
        %s248 = sadd.s32 %s246, %s247
        %s249 = smul.addr %s248, 4
        %s250 = scalar_lea.vmem %s0, %s249
        %s251 = smul.u32 2, %s23
        %s252 = smul.u32 2, %s23
        %p253 = scmp.lt.s32.totalorder %s22, 1
        %s254 = scalar_select %p253, %s22, 1
        %p255 = scmp.lt.s32.totalorder %s252, 1
        %s256 = scalar_select %p255, %s252, 1
        %s257 = smul.addr %s254, 8
        %s258 = sadd.s32 %s256, %s257
        %s259 = smul.addr %s258, 8
        %s260 = scalar_lea.vmem %s1, %s259
        %s261 = smul.u32 2, %s23
        %s262 = smul.u32 2, %s23
        %v264 = vld [vmem:[%s2] sm:$0xf]
        %v265 = vld [vmem:[%s2 + $0x4] sm:$0xf]
        %v266 = vld [vmem:[%s2 + $0x8] sm:$0xf]
        %v267 = vld [vmem:[%s2 + $0xc] sm:$0xf]
        %v268 = vld [vmem:[%s250] sm:$0xff]
        %v269 = vld [vmem:[%s250 + $0x8] sm:$0xff]
        %v270 = vld [vmem:[%s250 + $0x10] sm:$0xff]
        %v271 = vld [vmem:[%s250 + $0x18] sm:$0xff]
        %v272 = vld [vmem:[%s3] sm:$0xff]
        %v273 = vld [vmem:[%s3 + $0x8] sm:$0xff]
        %v274 = vld [vmem:[%s3 + $0x10] sm:$0xff]
        %v275 = vld [vmem:[%s3 + $0x18] sm:$0xff]
        %277 = vset.pattern.permute.xlu0 0
        %278 = vperm.xlu0 %277, %v272
        %v279 = vpop.permute.xlu0 %278
        %282 = vset.pattern.permute.xlu0 0
        %283 = vperm.xlu0 %282, %v273
        %v284 = vpop.permute.xlu0 %283
        %287 = vset.pattern.permute.xlu0 0
        %288 = vperm.xlu0 %287, %v274
        %v289 = vpop.permute.xlu0 %288
        %292 = vset.pattern.permute.xlu0 0
        %293 = vperm.xlu0 %292, %v275
        %v294 = vpop.permute.xlu0 %293
        %v300 = vunpack.c.l.b16 %v264
        %v301 = vunpack.c.l.b16 %v265
        %v302 = vunpack.c.l.b16 %v266
        %v303 = vunpack.c.l.b16 %v267
        %v304 = vpack.c.b16 %v301, %v300
        %v305 = vpack.c.b16 %v303, %v302
        %v310 = vunpack.c.l.b16 %v268
        %v311 = vunpack.c.h.b16 %v268
        %v312 = vunpack.c.l.b16 %v269
        %v313 = vunpack.c.h.b16 %v269
        %v314 = vunpack.c.l.b16 %v270
        %v315 = vunpack.c.h.b16 %v270
        %v316 = vunpack.c.l.b16 %v271
        %v317 = vunpack.c.h.b16 %v271
        %v318 = vpack.c.b16 %v312, %v310
        %v319 = vpack.c.b16 %v313, %v311
        %v320 = vpack.c.b16 %v316, %v314
        %v321 = vpack.c.b16 %v317, %v315
        %vm326 = vcmask 261120
        %v328 = vsel %vm326, %v304, 0
        %v331 = vsel %vm326, %v305, 0
        %333 = vmatprep.subr.bf16.mxu0 %v319
        %334 = vmatpush1.bf16.msra.mxu0 %v318
        %335 = vmatprep.subr.bf16.mxu0 %v321
        %336 = vmatpush1.bf16.msra.mxu0 %v320
        %337 = vmatprep.subr.bf16.mxu0 0
        %338 = vmatpush1.bf16.msra.mxu0 0
        %339 = vmatprep.subr.bf16.mxu0 0
        %340 = vmatpush1.bf16.msra.mxu0 0
        %341 = vmatprep.subr.bf16.mxu0 0
        %342 = vmatpush1.bf16.msra.mxu0 0
        %343 = vmatprep.subr.bf16.mxu0 0
        %344 = vmatpush1.bf16.msra.mxu0 0
        %345 = vmatprep.subr.bf16.mxu0 0
        %346 = vmatpush1.bf16.msra.mxu0 0
        %347 = vmatprep.subr.bf16.mxu0 0
        %348 = vmatpush1.bf16.msra.mxu0 0
        %349 = vmatprep.subr.bf16.mxu0 0
        %350 = vmatpush1.bf16.msra.mxu0 0
        %351 = vmatprep.subr.bf16.mxu0 0
        %352 = vmatpush1.bf16.msra.mxu0 0
        %353 = vmatprep.subr.bf16.mxu0 0
        %354 = vmatpush1.bf16.msra.mxu0 0
        %355 = vmatprep.subr.bf16.mxu0 0
        %356 = vmatpush1.bf16.msra.mxu0 0
        %357 = vmatprep.subr.bf16.mxu0 0
        %358 = vmatpush1.bf16.msra.mxu0 0
        %359 = vmatprep.subr.bf16.mxu0 0
        %360 = vmatpush1.bf16.msra.mxu0 0
        %361 = vmatprep.subr.bf16.mxu0 0
        %362 = vmatpush1.bf16.msra.mxu0 0
        %363 = vmatprep.subr.bf16.mxu0 0
        %364 = vmatpush1.bf16.msra.mxu0 0
        %365 = vmatprep.mubr.bf16.mxu0 0
        %366 = vmatmul.mubr.bf16.gmra.mrb[0].mxu0 %v328
        %v367 = vpop.f32.mrb[0].mxu0
        %v368 = vadd.f32 %v279, %v367
        %v369 = vpop.f32.mrb[0].mxu0
        %v370 = vadd.f32 %v279, %v369
        %v371 = vpop.f32.mrb[0].mxu0
        %v372 = vadd.f32 %v284, %v371
        %v373 = vpop.f32.mrb[0].mxu0
        %v374 = vadd.f32 %v284, %v373
        %375 = vmatprep.mubr.bf16.mxu0 0
        %376 = vmatmul.mubr.bf16.gmra.mrb[0].mxu0 %v331
        %v377 = vpop.f32.mrb[0].mxu0
        %v378 = vadd.f32 %v289, %v377
        %v379 = vpop.f32.mrb[0].mxu0
        %v380 = vadd.f32 %v289, %v379
        %v381 = vpop.f32.mrb[0].mxu0
        %v382 = vadd.f32 %v294, %v381
        %v383 = vpop.f32.mrb[0].mxu0
        %v384 = vadd.f32 %v294, %v383
        %385 = vdwg.mxu0
        %v386 = vld [vmem:[%s260] sm:$0xff]
        %v387 = vld [vmem:[%s260 + $0x8] sm:$0xff]
        %v388 = vld [vmem:[%s260 + $0x10] sm:$0xff]
        %v389 = vld [vmem:[%s260 + $0x18] sm:$0xff]
        %v390 = vld [vmem:[%s260 + $0x20] sm:$0xff]
        %v391 = vld [vmem:[%s260 + $0x28] sm:$0xff]
        %v392 = vld [vmem:[%s260 + $0x30] sm:$0xff]
        %v393 = vld [vmem:[%s260 + $0x38] sm:$0xff]
        %v394 = vadd.f32 %v368, %v386
        %v395 = vadd.f32 %v370, %v387
        %v396 = vadd.f32 %v372, %v388
        %v397 = vadd.f32 %v374, %v389
        %v398 = vadd.f32 %v378, %v390
        %v399 = vadd.f32 %v380, %v391
        %v400 = vadd.f32 %v382, %v392
        %v401 = vadd.f32 %v384, %v393
        %v402 = vmul.f32 %v394, 0.5
        %v403 = vmul.f32 %v395, 0.5
        %v404 = vmul.f32 %v396, 0.5
        %v405 = vmul.f32 %v397, 0.5
        %v406 = vmul.f32 %v398, 0.5
        %v407 = vmul.f32 %v399, 0.5
        %v408 = vmul.f32 %v400, 0.5
        %v409 = vmul.f32 %v401, 0.5
        %v410 = vmul.f32 %v394, 0.70710677
        %v411 = vmul.f32 %v395, 0.70710677
        %v412 = vmul.f32 %v396, 0.70710677
        %v413 = vmul.f32 %v397, 0.70710677
        %v414 = vmul.f32 %v398, 0.70710677
        %v415 = vmul.f32 %v399, 0.70710677
        %v416 = vmul.f32 %v400, 0.70710677
        %v417 = vmul.f32 %v401, 0.70710677
        %v418 = verf.f32.pop %v410
        %v419 = verf.f32.pop %v411
        %v420 = verf.f32.pop %v412
        %v421 = verf.f32.pop %v413
        %v422 = verf.f32.pop %v414
        %v423 = verf.f32.pop %v415
        %v424 = verf.f32.pop %v416
        %v425 = verf.f32.pop %v417
        %v426 = vadd.f32 %v418, 1.0
        %v427 = vadd.f32 %v419, 1.0
        %v428 = vadd.f32 %v420, 1.0
        %v429 = vadd.f32 %v421, 1.0
        %v430 = vadd.f32 %v422, 1.0
        %v431 = vadd.f32 %v423, 1.0
        %v432 = vadd.f32 %v424, 1.0
        %v433 = vadd.f32 %v425, 1.0
        %v434 = vmul.f32 %v402, %v426
        %v435 = vmul.f32 %v403, %v427
        %v436 = vmul.f32 %v404, %v428
        %v437 = vmul.f32 %v405, %v429
        %v438 = vmul.f32 %v406, %v430
        %v439 = vmul.f32 %v407, %v431
        %v440 = vmul.f32 %v408, %v432
        %v441 = vmul.f32 %v409, %v433
        %442 = vst [vmem:[%s241] sm:$0xff] %v434
        %443 = vst [vmem:[%s241 + $0x8] sm:$0xff] %v435
        %444 = vst [vmem:[%s241 + $0x10] sm:$0xff] %v436
        %445 = vst [vmem:[%s241 + $0x18] sm:$0xff] %v437
        %446 = vst [vmem:[%s241 + $0x20] sm:$0xff] %v438
        %447 = vst [vmem:[%s241 + $0x28] sm:$0xff] %v439
        %448 = vst [vmem:[%s241 + $0x30] sm:$0xff] %v440
        %449 = vst [vmem:[%s241 + $0x38] sm:$0xff] %v441
        %s450 = sand.u32 %s138, 1
        %s451 = scalar_lea.sflag [#allocation3], %s450
        %s452 = sand.u32 %s138, 1
        %s453 = smul.addr %s452, 64
        %s454 = scalar_lea.vmem [#allocation2], %s453
        // Predicated region
        $region37: #{fourier_operator_1d.3} parent=35 // pred_check
          %p455 = pneg %p148
        $region38: #{fourier_operator_1d.3} parent=35 // pred_check_branch
          %457 = sbr.rel (%p455) target = $region40
        $region39: #{fourier_operator_1d.3} parent=35 // pred_region
          %s458 = smul.u32 2, %s23
          %s460 = ssub.s32 1024, 1024
          %461 = vsyncadd %s451, %s460
          %s462 = smul.addr %s22, 8
          %s463 = sadd.s32 %s458, %s462
          %s464 = smul.addr %s463, 128
          %s465 = scalar_lea.hbm %s4, %s464
          %s466 = sshll.u32 %s454, 4
          %s467 = int_to_ptr.vmem [resolvable:$true] %s466
          %472 = dma.vmem_to_hbm [thread:$0]  %s467, 1024, %s465, %s451, 256, 256, 16
        $region40: #{fourier_operator_1d.3} parent=35 // pred_fallthru
          _
      $region36: #{fourier_operator_1d.3} parent=5 // pred_fallthru
        _
      %p473 = scmp.le.s32.totalorder 2, %s13
      // Predicated region
      $region41: #{fourier_operator_1d.3} parent=5 // pred_check
        %p474 = pneg %p473
      $region42: #{fourier_operator_1d.3} parent=5 // pred_check_branch
        %476 = sbr.rel (%p474) target = $region44
      $region43: #{fourier_operator_1d.3} parent=5 // pred_region
        %s477 = ssub.s32 %s13, 2
        // Predicated region
        $region45: #{fourier_operator_1d.3} parent=43 // pred_check
          %p478 = pneg %p154
        $region46: #{fourier_operator_1d.3} parent=43 // pred_check_branch
          %480 = sbr.rel (%p478) target = $region48
        $region47: #{fourier_operator_1d.3} parent=43 // pred_region
          %s481 = sand.u32 %s139, 1
          %s482 = scalar_lea.sflag [#allocation3], %s481
          %s483 = sand.u32 %s139, 1
          %s484 = smul.addr %s483, 64
          %s485 = scalar_lea.vmem [#allocation2], %s484
          %486 = dma.done %s482, 1024
        $region48: #{fourier_operator_1d.3} parent=43 // pred_fallthru
          _
      $region44: #{fourier_operator_1d.3} parent=5 // pred_fallthru
        _
    $region6: #{fourier_operator_1d.3} parent=1 // loop_footer
      %s17 = sadd.s32 1, %s13
    $region7: #{fourier_operator_1d.3} parent=1 // loop_footer_branch
      %12 = sbr.rel target = $region3
    $region8: #{fourier_operator_1d.3} parent=1 // loop_exit
      _
    %487 = vsyncpa [#allocation3], 1
    %s488 = scalar_lea.sflag [#allocation3], 1
    %489 = vsyncpa %s488, 1

</llo_original>
